<compile_context>
chip_gen: v6e
topology: v6e:2x2x1
jax: 0.10.0
libtpu: 0.0.40
codegen_flags: <defaults>
</compile_context>

<pallas_src>
import jax
import jax.numpy as jnp
from jax.experimental import pallas as pl
from jax.experimental.pallas import tpu as pltpu

LEAKY = 0.2


def _leaky(x):
    # leaky_relu(x, 0.2) == max(x, 0.2 * x) for 0 < slope < 1
    return jnp.maximum(x, LEAKY * x)


# ---------------------------------------------------------------------------
# Fused kernel: conv1(8->64)+bn+lrelu, conv2(64->128)+bn+lrelu, max over K,
#               conv3(128->1024)+bn+lrelu, running max over N tiles,
#               and on the last tile: linear1+bn+lrelu, linear2+bn+lrelu,
#               transform (256->16-padded, with bias).
# BN scale is pre-folded into the weights; only shift (tN) is applied here.
# One grid point = one (batch, N-tile).
# ---------------------------------------------------------------------------
def transform_net_kernel(x_ref, w1_ref, t1_ref,
                         w2_ref, t2_ref,
                         w3_ref, t3_ref,
                         wl1_ref, t4_ref,
                         wl2_ref, t5_ref,
                         wt_ref, bt_ref,
                         o_ref, gmax_ref):
    j = pl.program_id(1)
    nt = pl.num_programs(1)

    _, K, tn, C = x_ref.shape

    # ---- per-point MLP: conv1 -> bn1 -> lrelu -> conv2 -> bn2 -> lrelu -----
    # 2-D matmul formulation: (K*tn, C) @ (C, 64), (K*tn, 64) @ (64, 128)
    x = x_ref[...].reshape(K * tn, C)                                # bf16
    h1 = jnp.dot(x, w1_ref[...], preferred_element_type=jnp.float32)
    h1 = _leaky(h1 + t1_ref[...])                                    # f32 (K*tn, 64)
    h2 = jnp.dot(h1.astype(jnp.bfloat16), w2_ref[...],
                 preferred_element_type=jnp.float32)
    h2 = _leaky(h2 + t2_ref[...])                                    # f32 (K*tn, 128)

    # ---- max over the K neighbours (leading axis -> contiguous slab maxima)
    f = jnp.max(h2.reshape(K, tn, 128), axis=0)                      # f32 (tn, 128)

    # ---- conv3 (128->1024) + bn + lrelu, partial max over this N tile ------
    h3 = jnp.dot(f.astype(jnp.bfloat16), w3_ref[...],
                 preferred_element_type=jnp.float32)
    h3 = _leaky(h3 + t3_ref[...])                                    # f32 (tn, 1024)
    part = jnp.max(h3, axis=0, keepdims=True)                        # (1, 1024)

    @pl.when(j == 0)
    def _():
        gmax_ref[...] = jnp.full(gmax_ref.shape, -jnp.inf, dtype=gmax_ref.dtype)

    gmax_ref[...] = jnp.maximum(gmax_ref[...], part)

    # ---- final MLP head, only on the last N tile of this batch element -----
    @pl.when(j == nt - 1)
    def _():
        g = gmax_ref[...]                                            # (1, 1024)
        z1 = jnp.dot(g.astype(jnp.bfloat16), wl1_ref[...],
                     preferred_element_type=jnp.float32)
        z1 = _leaky(z1 + t4_ref[...])                                # (1, 512)
        z2 = jnp.dot(z1.astype(jnp.bfloat16), wl2_ref[...],
                     preferred_element_type=jnp.float32)
        z2 = _leaky(z2 + t5_ref[...])                                # (1, 256)
        y = jnp.dot(z2.astype(jnp.bfloat16), wt_ref[...],
                    preferred_element_type=jnp.float32) + bt_ref[...]
        o_ref[...] = y.reshape(1, 1, 16)


def transform_net_forward(x, w1, s1, t1, w2, s2, t2, w3, s3, t3,
                          wl1, s4, t4, wl2, s5, t5, wt, bt, *, tn=256):
    """x: (B, 6, N, K) f32 NCHW, as in PyTorch.  Returns (B, 3, 3) f32."""
    B, C, N, K = x.shape
    assert C == 6
    CP = 8

    # ---- tile selection: fixed tile (multiple of 8), pad N up to a multiple.
    if N >= tn:
        tile = tn
    else:
        tile = max(8, ((N + 7) // 8) * 8)      # round small N up to a sublane multiple
    n_pad = (-N) % tile

    # NCHW -> (B, K, N, C): K leading so the in-kernel K-max is a contiguous
    # slab reduction; edge-replicate along N (duplicates cannot change the
    # max over points); zero-pad channels 6 -> 8; cast to bf16.
    x_kl = jnp.transpose(x, (0, 3, 2, 1))                            # (B, K, N, 6)
    if n_pad:
        x_kl = jnp.pad(x_kl, ((0, 0), (0, 0), (0, n_pad), (0, 0)), mode="edge")
    x_kl = jnp.pad(x_kl, ((0, 0), (0, 0), (0, 0), (0, CP - C))).astype(jnp.bfloat16)
    Np = N + n_pad
    nt = Np // tile

    # ---- fold BN scale into the weight columns (f32), then cast to bf16 ----
    w1p = (jnp.pad(w1, ((0, CP - C), (0, 0))) * s1).astype(jnp.bfloat16)   # (8, 64)
    w2b = (w2 * s2).astype(jnp.bfloat16)                                   # (64, 128)
    w3b = (w3 * s3).astype(jnp.bfloat16)                                   # (128, 1024)
    wl1b = (wl1 * s4).astype(jnp.bfloat16)                                 # (1024, 512)
    wl2b = (wl2 * s5).astype(jnp.bfloat16)                                 # (512, 256)
    wtp = jnp.pad(wt, ((0, 0), (0, 16 - wt.shape[1]))).astype(jnp.bfloat16)  # (256, 16)
    btp = jnp.pad(bt, ((0, 0), (0, 16 - bt.shape[1]))).astype(jnp.float32)   # (1, 16)

    const = lambda b, j: (0, 0)
    out = pl.pallas_call(
        transform_net_kernel,
        out_shape=jax.ShapeDtypeStruct((B, 1, 16), jnp.float32),
        grid_spec=pltpu.PrefetchScalarGridSpec(
            num_scalar_prefetch=0,
            grid=(B, nt),
            in_specs=[
                pl.BlockSpec((1, K, tile, CP), lambda b, j: (b, 0, j, 0)),
                pl.BlockSpec((CP, 64), const),
                pl.BlockSpec((1, 64), const),
                pl.BlockSpec((64, 128), const),
                pl.BlockSpec((1, 128), const),
                pl.BlockSpec((128, 1024), const),
                pl.BlockSpec((1, 1024), const),
                pl.BlockSpec((1024, 512), const),
                pl.BlockSpec((1, 512), const),
                pl.BlockSpec((512, 256), const),
                pl.BlockSpec((1, 256), const),
                pl.BlockSpec((256, 16), const),
                pl.BlockSpec((1, 16), const),
            ],
            out_specs=pl.BlockSpec((1, 1, 16), lambda b, j: (b, 0, 0)),
            scratch_shapes=[pltpu.VMEM((1, 1024), jnp.float32)],
        ),
        compiler_params=pltpu.CompilerParams(
            dimension_semantics=("parallel", "arbitrary"),
            # Actual footprint is well under this even at tile=256 (~10 MiB);
            # do NOT request the full 64 MiB of a v7x core.
            vmem_limit_bytes=32 * 1024 * 1024),
    )(x_kl, w1p, t1, w2b, t2, w3b, t3, wl1b, t4, wl2b, t5, wtp, btp)

    return out[:, 0, :9].reshape(B, 3, 3)


# ---------------------------------------------------------------------------
# Parameter setup (deterministic, eval-mode BN folded to scale/shift)
# ---------------------------------------------------------------------------
def fold_bn(gamma, beta, mean, var, eps=1e-5):
    scale = gamma / jnp.sqrt(var + eps)
    shift = beta - mean * scale
    return (scale.reshape(1, -1).astype(jnp.float32),
            shift.reshape(1, -1).astype(jnp.float32))


def bn_params(k, c):
    k1, k2, k3, k4 = jax.random.split(k, 4)
    gamma = jax.random.uniform(k1, (c,), jnp.float32, 0.5, 1.5)
    beta = 0.1 * jax.random.normal(k2, (c,), jnp.float32)
    mean = 0.1 * jax.random.normal(k3, (c,), jnp.float32)
    var = jax.random.uniform(k4, (c,), jnp.float32, 0.5, 1.5)
    return gamma, beta, mean, var


if __name__ == "__main__":
    key = jax.random.PRNGKey(0)
    B, C_IN, N, K = 2, 6, 16, 8          # x: (batch, 6, num_points, k_neighbors)
    ki = iter(jax.random.split(key, 32))

    x = jax.random.normal(next(ki), (B, C_IN, N, K), jnp.float32)    # NCHW, as in PyTorch

    w1 = jax.random.normal(next(ki), (6, 64), jnp.float32) / jnp.sqrt(6.0)
    s1, t1 = fold_bn(*bn_params(next(ki), 64))
    w2 = jax.random.normal(next(ki), (64, 128), jnp.float32) / 8.0
    s2, t2 = fold_bn(*bn_params(next(ki), 128))
    w3 = jax.random.normal(next(ki), (128, 1024), jnp.float32) / jnp.sqrt(128.0)
    s3, t3 = fold_bn(*bn_params(next(ki), 1024))
    wl1 = jax.random.normal(next(ki), (1024, 512), jnp.float32) / 32.0
    s4, t4 = fold_bn(*bn_params(next(ki), 512))
    wl2 = jax.random.normal(next(ki), (512, 256), jnp.float32) / jnp.sqrt(512.0)
    s5, t5 = fold_bn(*bn_params(next(ki), 256))
    wt = jax.random.normal(next(ki), (256, 9), jnp.float32) / 16.0
    bt = 0.1 * jax.random.normal(next(ki), (1, 9), jnp.float32)

    out = transform_net_forward(x, w1, s1, t1, w2, s2, t2, w3, s3, t3,
                                wl1, s4, t4, wl2, s5, t5, wt, bt)
    out = jax.block_until_ready(out)

    # Pure-JAX f32 reference (Precision.HIGHEST) for sanity check.
    P = jax.lax.Precision.HIGHEST
    h = jnp.einsum('bnkc,cd->bnkd', jnp.transpose(x, (0, 2, 3, 1)), w1, precision=P)
    h = _leaky(h * s1 + t1)
    h = jnp.einsum('bnkc,cd->bnkd', h, w2, precision=P)
    h = _leaky(h * s2 + t2)
    h = jnp.max(h, axis=2)                                           # max over k
    h = jnp.einsum('bnc,cd->bnd', h, w3, precision=P)
    h = _leaky(h * s3 + t3)
    g = jnp.max(h, axis=1)                                           # max over points
    g = _leaky(jnp.dot(g, wl1, precision=P) * s4 + t4)
    g = _leaky(jnp.dot(g, wl2, precision=P) * s5 + t5)
    ref = (jnp.dot(g, wt, precision=P) + bt).reshape(B, 3, 3)

    assert out.shape == (B, 3, 3)
    # Tolerance accounts for bf16 matmul operands (f32 accumulation, BN scale
    # folded into the bf16 weights) vs the f32 HIGHEST-precision reference.
    assert jnp.allclose(out, ref, rtol=5e-2, atol=5e-2), (out, ref)
    print("KERNEL_OK")
</pallas_src>

<mosaic_0001>
module attributes {stable_mosaic.version = 11 : i64} {
  func.func @transform_net_kernel(%arg0: i32, %arg1: i32, %arg2: memref<1x8x16x8xbf16, #tpu.memory_space<vmem>>, %arg3: memref<8x64xbf16, #tpu.memory_space<vmem>>, %arg4: memref<1x64xf32, #tpu.memory_space<vmem>>, %arg5: memref<64x128xbf16, #tpu.memory_space<vmem>>, %arg6: memref<1x128xf32, #tpu.memory_space<vmem>>, %arg7: memref<128x1024xbf16, #tpu.memory_space<vmem>>, %arg8: memref<1x1024xf32, #tpu.memory_space<vmem>>, %arg9: memref<1024x512xbf16, #tpu.memory_space<vmem>>, %arg10: memref<1x512xf32, #tpu.memory_space<vmem>>, %arg11: memref<512x256xbf16, #tpu.memory_space<vmem>>, %arg12: memref<1x256xf32, #tpu.memory_space<vmem>>, %arg13: memref<256x16xbf16, #tpu.memory_space<vmem>>, %arg14: memref<1x16xf32, #tpu.memory_space<vmem>>, %arg15: memref<1x1x16xf32, #tpu.memory_space<vmem>>, %arg16: memref<1x1024xf32, #tpu.memory_space<vmem>>) attributes {dimension_semantics = [#tpu.dimension_semantics<parallel>, #tpu.dimension_semantics<arbitrary>], iteration_bounds = array<i64: 2, 1>, scalar_prefetch = 0 : i64, scratch_operands = 1 : i64, tpu.core_type = #tpu.core_type<tc>, window_params = [{transform_indices = @transform_0, window_bounds = array<i64: 1, 8, 16, 8>}, {pipeline_mode = #tpu.pipeline_mode<synchronous>, transform_indices = @transform_1, window_bounds = array<i64: 8, 64>}, {pipeline_mode = #tpu.pipeline_mode<synchronous>, transform_indices = @transform_2, window_bounds = array<i64: 1, 64>}, {pipeline_mode = #tpu.pipeline_mode<synchronous>, transform_indices = @transform_3, window_bounds = array<i64: 64, 128>}, {pipeline_mode = #tpu.pipeline_mode<synchronous>, transform_indices = @transform_4, window_bounds = array<i64: 1, 128>}, {pipeline_mode = #tpu.pipeline_mode<synchronous>, transform_indices = @transform_5, window_bounds = array<i64: 128, 1024>}, {pipeline_mode = #tpu.pipeline_mode<synchronous>, transform_indices = @transform_6, window_bounds = array<i64: 1, 1024>}, {pipeline_mode = #tpu.pipeline_mode<synchronous>, transform_indices = @transform_7, window_bounds = array<i64: 1024, 512>}, {pipeline_mode = #tpu.pipeline_mode<synchronous>, transform_indices = @transform_8, window_bounds = array<i64: 1, 512>}, {pipeline_mode = #tpu.pipeline_mode<synchronous>, transform_indices = @transform_9, window_bounds = array<i64: 512, 256>}, {pipeline_mode = #tpu.pipeline_mode<synchronous>, transform_indices = @transform_10, window_bounds = array<i64: 1, 256>}, {pipeline_mode = #tpu.pipeline_mode<synchronous>, transform_indices = @transform_11, window_bounds = array<i64: 256, 16>}, {pipeline_mode = #tpu.pipeline_mode<synchronous>, transform_indices = @transform_12, window_bounds = array<i64: 1, 16>}, {transform_indices = @transform_13, window_bounds = array<i64: 1, 1, 16>}]} {
    %c0 = arith.constant 0 : index
    %c0_0 = arith.constant 0 : index
    %c0_1 = arith.constant 0 : index
    %c0_2 = arith.constant 0 : index
    %0 = vector.load %arg2[%c0, %c0_0, %c0_1, %c0_2] : memref<1x8x16x8xbf16, #tpu.memory_space<vmem>>, vector<1x8x16x8xbf16>
    %1 = vector.shape_cast %0 : vector<1x8x16x8xbf16> to vector<128x8xbf16>
    %c0_3 = arith.constant 0 : index
    %c0_4 = arith.constant 0 : index
    %2 = vector.load %arg3[%c0_3, %c0_4] : memref<8x64xbf16, #tpu.memory_space<vmem>>, vector<8x64xbf16>
    %cst = arith.constant dense<0.000000e+00> : vector<128x64xf32>
    %3 = tpu.matmul %1, %2, %cst {dimension_numbers = #tpu.dot_dimension_numbers<[1], [0], [0], [1], [0, 0, 1, 1], [], []>} : vector<128x8xbf16>, vector<8x64xbf16>, vector<128x64xf32> -> vector<128x64xf32>
    %c0_5 = arith.constant 0 : index
    %c0_6 = arith.constant 0 : index
    %4 = vector.load %arg4[%c0_5, %c0_6] : memref<1x64xf32, #tpu.memory_space<vmem>>, vector<1x64xf32>
    %5 = vector.broadcast %4 : vector<1x64xf32> to vector<128x64xf32>
    %6 = arith.addf %3, %5 : vector<128x64xf32>
    %cst_7 = arith.constant 2.000000e-01 : f32
    %7 = vector.broadcast %cst_7 : f32 to vector<128x64xf32>
    %8 = arith.mulf %7, %6 : vector<128x64xf32>
    %9 = arith.maximumf %6, %8 : vector<128x64xf32>
    %10 = arith.truncf %9 : vector<128x64xf32> to vector<128x64xbf16>
    %c0_8 = arith.constant 0 : index
    %c0_9 = arith.constant 0 : index
    %11 = vector.load %arg5[%c0_8, %c0_9] : memref<64x128xbf16, #tpu.memory_space<vmem>>, vector<64x128xbf16>
    %cst_10 = arith.constant dense<0.000000e+00> : vector<128x128xf32>
    %12 = tpu.matmul %10, %11, %cst_10 {dimension_numbers = #tpu.dot_dimension_numbers<[1], [0], [0], [1], [0, 0, 1, 1], [], []>} : vector<128x64xbf16>, vector<64x128xbf16>, vector<128x128xf32> -> vector<128x128xf32>
    %c0_11 = arith.constant 0 : index
    %c0_12 = arith.constant 0 : index
    %13 = vector.load %arg6[%c0_11, %c0_12] : memref<1x128xf32, #tpu.memory_space<vmem>>, vector<1x128xf32>
    %14 = vector.broadcast %13 : vector<1x128xf32> to vector<128x128xf32>
    %15 = arith.addf %12, %14 : vector<128x128xf32>
    %cst_13 = arith.constant 2.000000e-01 : f32
    %16 = vector.broadcast %cst_13 : f32 to vector<128x128xf32>
    %17 = arith.mulf %16, %15 : vector<128x128xf32>
    %18 = arith.maximumf %15, %17 : vector<128x128xf32>
    %19 = vector.shape_cast %18 : vector<128x128xf32> to vector<8x16x128xf32>
    %cst_14 = arith.constant dense<0xFF800000> : vector<16x128xf32>
    %20 = vector.multi_reduction <maximumf>, %19, %cst_14 [0] : vector<8x16x128xf32> to vector<16x128xf32>
    %21 = arith.truncf %20 : vector<16x128xf32> to vector<16x128xbf16>
    %c0_15 = arith.constant 0 : index
    %c0_16 = arith.constant 0 : index
    %22 = vector.load %arg7[%c0_15, %c0_16] : memref<128x1024xbf16, #tpu.memory_space<vmem>>, vector<128x1024xbf16>
    %cst_17 = arith.constant dense<0.000000e+00> : vector<16x1024xf32>
    %23 = tpu.matmul %21, %22, %cst_17 {dimension_numbers = #tpu.dot_dimension_numbers<[1], [0], [0], [1], [0, 0, 1, 1], [], []>} : vector<16x128xbf16>, vector<128x1024xbf16>, vector<16x1024xf32> -> vector<16x1024xf32>
    %c0_18 = arith.constant 0 : index
    %c0_19 = arith.constant 0 : index
    %24 = vector.load %arg8[%c0_18, %c0_19] : memref<1x1024xf32, #tpu.memory_space<vmem>>, vector<1x1024xf32>
    %25 = vector.broadcast %24 : vector<1x1024xf32> to vector<16x1024xf32>
    %26 = arith.addf %23, %25 : vector<16x1024xf32>
    %cst_20 = arith.constant 2.000000e-01 : f32
    %27 = vector.broadcast %cst_20 : f32 to vector<16x1024xf32>
    %28 = arith.mulf %27, %26 : vector<16x1024xf32>
    %29 = arith.maximumf %26, %28 : vector<16x1024xf32>
    %cst_21 = arith.constant dense<0xFF800000> : vector<1024xf32>
    %30 = vector.multi_reduction <maximumf>, %29, %cst_21 [0] : vector<16x1024xf32> to vector<1024xf32>
    %31 = vector.shape_cast %30 : vector<1024xf32> to vector<1x1024xf32>
    %c0_i32 = arith.constant 0 : i32
    %32 = arith.cmpi eq, %arg1, %c0_i32 : i32
    %33 = arith.extui %32 : i1 to i32
    %c0_i32_22 = arith.constant 0 : i32
    %34 = arith.cmpi ne, %33, %c0_i32_22 : i32
    scf.if %34 {
      %cst_29 = arith.constant 0xFF800000 : f32
      %41 = vector.broadcast %cst_29 : f32 to vector<1x1024xf32>
      %c0_30 = arith.constant 0 : index
      %c0_31 = arith.constant 0 : index
      %42 = vector.load %arg16[%c0_30, %c0_31] : memref<1x1024xf32, #tpu.memory_space<vmem>>, vector<1x1024xf32>
      tpu.vector_store %arg16[%c0_30, %c0_31], %41 {strides = array<i32>} : memref<1x1024xf32, #tpu.memory_space<vmem>>, vector<1x1024xf32>,
    } else {
    }
    %c0_23 = arith.constant 0 : index
    %c0_24 = arith.constant 0 : index
    %35 = vector.load %arg16[%c0_23, %c0_24] : memref<1x1024xf32, #tpu.memory_space<vmem>>, vector<1x1024xf32>
    %36 = arith.maximumf %35, %31 : vector<1x1024xf32>
    %c0_25 = arith.constant 0 : index
    %c0_26 = arith.constant 0 : index
    %37 = vector.load %arg16[%c0_25, %c0_26] : memref<1x1024xf32, #tpu.memory_space<vmem>>, vector<1x1024xf32>
    tpu.vector_store %arg16[%c0_25, %c0_26], %36 {strides = array<i32>} : memref<1x1024xf32, #tpu.memory_space<vmem>>, vector<1x1024xf32>,
    %c0_i32_27 = arith.constant 0 : i32
    %38 = arith.cmpi eq, %arg1, %c0_i32_27 : i32
    %39 = arith.extui %38 : i1 to i32
    %c0_i32_28 = arith.constant 0 : i32
    %40 = arith.cmpi ne, %39, %c0_i32_28 : i32
    scf.if %40 {
      %c0_29 = arith.constant 0 : index
      %c0_30 = arith.constant 0 : index
      %41 = vector.load %arg16[%c0_29, %c0_30] : memref<1x1024xf32, #tpu.memory_space<vmem>>, vector<1x1024xf32>
      %42 = arith.truncf %41 : vector<1x1024xf32> to vector<1x1024xbf16>
      %c0_31 = arith.constant 0 : index
      %c0_32 = arith.constant 0 : index
      %43 = vector.load %arg9[%c0_31, %c0_32] : memref<1024x512xbf16, #tpu.memory_space<vmem>>, vector<1024x512xbf16>
      %cst_33 = arith.constant dense<0.000000e+00> : vector<1x512xf32>
      %44 = tpu.matmul %42, %43, %cst_33 {dimension_numbers = #tpu.dot_dimension_numbers<[1], [0], [0], [1], [0, 0, 1, 1], [], []>} : vector<1x1024xbf16>, vector<1024x512xbf16>, vector<1x512xf32> -> vector<1x512xf32>
      %c0_34 = arith.constant 0 : index
      %c0_35 = arith.constant 0 : index
      %45 = vector.load %arg10[%c0_34, %c0_35] : memref<1x512xf32, #tpu.memory_space<vmem>>, vector<1x512xf32>
      %46 = arith.addf %44, %45 : vector<1x512xf32>
      %cst_36 = arith.constant 2.000000e-01 : f32
      %47 = vector.broadcast %cst_36 : f32 to vector<1x512xf32>
      %48 = arith.mulf %47, %46 : vector<1x512xf32>
      %49 = arith.maximumf %46, %48 : vector<1x512xf32>
      %50 = arith.truncf %49 : vector<1x512xf32> to vector<1x512xbf16>
      %c0_37 = arith.constant 0 : index
      %c0_38 = arith.constant 0 : index
      %51 = vector.load %arg11[%c0_37, %c0_38] : memref<512x256xbf16, #tpu.memory_space<vmem>>, vector<512x256xbf16>
      %cst_39 = arith.constant dense<0.000000e+00> : vector<1x256xf32>
      %52 = tpu.matmul %50, %51, %cst_39 {dimension_numbers = #tpu.dot_dimension_numbers<[1], [0], [0], [1], [0, 0, 1, 1], [], []>} : vector<1x512xbf16>, vector<512x256xbf16>, vector<1x256xf32> -> vector<1x256xf32>
      %c0_40 = arith.constant 0 : index
      %c0_41 = arith.constant 0 : index
      %53 = vector.load %arg12[%c0_40, %c0_41] : memref<1x256xf32, #tpu.memory_space<vmem>>, vector<1x256xf32>
      %54 = arith.addf %52, %53 : vector<1x256xf32>
      %cst_42 = arith.constant 2.000000e-01 : f32
      %55 = vector.broadcast %cst_42 : f32 to vector<1x256xf32>
      %56 = arith.mulf %55, %54 : vector<1x256xf32>
      %57 = arith.maximumf %54, %56 : vector<1x256xf32>
      %58 = arith.truncf %57 : vector<1x256xf32> to vector<1x256xbf16>
      %c0_43 = arith.constant 0 : index
      %c0_44 = arith.constant 0 : index
      %59 = vector.load %arg13[%c0_43, %c0_44] : memref<256x16xbf16, #tpu.memory_space<vmem>>, vector<256x16xbf16>
      %cst_45 = arith.constant dense<0.000000e+00> : vector<1x16xf32>
      %60 = tpu.matmul %58, %59, %cst_45 {dimension_numbers = #tpu.dot_dimension_numbers<[1], [0], [0], [1], [0, 0, 1, 1], [], []>} : vector<1x256xbf16>, vector<256x16xbf16>, vector<1x16xf32> -> vector<1x16xf32>
      %c0_46 = arith.constant 0 : index
      %c0_47 = arith.constant 0 : index
      %61 = vector.load %arg14[%c0_46, %c0_47] : memref<1x16xf32, #tpu.memory_space<vmem>>, vector<1x16xf32>
      %62 = arith.addf %60, %61 : vector<1x16xf32>
      %63 = vector.shape_cast %62 : vector<1x16xf32> to vector<1x1x16xf32>
      %c0_48 = arith.constant 0 : index
      %c0_49 = arith.constant 0 : index
      %c0_50 = arith.constant 0 : index
      %64 = vector.load %arg15[%c0_48, %c0_49, %c0_50] : memref<1x1x16xf32, #tpu.memory_space<vmem>>, vector<1x1x16xf32>
      tpu.vector_store %arg15[%c0_48, %c0_49, %c0_50], %63 {strides = array<i32>} : memref<1x1x16xf32, #tpu.memory_space<vmem>>, vector<1x1x16xf32>,
    } else {
    }
    return
  }
  func.func @transform_0(%arg0: i32, %arg1: i32) -> (i32, i32, i32, i32) {
    %c0_i32 = arith.constant 0 : i32
    %c0_i32_0 = arith.constant 0 : i32
    %c0_i32_1 = arith.constant 0 : i32
    return %arg0, %c0_i32, %arg1, %c0_i32_0 : i32, i32, i32, i32
  }
  func.func @transform_1(%arg0: i32, %arg1: i32) -> (i32, i32) {
    %c0_i32 = arith.constant 0 : i32
    %c0_i32_0 = arith.constant 0 : i32
    %c0_i32_1 = arith.constant 0 : i32
    return %c0_i32, %c0_i32_0 : i32, i32
  }
  func.func @transform_2(%arg0: i32, %arg1: i32) -> (i32, i32) {
    %c0_i32 = arith.constant 0 : i32
    %c0_i32_0 = arith.constant 0 : i32
    %c0_i32_1 = arith.constant 0 : i32
    return %c0_i32, %c0_i32_0 : i32, i32
  }
  func.func @transform_3(%arg0: i32, %arg1: i32) -> (i32, i32) {
    %c0_i32 = arith.constant 0 : i32
    %c0_i32_0 = arith.constant 0 : i32
    %c0_i32_1 = arith.constant 0 : i32
    return %c0_i32, %c0_i32_0 : i32, i32
  }
  func.func @transform_4(%arg0: i32, %arg1: i32) -> (i32, i32) {
    %c0_i32 = arith.constant 0 : i32
    %c0_i32_0 = arith.constant 0 : i32
    %c0_i32_1 = arith.constant 0 : i32
    return %c0_i32, %c0_i32_0 : i32, i32
  }
  func.func @transform_5(%arg0: i32, %arg1: i32) -> (i32, i32) {
    %c0_i32 = arith.constant 0 : i32
    %c0_i32_0 = arith.constant 0 : i32
    %c0_i32_1 = arith.constant 0 : i32
    return %c0_i32, %c0_i32_0 : i32, i32
  }
  func.func @transform_6(%arg0: i32, %arg1: i32) -> (i32, i32) {
    %c0_i32 = arith.constant 0 : i32
    %c0_i32_0 = arith.constant 0 : i32
    %c0_i32_1 = arith.constant 0 : i32
    return %c0_i32, %c0_i32_0 : i32, i32
  }
  func.func @transform_7(%arg0: i32, %arg1: i32) -> (i32, i32) {
    %c0_i32 = arith.constant 0 : i32
    %c0_i32_0 = arith.constant 0 : i32
    %c0_i32_1 = arith.constant 0 : i32
    return %c0_i32, %c0_i32_0 : i32, i32
  }
  func.func @transform_8(%arg0: i32, %arg1: i32) -> (i32, i32) {
    %c0_i32 = arith.constant 0 : i32
    %c0_i32_0 = arith.constant 0 : i32
    %c0_i32_1 = arith.constant 0 : i32
    return %c0_i32, %c0_i32_0 : i32, i32
  }
  func.func @transform_9(%arg0: i32, %arg1: i32) -> (i32, i32) {
    %c0_i32 = arith.constant 0 : i32
    %c0_i32_0 = arith.constant 0 : i32
    %c0_i32_1 = arith.constant 0 : i32
    return %c0_i32, %c0_i32_0 : i32, i32
  }
  func.func @transform_10(%arg0: i32, %arg1: i32) -> (i32, i32) {
    %c0_i32 = arith.constant 0 : i32
    %c0_i32_0 = arith.constant 0 : i32
    %c0_i32_1 = arith.constant 0 : i32
    return %c0_i32, %c0_i32_0 : i32, i32
  }
  func.func @transform_11(%arg0: i32, %arg1: i32) -> (i32, i32) {
    %c0_i32 = arith.constant 0 : i32
    %c0_i32_0 = arith.constant 0 : i32
    %c0_i32_1 = arith.constant 0 : i32
    return %c0_i32, %c0_i32_0 : i32, i32
  }
  func.func @transform_12(%arg0: i32, %arg1: i32) -> (i32, i32) {
    %c0_i32 = arith.constant 0 : i32
    %c0_i32_0 = arith.constant 0 : i32
    %c0_i32_1 = arith.constant 0 : i32
    return %c0_i32, %c0_i32_0 : i32, i32
  }
  func.func @transform_13(%arg0: i32, %arg1: i32) -> (i32, i32, i32) {
    %c0_i32 = arith.constant 0 : i32
    %c0_i32_0 = arith.constant 0 : i32
    %c0_i32_1 = arith.constant 0 : i32
    return %arg0, %c0_i32, %c0_i32_0 : i32, i32, i32
  }
}

</mosaic_0001>

<llo_original>
// kernel: tpu_custom_call.1
$region0: #{tpu_custom_call.1}
  #allocation0 [shape = 'u32[]', space=smem, size = 0x4, offset = 0x4, fixed_abs, tag = 'smem constant byte address 0x4 - core index']
  #allocation1 [shape = 'u32[144,128]{1,0:T(1,128)}', space=vmem, size = 0x12000, scoped, tag = 'internal scratch']
  #allocation2 [shape = 'f32[1,1024]{1,0:T(1,128)}', space=vmem, size = 0x1000, scoped, tag = 'scratch operand']
  %s0 = inlined_call_operand.vmem [shape: bf16[2,8,16,8], index: 0, kind: input, shape index: {}]
  %s1 = inlined_call_operand.vmem [shape: bf16[8,64], index: 1, kind: input, shape index: {}]
  %s2 = inlined_call_operand.vmem [shape: f32[1,64], index: 2, kind: input, shape index: {}]
  %s3 = inlined_call_operand.vmem [shape: bf16[64,128], index: 3, kind: input, shape index: {}]
  %s4 = inlined_call_operand.vmem [shape: f32[1,128], index: 4, kind: input, shape index: {}]
  %s5 = inlined_call_operand.hbm [shape: bf16[128,1024], index: 5, kind: input, shape index: {}]
  %s6 = inlined_call_operand.vmem [shape: f32[1,1024], index: 6, kind: input, shape index: {}]
  %s7 = inlined_call_operand.hbm [shape: bf16[1024,512], index: 7, kind: input, shape index: {}]
  %s8 = inlined_call_operand.vmem [shape: f32[1,512], index: 8, kind: input, shape index: {}]
  %s9 = inlined_call_operand.hbm [shape: bf16[512,256], index: 9, kind: input, shape index: {}]
  %s10 = inlined_call_operand.vmem [shape: f32[1,256], index: 10, kind: input, shape index: {}]
  %s11 = inlined_call_operand.vmem [shape: bf16[256,16], index: 11, kind: input, shape index: {}]
  %s12 = inlined_call_operand.vmem [shape: f32[1,16], index: 12, kind: input, shape index: {}]
  %s13 = inlined_call_operand.hbm [shape: f32[2,1,16], index: 13, kind: output, shape index: {}]
  %s14 = sld [smem:[#allocation0]]
  $region105: #{tpu_custom_call.1} parent=0
    _
  %s16 = ssub.s32 1, %s14
  %s17 = scalar_select 0, %s16, %s14
  $region1: #{tpu_custom_call.1} parent=0
    #allocation3 [shape = 'u8[262144]{0}', space=vmem, size = 0x40000, scoped, tag = 'input window, operand 5, single buffered']
    #allocation4 [shape = 's32[2]{0}', space=sflag, size = 0x8, scoped, tag = 'scoped memory for tpu_custom_call.1']
    #allocation5 [shape = 's32[2]{0}', space=sflag, size = 0x8, scoped, tag = 'scoped memory for tpu_custom_call.1']
    #allocation6 [shape = 'u8[1048576]{0}', space=vmem, size = 0x100000, scoped, tag = 'input window, operand 7, single buffered']
    #allocation7 [shape = 's32[1]{0}', space=sflag, size = 0x4, scoped, tag = 'scoped memory for tpu_custom_call.1']
    #allocation8 [shape = 'u8[262144]{0}', space=vmem, size = 0x40000, scoped, tag = 'input window, operand 9, single buffered']
    #allocation9 [shape = 'u8[1024]{0}', space=vmem, size = 0x400, scoped, tag = 'output window, operand 0']
    %18 = vsyncpa [#allocation4], 0
    %19 = vsyncpa [#allocation7], 0
    %20 = vsyncpa [#allocation5], 0
    %s21 = scalar_lea.sflag [#allocation5], 1
    %22 = vsyncpa %s21, 0
    loop: start=0, step=1, limit=4
    $region2: #{tpu_custom_call.1} parent=1 // loop_pre_header
      _
    $region3: #{tpu_custom_call.1} parent=1 // loop_header
      %s24 = sphi 0, %s28
      %p25 = scmp.ge.s32.totalorder %s24, 4
      %s31 = sphi 0, %s43
      %s32 = sphi 0, %s39
      %s33 = sphi 0, %s31
      %s34 = sphi 0, %s32
      %s35 = sphi 0, %s33
      %s36 = sphi 0, %s34
      %s48 = sphi 0, %s50
      %s51 = sphi 0, %s48
      %s52 = sphi 0, %s51
      %s68 = sphi 0, %s52
      %s72 = sphi 0, %s72
      %s74 = sphi 0, %s72
      %s75 = sphi 0, %s74
      %s89 = sphi 0, %s75
      %s93 = sphi 0, %s93
      %s95 = sphi 0, %s93
      %s96 = sphi 0, %s95
      %s110 = sphi 0, %s96
      %s114 = sphi 0, %s114
      %s116 = sphi 0, %s114
      %s117 = sphi 0, %s116
      %s131 = sphi 0, %s117
      %s135 = sphi 0, %s135
      %s137 = sphi 0, %s135
      %s138 = sphi 0, %s137
      %s152 = sphi 0, %s138
      %s156 = sphi 0, %s156
      %s158 = sphi 0, %s156
      %s159 = sphi 0, %s158
      %s173 = sphi 0, %s159
      %s177 = sphi 0, %s177
      %s179 = sphi 0, %s177
      %s180 = sphi 0, %s179
      %s194 = sphi 0, %s180
      %s198 = sphi 0, %s198
      %s200 = sphi 0, %s198
      %s201 = sphi 0, %s200
      %s215 = sphi 0, %s201
      %s219 = sphi 0, %s219
      %s221 = sphi 0, %s219
      %s222 = sphi 0, %s221
      %s236 = sphi 0, %s222
      %s240 = sphi 0, %s240
      %s242 = sphi 0, %s240
      %s243 = sphi 0, %s242
      %s257 = sphi 0, %s243
      %s261 = sphi 0, %s261
      %s263 = sphi 0, %s261
      %s264 = sphi 0, %s263
      %s278 = sphi 0, %s264
      %s282 = sphi 0, %s282
      %s284 = sphi 0, %s282
      %s285 = sphi 0, %s284
      %s299 = sphi 0, %s285
      %s303 = sphi 0, %s303
      %s305 = sphi 0, %s303
      %s306 = sphi 0, %s305
      %s320 = sphi 0, %s306
      %s326 = sphi 0, %s328
      %s329 = sphi 0, %s326
      %s330 = sphi 0, %s329
      %s346 = sphi 0, %s330
    $region4: #{tpu_custom_call.1} parent=1 // loop_header_branch
      %27 = sbr.rel (%p25) target = $region8
    $region5: #{tpu_custom_call.1} parent=1 // loop_body
      %s29 = ssub.s32 %s24, 1
      %s30 = ssub.s32 %s24, 2
      %s37 = sadd.s32 1, %s32
      %p38 = scmp.ge.s32.totalorder %s37, 1
      %s39 = scalar_select %p38, 0, %s37
      %s40 = sadd.s32 1, %s31
      %s41 = scalar_select %p38, %s40, %s31
      %p42 = scmp.ge.s32.totalorder %s41, 2
      %s43 = scalar_select %p42, 0, %s41
      %s44 = ssub.s32 %s31, %s43
      %s45 = ssub.s32 %s32, %s39
      %s46 = sor.u32 %s44, %s45
      %p47 = scmp.eq.s32.totalorder %s46, 0
      %s49 = sadd.s32 %s48, 1
      %s50 = scalar_select %p47, %s48, %s49
      %p53 = pneg %p47
      %p54 = scmp.eq.s32.totalorder %s24, 1
      %p55 = por %p53, %p54
      %p56 = scmp.ne.s32.totalorder %s48, %s51
      %p57 = scmp.eq.s32.totalorder %s24, 0
      %p58 = por %p56, %p57
      %p59 = scmp.ne.s32.totalorder %s48, %s51
      %p60 = scmp.eq.s32.totalorder %s29, 1
      %p61 = por %p59, %p60
      %p62 = scmp.ne.s32.totalorder %s51, %s52
      %p63 = scmp.eq.s32.totalorder %s29, 0
      %p64 = por %p62, %p63
      %p65 = scmp.ne.s32.totalorder %s51, %s52
      %p66 = scmp.eq.s32.totalorder %s30, 1
      %p67 = por %p65, %p66
      %p69 = scmp.ne.s32.totalorder %s52, %s68
      %p70 = scmp.eq.s32.totalorder %s30, 0
      %p71 = por %p69, %p70
      %s73 = sadd.s32 %s72, 1
      %p76 = scmp.eq.s32.totalorder %s24, 1
      %p77 = scmp.ne.s32.totalorder %s72, %s74
      %p78 = scmp.eq.s32.totalorder %s24, 0
      %p79 = por %p77, %p78
      %p80 = scmp.ne.s32.totalorder %s72, %s74
      %p81 = scmp.eq.s32.totalorder %s29, 1
      %p82 = por %p80, %p81
      %p83 = scmp.ne.s32.totalorder %s74, %s75
      %p84 = scmp.eq.s32.totalorder %s29, 0
      %p85 = por %p83, %p84
      %p86 = scmp.ne.s32.totalorder %s74, %s75
      %p87 = scmp.eq.s32.totalorder %s30, 1
      %p88 = por %p86, %p87
      %p90 = scmp.ne.s32.totalorder %s75, %s89
      %p91 = scmp.eq.s32.totalorder %s30, 0
      %p92 = por %p90, %p91
      %s94 = sadd.s32 %s93, 1
      %p97 = scmp.eq.s32.totalorder %s24, 1
      %p98 = scmp.ne.s32.totalorder %s93, %s95
      %p99 = scmp.eq.s32.totalorder %s24, 0
      %p100 = por %p98, %p99
      %p101 = scmp.ne.s32.totalorder %s93, %s95
      %p102 = scmp.eq.s32.totalorder %s29, 1
      %p103 = por %p101, %p102
      %p104 = scmp.ne.s32.totalorder %s95, %s96
      %p105 = scmp.eq.s32.totalorder %s29, 0
      %p106 = por %p104, %p105
      %p107 = scmp.ne.s32.totalorder %s95, %s96
      %p108 = scmp.eq.s32.totalorder %s30, 1
      %p109 = por %p107, %p108
      %p111 = scmp.ne.s32.totalorder %s96, %s110
      %p112 = scmp.eq.s32.totalorder %s30, 0
      %p113 = por %p111, %p112
      %s115 = sadd.s32 %s114, 1
      %p118 = scmp.eq.s32.totalorder %s24, 1
      %p119 = scmp.ne.s32.totalorder %s114, %s116
      %p120 = scmp.eq.s32.totalorder %s24, 0
      %p121 = por %p119, %p120
      %p122 = scmp.ne.s32.totalorder %s114, %s116
      %p123 = scmp.eq.s32.totalorder %s29, 1
      %p124 = por %p122, %p123
      %p125 = scmp.ne.s32.totalorder %s116, %s117
      %p126 = scmp.eq.s32.totalorder %s29, 0
      %p127 = por %p125, %p126
      %p128 = scmp.ne.s32.totalorder %s116, %s117
      %p129 = scmp.eq.s32.totalorder %s30, 1
      %p130 = por %p128, %p129
      %p132 = scmp.ne.s32.totalorder %s117, %s131
      %p133 = scmp.eq.s32.totalorder %s30, 0
      %p134 = por %p132, %p133
      %s136 = sadd.s32 %s135, 1
      %p139 = scmp.eq.s32.totalorder %s24, 1
      %p140 = scmp.ne.s32.totalorder %s135, %s137
      %p141 = scmp.eq.s32.totalorder %s24, 0
      %p142 = por %p140, %p141
      %p143 = scmp.ne.s32.totalorder %s135, %s137
      %p144 = scmp.eq.s32.totalorder %s29, 1
      %p145 = por %p143, %p144
      %p146 = scmp.ne.s32.totalorder %s137, %s138
      %p147 = scmp.eq.s32.totalorder %s29, 0
      %p148 = por %p146, %p147
      %p149 = scmp.ne.s32.totalorder %s137, %s138
      %p150 = scmp.eq.s32.totalorder %s30, 1
      %p151 = por %p149, %p150
      %p153 = scmp.ne.s32.totalorder %s138, %s152
      %p154 = scmp.eq.s32.totalorder %s30, 0
      %p155 = por %p153, %p154
      %s157 = sadd.s32 %s156, 1
      %p160 = scmp.eq.s32.totalorder %s24, 1
      %p161 = scmp.ne.s32.totalorder %s156, %s158
      %p162 = scmp.eq.s32.totalorder %s24, 0
      %p163 = por %p161, %p162
      %p164 = scmp.ne.s32.totalorder %s156, %s158
      %p165 = scmp.eq.s32.totalorder %s29, 1
      %p166 = por %p164, %p165
      %p167 = scmp.ne.s32.totalorder %s158, %s159
      %p168 = scmp.eq.s32.totalorder %s29, 0
      %p169 = por %p167, %p168
      %p170 = scmp.ne.s32.totalorder %s158, %s159
      %p171 = scmp.eq.s32.totalorder %s30, 1
      %p172 = por %p170, %p171
      %p174 = scmp.ne.s32.totalorder %s159, %s173
      %p175 = scmp.eq.s32.totalorder %s30, 0
      %p176 = por %p174, %p175
      %s178 = sadd.s32 %s177, 1
      %p181 = scmp.eq.s32.totalorder %s24, 1
      %p182 = scmp.ne.s32.totalorder %s177, %s179
      %p183 = scmp.eq.s32.totalorder %s24, 0
      %p184 = por %p182, %p183
      %p185 = scmp.ne.s32.totalorder %s177, %s179
      %p186 = scmp.eq.s32.totalorder %s29, 1
      %p187 = por %p185, %p186
      %p188 = scmp.ne.s32.totalorder %s179, %s180
      %p189 = scmp.eq.s32.totalorder %s29, 0
      %p190 = por %p188, %p189
      %p191 = scmp.ne.s32.totalorder %s179, %s180
      %p192 = scmp.eq.s32.totalorder %s30, 1
      %p193 = por %p191, %p192
      %p195 = scmp.ne.s32.totalorder %s180, %s194
      %p196 = scmp.eq.s32.totalorder %s30, 0
      %p197 = por %p195, %p196
      %s199 = sadd.s32 %s198, 1
      %p202 = scmp.eq.s32.totalorder %s24, 1
      %p203 = scmp.ne.s32.totalorder %s198, %s200
      %p204 = scmp.eq.s32.totalorder %s24, 0
      %p205 = por %p203, %p204
      %p206 = scmp.ne.s32.totalorder %s198, %s200
      %p207 = scmp.eq.s32.totalorder %s29, 1
      %p208 = por %p206, %p207
      %p209 = scmp.ne.s32.totalorder %s200, %s201
      %p210 = scmp.eq.s32.totalorder %s29, 0
      %p211 = por %p209, %p210
      %p212 = scmp.ne.s32.totalorder %s200, %s201
      %p213 = scmp.eq.s32.totalorder %s30, 1
      %p214 = por %p212, %p213
      %p216 = scmp.ne.s32.totalorder %s201, %s215
      %p217 = scmp.eq.s32.totalorder %s30, 0
      %p218 = por %p216, %p217
      %s220 = sadd.s32 %s219, 1
      %p223 = scmp.eq.s32.totalorder %s24, 1
      %p224 = scmp.ne.s32.totalorder %s219, %s221
      %p225 = scmp.eq.s32.totalorder %s24, 0
      %p226 = por %p224, %p225
      %p227 = scmp.ne.s32.totalorder %s219, %s221
      %p228 = scmp.eq.s32.totalorder %s29, 1
      %p229 = por %p227, %p228
      %p230 = scmp.ne.s32.totalorder %s221, %s222
      %p231 = scmp.eq.s32.totalorder %s29, 0
      %p232 = por %p230, %p231
      %p233 = scmp.ne.s32.totalorder %s221, %s222
      %p234 = scmp.eq.s32.totalorder %s30, 1
      %p235 = por %p233, %p234
      %p237 = scmp.ne.s32.totalorder %s222, %s236
      %p238 = scmp.eq.s32.totalorder %s30, 0
      %p239 = por %p237, %p238
      %s241 = sadd.s32 %s240, 1
      %p244 = scmp.eq.s32.totalorder %s24, 1
      %p245 = scmp.ne.s32.totalorder %s240, %s242
      %p246 = scmp.eq.s32.totalorder %s24, 0
      %p247 = por %p245, %p246
      %p248 = scmp.ne.s32.totalorder %s240, %s242
      %p249 = scmp.eq.s32.totalorder %s29, 1
      %p250 = por %p248, %p249
      %p251 = scmp.ne.s32.totalorder %s242, %s243
      %p252 = scmp.eq.s32.totalorder %s29, 0
      %p253 = por %p251, %p252
      %p254 = scmp.ne.s32.totalorder %s242, %s243
      %p255 = scmp.eq.s32.totalorder %s30, 1
      %p256 = por %p254, %p255
      %p258 = scmp.ne.s32.totalorder %s243, %s257
      %p259 = scmp.eq.s32.totalorder %s30, 0
      %p260 = por %p258, %p259
      %s262 = sadd.s32 %s261, 1
      %p265 = scmp.eq.s32.totalorder %s24, 1
      %p266 = scmp.ne.s32.totalorder %s261, %s263
      %p267 = scmp.eq.s32.totalorder %s24, 0
      %p268 = por %p266, %p267
      %p269 = scmp.ne.s32.totalorder %s261, %s263
      %p270 = scmp.eq.s32.totalorder %s29, 1
      %p271 = por %p269, %p270
      %p272 = scmp.ne.s32.totalorder %s263, %s264
      %p273 = scmp.eq.s32.totalorder %s29, 0
      %p274 = por %p272, %p273
      %p275 = scmp.ne.s32.totalorder %s263, %s264
      %p276 = scmp.eq.s32.totalorder %s30, 1
      %p277 = por %p275, %p276
      %p279 = scmp.ne.s32.totalorder %s264, %s278
      %p280 = scmp.eq.s32.totalorder %s30, 0
      %p281 = por %p279, %p280
      %s283 = sadd.s32 %s282, 1
      %p286 = scmp.eq.s32.totalorder %s24, 1
      %p287 = scmp.ne.s32.totalorder %s282, %s284
      %p288 = scmp.eq.s32.totalorder %s24, 0
      %p289 = por %p287, %p288
      %p290 = scmp.ne.s32.totalorder %s282, %s284
      %p291 = scmp.eq.s32.totalorder %s29, 1
      %p292 = por %p290, %p291
      %p293 = scmp.ne.s32.totalorder %s284, %s285
      %p294 = scmp.eq.s32.totalorder %s29, 0
      %p295 = por %p293, %p294
      %p296 = scmp.ne.s32.totalorder %s284, %s285
      %p297 = scmp.eq.s32.totalorder %s30, 1
      %p298 = por %p296, %p297
      %p300 = scmp.ne.s32.totalorder %s285, %s299
      %p301 = scmp.eq.s32.totalorder %s30, 0
      %p302 = por %p300, %p301
      %s304 = sadd.s32 %s303, 1
      %p307 = scmp.eq.s32.totalorder %s24, 1
      %p308 = scmp.ne.s32.totalorder %s303, %s305
      %p309 = scmp.eq.s32.totalorder %s24, 0
      %p310 = por %p308, %p309
      %p311 = scmp.ne.s32.totalorder %s303, %s305
      %p312 = scmp.eq.s32.totalorder %s29, 1
      %p313 = por %p311, %p312
      %p314 = scmp.ne.s32.totalorder %s305, %s306
      %p315 = scmp.eq.s32.totalorder %s29, 0
      %p316 = por %p314, %p315
      %p317 = scmp.ne.s32.totalorder %s305, %s306
      %p318 = scmp.eq.s32.totalorder %s30, 1
      %p319 = por %p317, %p318
      %p321 = scmp.ne.s32.totalorder %s306, %s320
      %p322 = scmp.eq.s32.totalorder %s30, 0
      %p323 = por %p321, %p322
      %s324 = ssub.s32 %s31, %s43
      %p325 = scmp.eq.s32.totalorder %s324, 0
      %s327 = sadd.s32 %s326, 1
      %s328 = scalar_select %p325, %s326, %s327
      %p331 = pneg %p325
      %p332 = scmp.eq.s32.totalorder %s24, 1
      %p333 = por %p331, %p332
      %p334 = scmp.ne.s32.totalorder %s326, %s329
      %p335 = scmp.eq.s32.totalorder %s24, 0
      %p336 = por %p334, %p335
      %p337 = scmp.ne.s32.totalorder %s326, %s329
      %p338 = scmp.eq.s32.totalorder %s29, 1
      %p339 = por %p337, %p338
      %p340 = scmp.ne.s32.totalorder %s329, %s330
      %p341 = scmp.eq.s32.totalorder %s29, 0
      %p342 = por %p340, %p341
      %p343 = scmp.ne.s32.totalorder %s329, %s330
      %p344 = scmp.eq.s32.totalorder %s30, 1
      %p345 = por %p343, %p344
      %p347 = scmp.ne.s32.totalorder %s330, %s346
      %p348 = scmp.eq.s32.totalorder %s30, 0
      %p349 = por %p347, %p348
      %p350 = scmp.le.s32.totalorder 1, %s24
      %p351 = scmp.lt.s32.totalorder %s24, 3
      %p352 = pnand %p350, %p351
      %p353 = pneg %p352
      // Predicated region
      $region9: #{tpu_custom_call.1} parent=5 // pred_check
        _
      $region10: #{tpu_custom_call.1} parent=5 // pred_check_branch
        %355 = sbr.rel (%p352) target = $region12
      $region11: #{tpu_custom_call.1} parent=5 // pred_region
        %s356 = ssub.s32 %s24, 1
        // Predicated region
        $region13: #{tpu_custom_call.1} parent=11 // pred_check
          %p357 = pneg %p85
        $region14: #{tpu_custom_call.1} parent=11 // pred_check_branch
          %359 = sbr.rel (%p357) target = $region16
        $region15: #{tpu_custom_call.1} parent=11 // pred_region
          _
        $region16: #{tpu_custom_call.1} parent=11 // pred_fallthru
          _
        // Predicated region
        $region17: #{tpu_custom_call.1} parent=11 // pred_check
          %p360 = pneg %p106
        $region18: #{tpu_custom_call.1} parent=11 // pred_check_branch
          %362 = sbr.rel (%p360) target = $region20
        $region19: #{tpu_custom_call.1} parent=11 // pred_region
          _
        $region20: #{tpu_custom_call.1} parent=11 // pred_fallthru
          _
        // Predicated region
        $region21: #{tpu_custom_call.1} parent=11 // pred_check
          %p363 = pneg %p127
        $region22: #{tpu_custom_call.1} parent=11 // pred_check_branch
          %365 = sbr.rel (%p363) target = $region24
        $region23: #{tpu_custom_call.1} parent=11 // pred_region
          _
        $region24: #{tpu_custom_call.1} parent=11 // pred_fallthru
          _
        // Predicated region
        $region25: #{tpu_custom_call.1} parent=11 // pred_check
          %p366 = pneg %p148
        $region26: #{tpu_custom_call.1} parent=11 // pred_check_branch
          %368 = sbr.rel (%p366) target = $region28
        $region27: #{tpu_custom_call.1} parent=11 // pred_region
          _
        $region28: #{tpu_custom_call.1} parent=11 // pred_fallthru
          _
        // Predicated region
        $region29: #{tpu_custom_call.1} parent=11 // pred_check
          %p369 = pneg %p169
        $region30: #{tpu_custom_call.1} parent=11 // pred_check_branch
          %371 = sbr.rel (%p369) target = $region32
        $region31: #{tpu_custom_call.1} parent=11 // pred_region
          %s373 = ssub.s32 8192, 8192
          %374 = vsyncadd [#allocation4], %s373
          %s375 = sshll.u32 [#allocation3], 4
          %s376 = int_to_ptr.vmem [resolvable:$true] %s375
          %381 = dma.hbm_to_vmem [thread:$0]  %s5, 8192, %s376, [#allocation4], 512, 512, 32
        $region32: #{tpu_custom_call.1} parent=11 // pred_fallthru
          _
        // Predicated region
        $region33: #{tpu_custom_call.1} parent=11 // pred_check
          %p382 = pneg %p190
        $region34: #{tpu_custom_call.1} parent=11 // pred_check_branch
          %384 = sbr.rel (%p382) target = $region36
        $region35: #{tpu_custom_call.1} parent=11 // pred_region
          _
        $region36: #{tpu_custom_call.1} parent=11 // pred_fallthru
          _
        // Predicated region
        $region37: #{tpu_custom_call.1} parent=11 // pred_check
          %p385 = pneg %p211
        $region38: #{tpu_custom_call.1} parent=11 // pred_check_branch
          %387 = sbr.rel (%p385) target = $region40
        $region39: #{tpu_custom_call.1} parent=11 // pred_region
          %s389 = ssub.s32 32768, 32768
          %390 = vsyncadd [#allocation7], %s389
          %s391 = sshll.u32 [#allocation6], 4
          %s392 = int_to_ptr.vmem [resolvable:$true] %s391
          %397 = dma.hbm_to_vmem [thread:$0]  %s7, 32768, %s392, [#allocation7], 256, 256, 16
        $region40: #{tpu_custom_call.1} parent=11 // pred_fallthru
          _
        // Predicated region
        $region41: #{tpu_custom_call.1} parent=11 // pred_check
          %p398 = pneg %p232
        $region42: #{tpu_custom_call.1} parent=11 // pred_check_branch
          %400 = sbr.rel (%p398) target = $region44
        $region43: #{tpu_custom_call.1} parent=11 // pred_region
          _
        $region44: #{tpu_custom_call.1} parent=11 // pred_fallthru
          _
        // Predicated region
        $region45: #{tpu_custom_call.1} parent=11 // pred_check
          %p401 = pneg %p253
        $region46: #{tpu_custom_call.1} parent=11 // pred_check_branch
          %403 = sbr.rel (%p401) target = $region48
        $region47: #{tpu_custom_call.1} parent=11 // pred_region
          %s405 = ssub.s32 8192, 8192
          %406 = vsyncadd [#allocation7], %s405
          %s407 = sshll.u32 [#allocation8], 4
          %s408 = int_to_ptr.vmem [resolvable:$true] %s407
          %413 = dma.hbm_to_vmem [thread:$0]  %s9, 8192, %s408, [#allocation7], 128, 128, 8
        $region48: #{tpu_custom_call.1} parent=11 // pred_fallthru
          _
        // Predicated region
        $region49: #{tpu_custom_call.1} parent=11 // pred_check
          %p414 = pneg %p274
        $region50: #{tpu_custom_call.1} parent=11 // pred_check_branch
          %416 = sbr.rel (%p414) target = $region52
        $region51: #{tpu_custom_call.1} parent=11 // pred_region
          _
        $region52: #{tpu_custom_call.1} parent=11 // pred_fallthru
          _
        // Predicated region
        $region53: #{tpu_custom_call.1} parent=11 // pred_check
          %p417 = pneg %p295
        $region54: #{tpu_custom_call.1} parent=11 // pred_check_branch
          %419 = sbr.rel (%p417) target = $region56
        $region55: #{tpu_custom_call.1} parent=11 // pred_region
          _
        $region56: #{tpu_custom_call.1} parent=11 // pred_fallthru
          _
        // Predicated region
        $region57: #{tpu_custom_call.1} parent=11 // pred_check
          %p420 = pneg %p316
        $region58: #{tpu_custom_call.1} parent=11 // pred_check_branch
          %422 = sbr.rel (%p420) target = $region60
        $region59: #{tpu_custom_call.1} parent=11 // pred_region
          _
        $region60: #{tpu_custom_call.1} parent=11 // pred_fallthru
          _
      $region12: #{tpu_custom_call.1} parent=5 // pred_fallthru
        _
      %p423 = scmp.lt.s32.totalorder %s24, 2
      // Predicated region
      $region61: #{tpu_custom_call.1} parent=5 // pred_check
        %p424 = pneg %p423
      $region62: #{tpu_custom_call.1} parent=5 // pred_check_branch
        %426 = sbr.rel (%p424) target = $region64
      $region63: #{tpu_custom_call.1} parent=5 // pred_region
        // Predicated region
        $region65: #{tpu_custom_call.1} parent=63 // pred_check
          %p427 = pneg %p58
        $region66: #{tpu_custom_call.1} parent=63 // pred_check_branch
          %429 = sbr.rel (%p427) target = $region68
        $region67: #{tpu_custom_call.1} parent=63 // pred_region
          %s430 = smul.u32 2, %s32
          %p431 = scmp.lt.s32.totalorder %s31, 1
          %s432 = scalar_select %p431, %s31, 1
          %p433 = scmp.lt.s32.totalorder %s430, 1
          %s434 = scalar_select %p433, %s430, 1
          %s435 = smul.addr %s432, 16
          %s436 = sadd.s32 %s434, %s435
          %s437 = smul.addr %s436, 4
          %s438 = scalar_lea.vmem %s0, %s437
          %s439 = smul.u32 2, %s32
        $region68: #{tpu_custom_call.1} parent=63 // pred_fallthru
          _
      $region64: #{tpu_custom_call.1} parent=5 // pred_fallthru
        _
      %p440 = scmp.le.s32.totalorder 1, %s24
      %p441 = scmp.lt.s32.totalorder %s24, 3
      %p442 = pnand %p440, %p441
      %p443 = pneg %p442
      // Predicated region
      $region69: #{tpu_custom_call.1} parent=5 // pred_check
        _
      $region70: #{tpu_custom_call.1} parent=5 // pred_check_branch
        %445 = sbr.rel (%p442) target = $region72
      $region71: #{tpu_custom_call.1} parent=5 // pred_region
        %s446 = ssub.s32 %s24, 1
        // Predicated region
        $region73: #{tpu_custom_call.1} parent=71 // pred_check
          %p447 = pneg %p169
        $region74: #{tpu_custom_call.1} parent=71 // pred_check_branch
          %449 = sbr.rel (%p447) target = $region76
        $region75: #{tpu_custom_call.1} parent=71 // pred_region
          %450 = dma.done [#allocation4], 8192
        $region76: #{tpu_custom_call.1} parent=71 // pred_fallthru
          _
        // Predicated region
        $region77: #{tpu_custom_call.1} parent=71 // pred_check
          %p451 = pneg %p211
        $region78: #{tpu_custom_call.1} parent=71 // pred_check_branch
          %453 = sbr.rel (%p451) target = $region80
        $region79: #{tpu_custom_call.1} parent=71 // pred_region
          %454 = dma.done [#allocation7], 32768
        $region80: #{tpu_custom_call.1} parent=71 // pred_fallthru
          _
        // Predicated region
        $region81: #{tpu_custom_call.1} parent=71 // pred_check
          %p455 = pneg %p253
        $region82: #{tpu_custom_call.1} parent=71 // pred_check_branch
          %457 = sbr.rel (%p455) target = $region84
        $region83: #{tpu_custom_call.1} parent=71 // pred_region
          %458 = dma.done [#allocation7], 8192
        $region84: #{tpu_custom_call.1} parent=71 // pred_fallthru
          _
        %s459 = smul.u32 2, %s34
        %p460 = scmp.lt.s32.totalorder %s33, 1
        %s461 = scalar_select %p460, %s33, 1
        %p462 = scmp.lt.s32.totalorder %s459, 1
        %s463 = scalar_select %p462, %s459, 1
        %s464 = smul.addr %s461, 16
        %s465 = sadd.s32 %s463, %s464
        %s466 = smul.addr %s465, 4
        %s467 = scalar_lea.vmem %s0, %s466
        %p468 = pneg %p64
        %p469 = pneg %p61
        %p470 = pneg %p85
        %p471 = pneg %p82
        %p472 = pneg %p106
        %p473 = pneg %p103
        %p474 = pneg %p127
        %p475 = pneg %p124
        %p476 = pneg %p148
        %p477 = pneg %p145
        %p478 = pneg %p169
        %p479 = pneg %p166
        %p480 = pneg %p190
        %p481 = pneg %p187
        %p482 = pneg %p211
        %p483 = pneg %p208
        %p484 = pneg %p232
        %p485 = pneg %p229
        %p486 = pneg %p253
        %p487 = pneg %p250
        %p488 = pneg %p274
        %p489 = pneg %p271
        %p490 = pneg %p295
        %p491 = pneg %p292
        %p492 = pneg %p316
        %p493 = pneg %p313
        %p494 = pneg %p342
        %p495 = pneg %p339
        %s496 = sand.u32 %s329, 1
        %s497 = scalar_lea.sflag [#allocation5], %s496
        %s498 = sand.u32 %s329, 1
        %s499 = scalar_lea.vmem [#allocation9], %s498
        %s500 = smul.u32 2, %s34
        %p501 = scmp.lt.s32.totalorder %s33, 1
        %s502 = scalar_select %p501, %s33, 1
        %p503 = scmp.lt.s32.totalorder %s500, 1
        %s504 = scalar_select %p503, %s500, 1
        %s505 = smul.addr %s502, 16
        %s506 = sadd.s32 %s504, %s505
        %s507 = smul.addr %s506, 4
        %s508 = scalar_lea.vmem %s0, %s507
        %s509 = smul.u32 2, %s34
        %v511 = vld [vmem:[%s508] sm:$0xf]
        %v512 = vld [vmem:[%s508 + $0x4] sm:$0xf]
        %v513 = vld [vmem:[%s508 + $0x8] sm:$0xf]
        %v514 = vld [vmem:[%s508 + $0xc] sm:$0xf]
        %v515 = vld [vmem:[%s508 + $0x10] sm:$0xf]
        %v516 = vld [vmem:[%s508 + $0x14] sm:$0xf]
        %v517 = vld [vmem:[%s508 + $0x18] sm:$0xf]
        %v518 = vld [vmem:[%s508 + $0x1c] sm:$0xf]
        %v519 = vld [vmem:[%s508 + $0x20] sm:$0xf]
        %v520 = vld [vmem:[%s508 + $0x24] sm:$0xf]
        %v521 = vld [vmem:[%s508 + $0x28] sm:$0xf]
        %v522 = vld [vmem:[%s508 + $0x2c] sm:$0xf]
        %v523 = vld [vmem:[%s508 + $0x30] sm:$0xf]
        %v524 = vld [vmem:[%s508 + $0x34] sm:$0xf]
        %v525 = vld [vmem:[%s508 + $0x38] sm:$0xf]
        %v526 = vld [vmem:[%s508 + $0x3c] sm:$0xf]
        %v527 = vld [vmem:[%s1] sm:$0xf]
        %v528 = vld [vmem:[%s2] sm:$0x1]
        %v530 = vlaneseq
        %v531 = vshrl.u32 %v530, 7
        %v532 = vsub.s32 0, %v531
        %v533 = vrot.slane %v528, %v532
        %v551 = vunpack.c.l.b16 %v511
        %v552 = vunpack.c.l.b16 %v512
        %v553 = vunpack.c.l.b16 %v513
        %v554 = vunpack.c.l.b16 %v514
        %v555 = vunpack.c.l.b16 %v515
        %v556 = vunpack.c.l.b16 %v516
        %v557 = vunpack.c.l.b16 %v517
        %v558 = vunpack.c.l.b16 %v518
        %v559 = vunpack.c.l.b16 %v519
        %v560 = vunpack.c.l.b16 %v520
        %v561 = vunpack.c.l.b16 %v521
        %v562 = vunpack.c.l.b16 %v522
        %v563 = vunpack.c.l.b16 %v523
        %v564 = vunpack.c.l.b16 %v524
        %v565 = vunpack.c.l.b16 %v525
        %v566 = vunpack.c.l.b16 %v526
        %v567 = vpack.c.b16 %v552, %v551
        %v568 = vpack.c.b16 %v554, %v553
        %v569 = vpack.c.b16 %v556, %v555
        %v570 = vpack.c.b16 %v558, %v557
        %v571 = vpack.c.b16 %v560, %v559
        %v572 = vpack.c.b16 %v562, %v561
        %v573 = vpack.c.b16 %v564, %v563
        %v574 = vpack.c.b16 %v566, %v565
        %vm575 = vcmask 64512
        %v577 = vsel %vm575, %v567, 0
        %v580 = vsel %vm575, %v568, 0
        %v583 = vsel %vm575, %v569, 0
        %v586 = vsel %vm575, %v570, 0
        %v589 = vsel %vm575, %v571, 0
        %v592 = vsel %vm575, %v572, 0
        %v595 = vsel %vm575, %v573, 0
        %v598 = vsel %vm575, %v574, 0
        %vm600 = vcmask 1043456
        %v602 = vsel %vm600, %v527, 0
        %604 = vmatprep.subr.bf16.mxu0 0
        %605 = vmatpush1.bf16.msra.mxu0 0
        %606 = vmatprep.subr.bf16.mxu0 0
        %607 = vmatpush1.bf16.msra.mxu0 0
        %608 = vmatprep.subr.bf16.mxu0 0
        %609 = vmatpush1.bf16.msra.mxu0 0
        %610 = vmatprep.subr.bf16.mxu0 0
        %611 = vmatpush1.bf16.msra.mxu0 0
        %612 = vmatprep.subr.bf16.mxu0 0
        %613 = vmatpush1.bf16.msra.mxu0 0
        %614 = vmatprep.subr.bf16.mxu0 0
        %615 = vmatpush1.bf16.msra.mxu0 0
        %616 = vmatprep.subr.bf16.mxu0 0
        %617 = vmatpush1.bf16.msra.mxu0 0
        %618 = vmatprep.subr.bf16.mxu0 0
        %619 = vmatpush1.bf16.msra.mxu0 %v602
        %620 = vmatprep.subr.bf16.mxu0 0
        %621 = vmatpush2.bf16.msra.mxu0 0
        %622 = vmatprep.subr.bf16.mxu0 0
        %623 = vmatpush2.bf16.msra.mxu0 0
        %624 = vmatprep.subr.bf16.mxu0 0
        %625 = vmatpush2.bf16.msra.mxu0 0
        %626 = vmatprep.subr.bf16.mxu0 0
        %627 = vmatpush2.bf16.msra.mxu0 0
        %628 = vmatprep.subr.bf16.mxu0 0
        %629 = vmatpush2.bf16.msra.mxu0 0
        %630 = vmatprep.subr.bf16.mxu0 0
        %631 = vmatpush2.bf16.msra.mxu0 0
        %632 = vmatprep.subr.bf16.mxu0 0
        %633 = vmatpush2.bf16.msra.mxu0 0
        %634 = vmatprep.subr.bf16.mxu0 0
        %635 = vmatpush2.bf16.msra.mxu0 0
        %636 = vmatprep.mubr.bf16.mxu0 0
        %637 = vmatmul.mubr.bf16.gmra.mxu0 %v577
        %v638 = vpop.f32.mrf.mxu0
        %v639 = vadd.f32 %v533, %v638
        %v640 = vpop.f32.mrf.mxu0
        %v641 = vpop.f32.mrf.mxu0
        %v642 = vadd.f32 %v533, %v641
        %v643 = vpop.f32.mrf.mxu0
        %644 = vmatprep.mubr.bf16.mxu0 0
        %645 = vmatmul.mubr.bf16.gmra.mxu0 %v580
        %v646 = vpop.f32.mrf.mxu0
        %v647 = vadd.f32 %v533, %v646
        %v648 = vpop.f32.mrf.mxu0
        %v649 = vpop.f32.mrf.mxu0
        %v650 = vadd.f32 %v533, %v649
        %v651 = vpop.f32.mrf.mxu0
        %652 = vmatprep.mubr.bf16.mxu0 0
        %653 = vmatmul.mubr.bf16.gmra.mxu0 %v583
        %v654 = vpop.f32.mrf.mxu0
        %v655 = vadd.f32 %v533, %v654
        %v656 = vpop.f32.mrf.mxu0
        %v657 = vpop.f32.mrf.mxu0
        %v658 = vadd.f32 %v533, %v657
        %v659 = vpop.f32.mrf.mxu0
        %660 = vmatprep.mubr.bf16.mxu0 0
        %661 = vmatmul.mubr.bf16.gmra.mxu0 %v586
        %v662 = vpop.f32.mrf.mxu0
        %v663 = vadd.f32 %v533, %v662
        %v664 = vpop.f32.mrf.mxu0
        %v665 = vpop.f32.mrf.mxu0
        %v666 = vadd.f32 %v533, %v665
        %v667 = vpop.f32.mrf.mxu0
        %668 = vmatprep.mubr.bf16.mxu0 0
        %669 = vmatmul.mubr.bf16.gmra.mxu0 %v589
        %v670 = vpop.f32.mrf.mxu0
        %v671 = vadd.f32 %v533, %v670
        %v672 = vpop.f32.mrf.mxu0
        %v673 = vpop.f32.mrf.mxu0
        %v674 = vadd.f32 %v533, %v673
        %v675 = vpop.f32.mrf.mxu0
        %676 = vmatprep.mubr.bf16.mxu0 0
        %677 = vmatmul.mubr.bf16.gmra.mxu0 %v592
        %v678 = vpop.f32.mrf.mxu0
        %v679 = vadd.f32 %v533, %v678
        %v680 = vpop.f32.mrf.mxu0
        %v681 = vpop.f32.mrf.mxu0
        %v682 = vadd.f32 %v533, %v681
        %v683 = vpop.f32.mrf.mxu0
        %684 = vmatprep.mubr.bf16.mxu0 0
        %685 = vmatmul.mubr.bf16.gmra.mxu0 %v595
        %v686 = vpop.f32.mrf.mxu0
        %v687 = vadd.f32 %v533, %v686
        %v688 = vpop.f32.mrf.mxu0
        %v689 = vpop.f32.mrf.mxu0
        %v690 = vadd.f32 %v533, %v689
        %v691 = vpop.f32.mrf.mxu0
        %692 = vmatprep.mubr.bf16.mxu0 0
        %693 = vmatmul.mubr.bf16.gmra.mxu0 %v598
        %v694 = vpop.f32.mrf.mxu0
        %v695 = vadd.f32 %v533, %v694
        %v696 = vpop.f32.mrf.mxu0
        %v697 = vpop.f32.mrf.mxu0
        %v698 = vadd.f32 %v533, %v697
        %v699 = vpop.f32.mrf.mxu0
        %700 = vdwg.mxu0
        %v701 = vmul.f32 %v639, 0.2
        %v702 = vmul.f32 %v642, 0.2
        %v703 = vmul.f32 %v647, 0.2
        %v704 = vmul.f32 %v650, 0.2
        %v705 = vmul.f32 %v655, 0.2
        %v706 = vmul.f32 %v658, 0.2
        %v707 = vmul.f32 %v663, 0.2
        %v708 = vmul.f32 %v666, 0.2
        %v709 = vmul.f32 %v671, 0.2
        %v710 = vmul.f32 %v674, 0.2
        %v711 = vmul.f32 %v679, 0.2
        %v712 = vmul.f32 %v682, 0.2
        %v713 = vmul.f32 %v687, 0.2
        %v714 = vmul.f32 %v690, 0.2
        %v715 = vmul.f32 %v695, 0.2
        %v716 = vmul.f32 %v698, 0.2
        %v717 = vmax.f32 %v639, %v701
        %v718 = vmax.f32 %v642, %v702
        %v719 = vmax.f32 %v647, %v703
        %v720 = vmax.f32 %v650, %v704
        %v721 = vmax.f32 %v655, %v705
        %v722 = vmax.f32 %v658, %v706
        %v723 = vmax.f32 %v663, %v707
        %v724 = vmax.f32 %v666, %v708
        %v725 = vmax.f32 %v671, %v709
        %v726 = vmax.f32 %v674, %v710
        %v727 = vmax.f32 %v679, %v711
        %v728 = vmax.f32 %v682, %v712
        %v729 = vmax.f32 %v687, %v713
        %v730 = vmax.f32 %v690, %v714
        %v731 = vmax.f32 %v695, %v715
        %v732 = vmax.f32 %v698, %v716
        %v733 = vpack.c.bf16 %v718, %v717
        %v734 = vpack.c.bf16 %v720, %v719
        %v735 = vpack.c.bf16 %v722, %v721
        %v736 = vpack.c.bf16 %v724, %v723
        %v737 = vpack.c.bf16 %v726, %v725
        %v738 = vpack.c.bf16 %v728, %v727
        %v739 = vpack.c.bf16 %v730, %v729
        %v740 = vpack.c.bf16 %v732, %v731
        %v741 = vld [vmem:[%s3] sm:$0xf]
        %v742 = vld [vmem:[%s3 + $0x4] sm:$0xf]
        %v743 = vld [vmem:[%s3 + $0x8] sm:$0xf]
        %v744 = vld [vmem:[%s3 + $0xc] sm:$0xf]
        %v745 = vld [vmem:[%s3 + $0x10] sm:$0xf]
        %v746 = vld [vmem:[%s3 + $0x14] sm:$0xf]
        %v747 = vld [vmem:[%s3 + $0x18] sm:$0xf]
        %v748 = vld [vmem:[%s3 + $0x1c] sm:$0xf]
        %v749 = vld [vmem:[%s4] sm:$0x1]
        %v751 = vlaneseq
        %v752 = vshrl.u32 %v751, 7
        %v753 = vsub.s32 0, %v752
        %v754 = vrot.slane %v749, %v753
        %v764 = vunpack.c.l.b16 %v741
        %v765 = vunpack.c.l.b16 %v742
        %v766 = vunpack.c.l.b16 %v743
        %v767 = vunpack.c.l.b16 %v744
        %v768 = vunpack.c.l.b16 %v745
        %v769 = vunpack.c.l.b16 %v746
        %v770 = vunpack.c.l.b16 %v747
        %v771 = vunpack.c.l.b16 %v748
        %v772 = vpack.c.b16 %v765, %v764
        %v773 = vpack.c.b16 %v767, %v766
        %v774 = vpack.c.b16 %v769, %v768
        %v775 = vpack.c.b16 %v771, %v770
        %vm780 = vcmask 523264
        %v782 = vsel %vm780, %v733, 0
        %v785 = vsel %vm780, %v734, 0
        %v788 = vsel %vm780, %v735, 0
        %v791 = vsel %vm780, %v736, 0
        %v794 = vsel %vm780, %v737, 0
        %v797 = vsel %vm780, %v738, 0
        %v800 = vsel %vm780, %v739, 0
        %v803 = vsel %vm780, %v740, 0
        %805 = vmatprep.subr.bf16.mxu0 0
        %806 = vmatpush1.bf16.msra.mxu0 0
        %807 = vmatprep.subr.bf16.mxu0 0
        %808 = vmatpush1.bf16.msra.mxu0 0
        %809 = vmatprep.subr.bf16.mxu0 0
        %810 = vmatpush1.bf16.msra.mxu0 0
        %811 = vmatprep.subr.bf16.mxu0 0
        %812 = vmatpush1.bf16.msra.mxu0 0
        %813 = vmatprep.subr.bf16.mxu0 0
        %814 = vmatpush1.bf16.msra.mxu0 %v775
        %815 = vmatprep.subr.bf16.mxu0 0
        %816 = vmatpush1.bf16.msra.mxu0 %v774
        %817 = vmatprep.subr.bf16.mxu0 0
        %818 = vmatpush1.bf16.msra.mxu0 %v773
        %819 = vmatprep.subr.bf16.mxu0 0
        %820 = vmatpush1.bf16.msra.mxu0 %v772
        %821 = vmatprep.subr.bf16.mxu0 0
        %822 = vmatpush2.bf16.msra.mxu0 0
        %823 = vmatprep.subr.bf16.mxu0 0
        %824 = vmatpush2.bf16.msra.mxu0 0
        %825 = vmatprep.subr.bf16.mxu0 0
        %826 = vmatpush2.bf16.msra.mxu0 0
        %827 = vmatprep.subr.bf16.mxu0 0
        %828 = vmatpush2.bf16.msra.mxu0 0
        %829 = vmatprep.subr.bf16.mxu0 0
        %830 = vmatpush2.bf16.msra.mxu0 0
        %831 = vmatprep.subr.bf16.mxu0 0
        %832 = vmatpush2.bf16.msra.mxu0 0
        %833 = vmatprep.subr.bf16.mxu0 0
        %834 = vmatpush2.bf16.msra.mxu0 0
        %835 = vmatprep.subr.bf16.mxu0 0
        %836 = vmatpush2.bf16.msra.mxu0 0
        %837 = vmatprep.mubr.bf16.mxu0 0
        %838 = vmatmul.mubr.bf16.gmra.mxu0 %v782
        %v839 = vpop.f32.mrf.mxu0
        %v840 = vadd.f32 %v754, %v839
        %v841 = vpop.f32.mrf.mxu0
        %v842 = vpop.f32.mrf.mxu0
        %v843 = vadd.f32 %v754, %v842
        %v844 = vpop.f32.mrf.mxu0
        %845 = vmatprep.mubr.bf16.mxu0 0
        %846 = vmatmul.mubr.bf16.gmra.mxu0 %v785
        %v847 = vpop.f32.mrf.mxu0
        %v848 = vadd.f32 %v754, %v847
        %v849 = vpop.f32.mrf.mxu0
        %v850 = vpop.f32.mrf.mxu0
        %v851 = vadd.f32 %v754, %v850
        %v852 = vpop.f32.mrf.mxu0
        %853 = vmatprep.mubr.bf16.mxu0 0
        %854 = vmatmul.mubr.bf16.gmra.mxu0 %v788
        %v855 = vpop.f32.mrf.mxu0
        %v856 = vadd.f32 %v754, %v855
        %v857 = vpop.f32.mrf.mxu0
        %v858 = vpop.f32.mrf.mxu0
        %v859 = vadd.f32 %v754, %v858
        %v860 = vpop.f32.mrf.mxu0
        %861 = vmatprep.mubr.bf16.mxu0 0
        %862 = vmatmul.mubr.bf16.gmra.mxu0 %v791
        %v863 = vpop.f32.mrf.mxu0
        %v864 = vadd.f32 %v754, %v863
        %v865 = vpop.f32.mrf.mxu0
        %v866 = vpop.f32.mrf.mxu0
        %v867 = vadd.f32 %v754, %v866
        %v868 = vpop.f32.mrf.mxu0
        %869 = vmatprep.mubr.bf16.mxu0 0
        %870 = vmatmul.mubr.bf16.gmra.mxu0 %v794
        %v871 = vpop.f32.mrf.mxu0
        %v872 = vadd.f32 %v754, %v871
        %v873 = vpop.f32.mrf.mxu0
        %v874 = vpop.f32.mrf.mxu0
        %v875 = vadd.f32 %v754, %v874
        %v876 = vpop.f32.mrf.mxu0
        %877 = vmatprep.mubr.bf16.mxu0 0
        %878 = vmatmul.mubr.bf16.gmra.mxu0 %v797
        %v879 = vpop.f32.mrf.mxu0
        %v880 = vadd.f32 %v754, %v879
        %v881 = vpop.f32.mrf.mxu0
        %v882 = vpop.f32.mrf.mxu0
        %v883 = vadd.f32 %v754, %v882
        %v884 = vpop.f32.mrf.mxu0
        %885 = vmatprep.mubr.bf16.mxu0 0
        %886 = vmatmul.mubr.bf16.gmra.mxu0 %v800
        %v887 = vpop.f32.mrf.mxu0
        %v888 = vadd.f32 %v754, %v887
        %v889 = vpop.f32.mrf.mxu0
        %v890 = vpop.f32.mrf.mxu0
        %v891 = vadd.f32 %v754, %v890
        %v892 = vpop.f32.mrf.mxu0
        %893 = vmatprep.mubr.bf16.mxu0 0
        %894 = vmatmul.mubr.bf16.gmra.mxu0 %v803
        %v895 = vpop.f32.mrf.mxu0
        %v896 = vadd.f32 %v754, %v895
        %v897 = vpop.f32.mrf.mxu0
        %v898 = vpop.f32.mrf.mxu0
        %v899 = vadd.f32 %v754, %v898
        %v900 = vpop.f32.mrf.mxu0
        %901 = vdwg.mxu0
        %v902 = vmul.f32 %v840, 0.2
        %v903 = vmul.f32 %v843, 0.2
        %v904 = vmul.f32 %v848, 0.2
        %v905 = vmul.f32 %v851, 0.2
        %v906 = vmul.f32 %v856, 0.2
        %v907 = vmul.f32 %v859, 0.2
        %v908 = vmul.f32 %v864, 0.2
        %v909 = vmul.f32 %v867, 0.2
        %v910 = vmul.f32 %v872, 0.2
        %v911 = vmul.f32 %v875, 0.2
        %v912 = vmul.f32 %v880, 0.2
        %v913 = vmul.f32 %v883, 0.2
        %v914 = vmul.f32 %v888, 0.2
        %v915 = vmul.f32 %v891, 0.2
        %v916 = vmul.f32 %v896, 0.2
        %v917 = vmul.f32 %v899, 0.2
        %v918 = vmax.f32 %v840, %v902
        %v919 = vmax.f32 %v843, %v903
        %v920 = vmax.f32 %v848, %v904
        %v921 = vmax.f32 %v851, %v905
        %v922 = vmax.f32 %v856, %v906
        %v923 = vmax.f32 %v859, %v907
        %v924 = vmax.f32 %v864, %v908
        %v925 = vmax.f32 %v867, %v909
        %v926 = vmax.f32 %v872, %v910
        %v927 = vmax.f32 %v875, %v911
        %v928 = vmax.f32 %v880, %v912
        %v929 = vmax.f32 %v883, %v913
        %v930 = vmax.f32 %v888, %v914
        %v931 = vmax.f32 %v891, %v915
        %v932 = vmax.f32 %v896, %v916
        %v933 = vmax.f32 %v899, %v917
        %v934 = vmax.f32 %v918, %v922
        %v935 = vmax.f32 %v920, %v924
        %v936 = vmax.f32 %v934, %v926
        %v937 = vmax.f32 %v935, %v928
        %v938 = vmax.f32 %v936, %v930
        %v939 = vmax.f32 %v937, %v932
        %v940 = vmax.f32 %v938, %v939
        %v941 = vmax.f32 %v919, %v923
        %v942 = vmax.f32 %v921, %v925
        %v943 = vmax.f32 %v941, %v927
        %v944 = vmax.f32 %v942, %v929
        %v945 = vmax.f32 %v943, %v931
        %v946 = vmax.f32 %v944, %v933
        %v947 = vmax.f32 %v945, %v946
        %v948 = vpack.c.bf16 %v947, %v940
        %v949 = vld [vmem:[#allocation3] sm:$0xff]
        %v950 = vld [vmem:[#allocation3 + $0x8] sm:$0xff]
        %v951 = vld [vmem:[#allocation3 + $0x10] sm:$0xff]
        %v952 = vld [vmem:[#allocation3 + $0x18] sm:$0xff]
        %v953 = vld [vmem:[#allocation3 + $0x20] sm:$0xff]
        %v954 = vld [vmem:[#allocation3 + $0x28] sm:$0xff]
        %v955 = vld [vmem:[#allocation3 + $0x30] sm:$0xff]
        %v956 = vld [vmem:[#allocation3 + $0x38] sm:$0xff]
        %v957 = vld [vmem:[#allocation3 + $0x40] sm:$0xff]
        %v958 = vld [vmem:[#allocation3 + $0x48] sm:$0xff]
        %v959 = vld [vmem:[#allocation3 + $0x50] sm:$0xff]
        %v960 = vld [vmem:[#allocation3 + $0x58] sm:$0xff]
        %v961 = vld [vmem:[#allocation3 + $0x60] sm:$0xff]
        %v962 = vld [vmem:[#allocation3 + $0x68] sm:$0xff]
        %v963 = vld [vmem:[#allocation3 + $0x70] sm:$0xff]
        %v964 = vld [vmem:[#allocation3 + $0x78] sm:$0xff]
        %v965 = vld [vmem:[#allocation3 + $0x80] sm:$0xff]
        %v966 = vld [vmem:[#allocation3 + $0x88] sm:$0xff]
        %v967 = vld [vmem:[#allocation3 + $0x90] sm:$0xff]
        %v968 = vld [vmem:[#allocation3 + $0x98] sm:$0xff]
        %v969 = vld [vmem:[#allocation3 + $0xa0] sm:$0xff]
        %v970 = vld [vmem:[#allocation3 + $0xa8] sm:$0xff]
        %v971 = vld [vmem:[#allocation3 + $0xb0] sm:$0xff]
        %v972 = vld [vmem:[#allocation3 + $0xb8] sm:$0xff]
        %v973 = vld [vmem:[#allocation3 + $0xc0] sm:$0xff]
        %v974 = vld [vmem:[#allocation3 + $0xc8] sm:$0xff]
        %v975 = vld [vmem:[#allocation3 + $0xd0] sm:$0xff]
        %v976 = vld [vmem:[#allocation3 + $0xd8] sm:$0xff]
        %v977 = vld [vmem:[#allocation3 + $0xe0] sm:$0xff]
        %v978 = vld [vmem:[#allocation3 + $0xe8] sm:$0xff]
        %v979 = vld [vmem:[#allocation3 + $0xf0] sm:$0xff]
        %v980 = vld [vmem:[#allocation3 + $0xf8] sm:$0xff]
        %v981 = vld [vmem:[#allocation3 + $0x100] sm:$0xff]
        %v982 = vld [vmem:[#allocation3 + $0x108] sm:$0xff]
        %v983 = vld [vmem:[#allocation3 + $0x110] sm:$0xff]
        %v984 = vld [vmem:[#allocation3 + $0x118] sm:$0xff]
        %v985 = vld [vmem:[#allocation3 + $0x120] sm:$0xff]
        %v986 = vld [vmem:[#allocation3 + $0x128] sm:$0xff]
        %v987 = vld [vmem:[#allocation3 + $0x130] sm:$0xff]
        %v988 = vld [vmem:[#allocation3 + $0x138] sm:$0xff]
        %v989 = vld [vmem:[#allocation3 + $0x140] sm:$0xff]
        %v990 = vld [vmem:[#allocation3 + $0x148] sm:$0xff]
        %v991 = vld [vmem:[#allocation3 + $0x150] sm:$0xff]
        %v992 = vld [vmem:[#allocation3 + $0x158] sm:$0xff]
        %v993 = vld [vmem:[#allocation3 + $0x160] sm:$0xff]
        %v994 = vld [vmem:[#allocation3 + $0x168] sm:$0xff]
        %v995 = vld [vmem:[#allocation3 + $0x170] sm:$0xff]
        %v996 = vld [vmem:[#allocation3 + $0x178] sm:$0xff]
        %v997 = vld [vmem:[#allocation3 + $0x180] sm:$0xff]
        %v998 = vld [vmem:[#allocation3 + $0x188] sm:$0xff]
        %v999 = vld [vmem:[#allocation3 + $0x190] sm:$0xff]
        %v1000 = vld [vmem:[#allocation3 + $0x198] sm:$0xff]
        %v1001 = vld [vmem:[#allocation3 + $0x1a0] sm:$0xff]
        %v1002 = vld [vmem:[#allocation3 + $0x1a8] sm:$0xff]
        %v1003 = vld [vmem:[#allocation3 + $0x1b0] sm:$0xff]
        %v1004 = vld [vmem:[#allocation3 + $0x1b8] sm:$0xff]
        %v1005 = vld [vmem:[#allocation3 + $0x1c0] sm:$0xff]
        %v1006 = vld [vmem:[#allocation3 + $0x1c8] sm:$0xff]
        %v1007 = vld [vmem:[#allocation3 + $0x1d0] sm:$0xff]
        %v1008 = vld [vmem:[#allocation3 + $0x1d8] sm:$0xff]
        %v1009 = vld [vmem:[#allocation3 + $0x1e0] sm:$0xff]
        %v1010 = vld [vmem:[#allocation3 + $0x1e8] sm:$0xff]
        %v1011 = vld [vmem:[#allocation3 + $0x1f0] sm:$0xff]
        %v1012 = vld [vmem:[#allocation3 + $0x1f8] sm:$0xff]
        %v1013 = vld [vmem:[%s6] sm:$0xff]
        %v1015 = vlaneseq
        %v1016 = vshrl.u32 %v1015, 7
        %v1017 = vsub.s32 0, %v1016
        %v1018 = vrot.slane %v1013, %v1017
        %v1019 = vlaneseq
        %v1020 = vshrl.u32 %v1019, 7
        %v1021 = vsub.s32 1, %v1020
        %v1022 = vrot.slane %v1013, %v1021
        %v1023 = vlaneseq
        %v1024 = vshrl.u32 %v1023, 7
        %v1025 = vsub.s32 2, %v1024
        %v1026 = vrot.slane %v1013, %v1025
        %v1027 = vlaneseq
        %v1028 = vshrl.u32 %v1027, 7
        %v1029 = vsub.s32 3, %v1028
        %v1030 = vrot.slane %v1013, %v1029
        %v1031 = vlaneseq
        %v1032 = vshrl.u32 %v1031, 7
        %v1033 = vsub.s32 4, %v1032
        %v1034 = vrot.slane %v1013, %v1033
        %v1035 = vlaneseq
        %v1036 = vshrl.u32 %v1035, 7
        %v1037 = vsub.s32 5, %v1036
        %v1038 = vrot.slane %v1013, %v1037
        %v1039 = vlaneseq
        %v1040 = vshrl.u32 %v1039, 7
        %v1041 = vsub.s32 6, %v1040
        %v1042 = vrot.slane %v1013, %v1041
        %v1043 = vlaneseq
        %v1044 = vshrl.u32 %v1043, 7
        %v1045 = vsub.s32 7, %v1044
        %v1046 = vrot.slane %v1013, %v1045
        %v1119 = vunpack.c.l.b16 %v949
        %v1120 = vunpack.c.h.b16 %v949
        %v1121 = vunpack.c.l.b16 %v950
        %v1122 = vunpack.c.h.b16 %v950
        %v1123 = vunpack.c.l.b16 %v951
        %v1124 = vunpack.c.h.b16 %v951
        %v1125 = vunpack.c.l.b16 %v952
        %v1126 = vunpack.c.h.b16 %v952
        %v1127 = vunpack.c.l.b16 %v953
        %v1128 = vunpack.c.h.b16 %v953
        %v1129 = vunpack.c.l.b16 %v954
        %v1130 = vunpack.c.h.b16 %v954
        %v1131 = vunpack.c.l.b16 %v955
        %v1132 = vunpack.c.h.b16 %v955
        %v1133 = vunpack.c.l.b16 %v956
        %v1134 = vunpack.c.h.b16 %v956
        %v1135 = vunpack.c.l.b16 %v957
        %v1136 = vunpack.c.h.b16 %v957
        %v1137 = vunpack.c.l.b16 %v958
        %v1138 = vunpack.c.h.b16 %v958
        %v1139 = vunpack.c.l.b16 %v959
        %v1140 = vunpack.c.h.b16 %v959
        %v1141 = vunpack.c.l.b16 %v960
        %v1142 = vunpack.c.h.b16 %v960
        %v1143 = vunpack.c.l.b16 %v961
        %v1144 = vunpack.c.h.b16 %v961
        %v1145 = vunpack.c.l.b16 %v962
        %v1146 = vunpack.c.h.b16 %v962
        %v1147 = vunpack.c.l.b16 %v963
        %v1148 = vunpack.c.h.b16 %v963
        %v1149 = vunpack.c.l.b16 %v964
        %v1150 = vunpack.c.h.b16 %v964
        %v1151 = vunpack.c.l.b16 %v965
        %v1152 = vunpack.c.h.b16 %v965
        %v1153 = vunpack.c.l.b16 %v966
        %v1154 = vunpack.c.h.b16 %v966
        %v1155 = vunpack.c.l.b16 %v967
        %v1156 = vunpack.c.h.b16 %v967
        %v1157 = vunpack.c.l.b16 %v968
        %v1158 = vunpack.c.h.b16 %v968
        %v1159 = vunpack.c.l.b16 %v969
        %v1160 = vunpack.c.h.b16 %v969
        %v1161 = vunpack.c.l.b16 %v970
        %v1162 = vunpack.c.h.b16 %v970
        %v1163 = vunpack.c.l.b16 %v971
        %v1164 = vunpack.c.h.b16 %v971
        %v1165 = vunpack.c.l.b16 %v972
        %v1166 = vunpack.c.h.b16 %v972
        %v1167 = vunpack.c.l.b16 %v973
        %v1168 = vunpack.c.h.b16 %v973
        %v1169 = vunpack.c.l.b16 %v974
        %v1170 = vunpack.c.h.b16 %v974
        %v1171 = vunpack.c.l.b16 %v975
        %v1172 = vunpack.c.h.b16 %v975
        %v1173 = vunpack.c.l.b16 %v976
        %v1174 = vunpack.c.h.b16 %v976
        %v1175 = vunpack.c.l.b16 %v977
        %v1176 = vunpack.c.h.b16 %v977
        %v1177 = vunpack.c.l.b16 %v978
        %v1178 = vunpack.c.h.b16 %v978
        %v1179 = vunpack.c.l.b16 %v979
        %v1180 = vunpack.c.h.b16 %v979
        %v1181 = vunpack.c.l.b16 %v980
        %v1182 = vunpack.c.h.b16 %v980
        %v1183 = vunpack.c.l.b16 %v981
        %v1184 = vunpack.c.h.b16 %v981
        %v1185 = vunpack.c.l.b16 %v982
        %v1186 = vunpack.c.h.b16 %v982
        %v1187 = vunpack.c.l.b16 %v983
        %v1188 = vunpack.c.h.b16 %v983
        %v1189 = vunpack.c.l.b16 %v984
        %v1190 = vunpack.c.h.b16 %v984
        %v1191 = vunpack.c.l.b16 %v985
        %v1192 = vunpack.c.h.b16 %v985
        %v1193 = vunpack.c.l.b16 %v986
        %v1194 = vunpack.c.h.b16 %v986
        %v1195 = vunpack.c.l.b16 %v987
        %v1196 = vunpack.c.h.b16 %v987
        %v1197 = vunpack.c.l.b16 %v988
        %v1198 = vunpack.c.h.b16 %v988
        %v1199 = vunpack.c.l.b16 %v989
        %v1200 = vunpack.c.h.b16 %v989
        %v1201 = vunpack.c.l.b16 %v990
        %v1202 = vunpack.c.h.b16 %v990
        %v1203 = vunpack.c.l.b16 %v991
        %v1204 = vunpack.c.h.b16 %v991
        %v1205 = vunpack.c.l.b16 %v992
        %v1206 = vunpack.c.h.b16 %v992
        %v1207 = vunpack.c.l.b16 %v993
        %v1208 = vunpack.c.h.b16 %v993
        %v1209 = vunpack.c.l.b16 %v994
        %v1210 = vunpack.c.h.b16 %v994
        %v1211 = vunpack.c.l.b16 %v995
        %v1212 = vunpack.c.h.b16 %v995
        %v1213 = vunpack.c.l.b16 %v996
        %v1214 = vunpack.c.h.b16 %v996
        %v1215 = vunpack.c.l.b16 %v997
        %v1216 = vunpack.c.h.b16 %v997
        %v1217 = vunpack.c.l.b16 %v998
        %v1218 = vunpack.c.h.b16 %v998
        %v1219 = vunpack.c.l.b16 %v999
        %v1220 = vunpack.c.h.b16 %v999
        %v1221 = vunpack.c.l.b16 %v1000
        %v1222 = vunpack.c.h.b16 %v1000
        %v1223 = vunpack.c.l.b16 %v1001
        %v1224 = vunpack.c.h.b16 %v1001
        %v1225 = vunpack.c.l.b16 %v1002
        %v1226 = vunpack.c.h.b16 %v1002
        %v1227 = vunpack.c.l.b16 %v1003
        %v1228 = vunpack.c.h.b16 %v1003
        %v1229 = vunpack.c.l.b16 %v1004
        %v1230 = vunpack.c.h.b16 %v1004
        %v1231 = vunpack.c.l.b16 %v1005
        %v1232 = vunpack.c.h.b16 %v1005
        %v1233 = vunpack.c.l.b16 %v1006
        %v1234 = vunpack.c.h.b16 %v1006
        %v1235 = vunpack.c.l.b16 %v1007
        %v1236 = vunpack.c.h.b16 %v1007
        %v1237 = vunpack.c.l.b16 %v1008
        %v1238 = vunpack.c.h.b16 %v1008
        %v1239 = vunpack.c.l.b16 %v1009
        %v1240 = vunpack.c.h.b16 %v1009
        %v1241 = vunpack.c.l.b16 %v1010
        %v1242 = vunpack.c.h.b16 %v1010
        %v1243 = vunpack.c.l.b16 %v1011
        %v1244 = vunpack.c.h.b16 %v1011
        %v1245 = vunpack.c.l.b16 %v1012
        %v1246 = vunpack.c.h.b16 %v1012
        %v1247 = vpack.c.b16 %v1127, %v1119
        %v1248 = vpack.c.b16 %v1128, %v1120
        %v1249 = vpack.c.b16 %v1129, %v1121
        %v1250 = vpack.c.b16 %v1130, %v1122
        %v1251 = vpack.c.b16 %v1131, %v1123
        %v1252 = vpack.c.b16 %v1132, %v1124
        %v1253 = vpack.c.b16 %v1133, %v1125
        %v1254 = vpack.c.b16 %v1134, %v1126
        %v1255 = vpack.c.b16 %v1143, %v1135
        %v1256 = vpack.c.b16 %v1144, %v1136
        %v1257 = vpack.c.b16 %v1145, %v1137
        %v1258 = vpack.c.b16 %v1146, %v1138
        %v1259 = vpack.c.b16 %v1147, %v1139
        %v1260 = vpack.c.b16 %v1148, %v1140
        %v1261 = vpack.c.b16 %v1149, %v1141
        %v1262 = vpack.c.b16 %v1150, %v1142
        %v1263 = vpack.c.b16 %v1159, %v1151
        %v1264 = vpack.c.b16 %v1160, %v1152
        %v1265 = vpack.c.b16 %v1161, %v1153
        %v1266 = vpack.c.b16 %v1162, %v1154
        %v1267 = vpack.c.b16 %v1163, %v1155
        %v1268 = vpack.c.b16 %v1164, %v1156
        %v1269 = vpack.c.b16 %v1165, %v1157
        %v1270 = vpack.c.b16 %v1166, %v1158
        %v1271 = vpack.c.b16 %v1175, %v1167
        %v1272 = vpack.c.b16 %v1176, %v1168
        %v1273 = vpack.c.b16 %v1177, %v1169
        %v1274 = vpack.c.b16 %v1178, %v1170
        %v1275 = vpack.c.b16 %v1179, %v1171
        %v1276 = vpack.c.b16 %v1180, %v1172
        %v1277 = vpack.c.b16 %v1181, %v1173
        %v1278 = vpack.c.b16 %v1182, %v1174
        %v1279 = vpack.c.b16 %v1191, %v1183
        %v1280 = vpack.c.b16 %v1192, %v1184
        %v1281 = vpack.c.b16 %v1193, %v1185
        %v1282 = vpack.c.b16 %v1194, %v1186
        %v1283 = vpack.c.b16 %v1195, %v1187
        %v1284 = vpack.c.b16 %v1196, %v1188
        %v1285 = vpack.c.b16 %v1197, %v1189
        %v1286 = vpack.c.b16 %v1198, %v1190
        %v1287 = vpack.c.b16 %v1207, %v1199
        %v1288 = vpack.c.b16 %v1208, %v1200
        %v1289 = vpack.c.b16 %v1209, %v1201
        %v1290 = vpack.c.b16 %v1210, %v1202
        %v1291 = vpack.c.b16 %v1211, %v1203
        %v1292 = vpack.c.b16 %v1212, %v1204
        %v1293 = vpack.c.b16 %v1213, %v1205
        %v1294 = vpack.c.b16 %v1214, %v1206
        %v1295 = vpack.c.b16 %v1223, %v1215
        %v1296 = vpack.c.b16 %v1224, %v1216
        %v1297 = vpack.c.b16 %v1225, %v1217
        %v1298 = vpack.c.b16 %v1226, %v1218
        %v1299 = vpack.c.b16 %v1227, %v1219
        %v1300 = vpack.c.b16 %v1228, %v1220
        %v1301 = vpack.c.b16 %v1229, %v1221
        %v1302 = vpack.c.b16 %v1230, %v1222
        %v1303 = vpack.c.b16 %v1239, %v1231
        %v1304 = vpack.c.b16 %v1240, %v1232
        %v1305 = vpack.c.b16 %v1241, %v1233
        %v1306 = vpack.c.b16 %v1242, %v1234
        %v1307 = vpack.c.b16 %v1243, %v1235
        %v1308 = vpack.c.b16 %v1244, %v1236
        %v1309 = vpack.c.b16 %v1245, %v1237
        %v1310 = vpack.c.b16 %v1246, %v1238
        %1375 = vmatprep.subr.bf16.mxu0 %v1304
        %1376 = vmatpush1.bf16.msra.mxu0 %v1303
        %1377 = vmatprep.subr.bf16.mxu0 %v1296
        %1378 = vmatpush1.bf16.msra.mxu0 %v1295
        %1379 = vmatprep.subr.bf16.mxu0 %v1288
        %1380 = vmatpush1.bf16.msra.mxu0 %v1287
        %1381 = vmatprep.subr.bf16.mxu0 %v1280
        %1382 = vmatpush1.bf16.msra.mxu0 %v1279
        %1383 = vmatprep.subr.bf16.mxu0 %v1272
        %1384 = vmatpush1.bf16.msra.mxu0 %v1271
        %1385 = vmatprep.subr.bf16.mxu0 %v1264
        %1386 = vmatpush1.bf16.msra.mxu0 %v1263
        %1387 = vmatprep.subr.bf16.mxu0 %v1256
        %1388 = vmatpush1.bf16.msra.mxu0 %v1255
        %1389 = vmatprep.subr.bf16.mxu0 %v1248
        %1390 = vmatpush1.bf16.msra.mxu0 %v1247
        %1391 = vmatprep.subr.bf16.mxu0 0
        %1392 = vmatpush2.bf16.msra.mxu0 0
        %1393 = vmatprep.subr.bf16.mxu0 0
        %1394 = vmatpush2.bf16.msra.mxu0 0
        %1395 = vmatprep.subr.bf16.mxu0 0
        %1396 = vmatpush2.bf16.msra.mxu0 0
        %1397 = vmatprep.subr.bf16.mxu0 0
        %1398 = vmatpush2.bf16.msra.mxu0 0
        %1399 = vmatprep.subr.bf16.mxu0 0
        %1400 = vmatpush2.bf16.msra.mxu0 0
        %1401 = vmatprep.subr.bf16.mxu0 0
        %1402 = vmatpush2.bf16.msra.mxu0 0
        %1403 = vmatprep.subr.bf16.mxu0 0
        %1404 = vmatpush2.bf16.msra.mxu0 0
        %1405 = vmatprep.subr.bf16.mxu0 0
        %1406 = vmatpush2.bf16.msra.mxu0 0
        %1407 = vmatprep.mubr.bf16.mxu0 0
        %1408 = vmatmul.mubr.bf16.gmra.mxu0 %v948
        %v1409 = vpop.f32.mrf.mxu0
        %v1410 = vadd.f32 %v1018, %v1409
        %v1411 = vpop.f32.mrf.mxu0
        %v1412 = vadd.f32 %v1022, %v1411
        %v1413 = vpop.f32.mrf.mxu0
        %v1414 = vadd.f32 %v1018, %v1413
        %v1415 = vpop.f32.mrf.mxu0
        %v1416 = vadd.f32 %v1022, %v1415
        %1417 = vdwg.mxu0
        %1418 = vmatprep.subr.bf16.mxu0 %v1306
        %1419 = vmatpush1.bf16.msra.mxu0 %v1305
        %1420 = vmatprep.subr.bf16.mxu0 %v1298
        %1421 = vmatpush1.bf16.msra.mxu0 %v1297
        %1422 = vmatprep.subr.bf16.mxu0 %v1290
        %1423 = vmatpush1.bf16.msra.mxu0 %v1289
        %1424 = vmatprep.subr.bf16.mxu0 %v1282
        %1425 = vmatpush1.bf16.msra.mxu0 %v1281
        %1426 = vmatprep.subr.bf16.mxu0 %v1274
        %1427 = vmatpush1.bf16.msra.mxu0 %v1273
        %1428 = vmatprep.subr.bf16.mxu0 %v1266
        %1429 = vmatpush1.bf16.msra.mxu0 %v1265
        %1430 = vmatprep.subr.bf16.mxu0 %v1258
        %1431 = vmatpush1.bf16.msra.mxu0 %v1257
        %1432 = vmatprep.subr.bf16.mxu0 %v1250
        %1433 = vmatpush1.bf16.msra.mxu0 %v1249
        %1434 = vmatprep.subr.bf16.mxu0 0
        %1435 = vmatpush2.bf16.msra.mxu0 0
        %1436 = vmatprep.subr.bf16.mxu0 0
        %1437 = vmatpush2.bf16.msra.mxu0 0
        %1438 = vmatprep.subr.bf16.mxu0 0
        %1439 = vmatpush2.bf16.msra.mxu0 0
        %1440 = vmatprep.subr.bf16.mxu0 0
        %1441 = vmatpush2.bf16.msra.mxu0 0
        %1442 = vmatprep.subr.bf16.mxu0 0
        %1443 = vmatpush2.bf16.msra.mxu0 0
        %1444 = vmatprep.subr.bf16.mxu0 0
        %1445 = vmatpush2.bf16.msra.mxu0 0
        %1446 = vmatprep.subr.bf16.mxu0 0
        %1447 = vmatpush2.bf16.msra.mxu0 0
        %1448 = vmatprep.subr.bf16.mxu0 0
        %1449 = vmatpush2.bf16.msra.mxu0 0
        %1450 = vmatprep.mubr.bf16.mxu0 0
        %1451 = vmatmul.mubr.bf16.gmra.mxu0 %v948
        %v1452 = vpop.f32.mrf.mxu0
        %v1453 = vadd.f32 %v1026, %v1452
        %v1454 = vpop.f32.mrf.mxu0
        %v1455 = vadd.f32 %v1030, %v1454
        %v1456 = vpop.f32.mrf.mxu0
        %v1457 = vadd.f32 %v1026, %v1456
        %v1458 = vpop.f32.mrf.mxu0
        %v1459 = vadd.f32 %v1030, %v1458
        %1460 = vdwg.mxu0
        %1461 = vmatprep.subr.bf16.mxu0 %v1308
        %1462 = vmatpush1.bf16.msra.mxu0 %v1307
        %1463 = vmatprep.subr.bf16.mxu0 %v1300
        %1464 = vmatpush1.bf16.msra.mxu0 %v1299
        %1465 = vmatprep.subr.bf16.mxu0 %v1292
        %1466 = vmatpush1.bf16.msra.mxu0 %v1291
        %1467 = vmatprep.subr.bf16.mxu0 %v1284
        %1468 = vmatpush1.bf16.msra.mxu0 %v1283
        %1469 = vmatprep.subr.bf16.mxu0 %v1276
        %1470 = vmatpush1.bf16.msra.mxu0 %v1275
        %1471 = vmatprep.subr.bf16.mxu0 %v1268
        %1472 = vmatpush1.bf16.msra.mxu0 %v1267
        %1473 = vmatprep.subr.bf16.mxu0 %v1260
        %1474 = vmatpush1.bf16.msra.mxu0 %v1259
        %1475 = vmatprep.subr.bf16.mxu0 %v1252
        %1476 = vmatpush1.bf16.msra.mxu0 %v1251
        %1477 = vmatprep.subr.bf16.mxu0 0
        %1478 = vmatpush2.bf16.msra.mxu0 0
        %1479 = vmatprep.subr.bf16.mxu0 0
        %1480 = vmatpush2.bf16.msra.mxu0 0
        %1481 = vmatprep.subr.bf16.mxu0 0
        %1482 = vmatpush2.bf16.msra.mxu0 0
        %1483 = vmatprep.subr.bf16.mxu0 0
        %1484 = vmatpush2.bf16.msra.mxu0 0
        %1485 = vmatprep.subr.bf16.mxu0 0
        %1486 = vmatpush2.bf16.msra.mxu0 0
        %1487 = vmatprep.subr.bf16.mxu0 0
        %1488 = vmatpush2.bf16.msra.mxu0 0
        %1489 = vmatprep.subr.bf16.mxu0 0
        %1490 = vmatpush2.bf16.msra.mxu0 0
        %1491 = vmatprep.subr.bf16.mxu0 0
        %1492 = vmatpush2.bf16.msra.mxu0 0
        %1493 = vmatprep.mubr.bf16.mxu0 0
        %1494 = vmatmul.mubr.bf16.gmra.mxu0 %v948
        %v1495 = vpop.f32.mrf.mxu0
        %v1496 = vadd.f32 %v1034, %v1495
        %v1497 = vpop.f32.mrf.mxu0
        %v1498 = vadd.f32 %v1038, %v1497
        %v1499 = vpop.f32.mrf.mxu0
        %v1500 = vadd.f32 %v1034, %v1499
        %v1501 = vpop.f32.mrf.mxu0
        %v1502 = vadd.f32 %v1038, %v1501
        %1503 = vdwg.mxu0
        %1504 = vmatprep.subr.bf16.mxu0 %v1310
        %1505 = vmatpush1.bf16.msra.mxu0 %v1309
        %1506 = vmatprep.subr.bf16.mxu0 %v1302
        %1507 = vmatpush1.bf16.msra.mxu0 %v1301
        %1508 = vmatprep.subr.bf16.mxu0 %v1294
        %1509 = vmatpush1.bf16.msra.mxu0 %v1293
        %1510 = vmatprep.subr.bf16.mxu0 %v1286
        %1511 = vmatpush1.bf16.msra.mxu0 %v1285
        %1512 = vmatprep.subr.bf16.mxu0 %v1278
        %1513 = vmatpush1.bf16.msra.mxu0 %v1277
        %1514 = vmatprep.subr.bf16.mxu0 %v1270
        %1515 = vmatpush1.bf16.msra.mxu0 %v1269
        %1516 = vmatprep.subr.bf16.mxu0 %v1262
        %1517 = vmatpush1.bf16.msra.mxu0 %v1261
        %1518 = vmatprep.subr.bf16.mxu0 %v1254
        %1519 = vmatpush1.bf16.msra.mxu0 %v1253
        %1520 = vmatprep.subr.bf16.mxu0 0
        %1521 = vmatpush2.bf16.msra.mxu0 0
        %1522 = vmatprep.subr.bf16.mxu0 0
        %1523 = vmatpush2.bf16.msra.mxu0 0
        %1524 = vmatprep.subr.bf16.mxu0 0
        %1525 = vmatpush2.bf16.msra.mxu0 0
        %1526 = vmatprep.subr.bf16.mxu0 0
        %1527 = vmatpush2.bf16.msra.mxu0 0
        %1528 = vmatprep.subr.bf16.mxu0 0
        %1529 = vmatpush2.bf16.msra.mxu0 0
        %1530 = vmatprep.subr.bf16.mxu0 0
        %1531 = vmatpush2.bf16.msra.mxu0 0
        %1532 = vmatprep.subr.bf16.mxu0 0
        %1533 = vmatpush2.bf16.msra.mxu0 0
        %1534 = vmatprep.subr.bf16.mxu0 0
        %1535 = vmatpush2.bf16.msra.mxu0 0
        %1536 = vmatprep.mubr.bf16.mxu0 0
        %1537 = vmatmul.mubr.bf16.gmra.mxu0 %v948
        %v1538 = vpop.f32.mrf.mxu0
        %v1539 = vadd.f32 %v1042, %v1538
        %v1540 = vpop.f32.mrf.mxu0
        %v1541 = vadd.f32 %v1046, %v1540
        %v1542 = vpop.f32.mrf.mxu0
        %v1543 = vadd.f32 %v1042, %v1542
        %v1544 = vpop.f32.mrf.mxu0
        %v1545 = vadd.f32 %v1046, %v1544
        %1546 = vdwg.mxu0
        %v1547 = vmul.f32 %v1410, 0.2
        %v1548 = vmul.f32 %v1412, 0.2
        %v1549 = vmul.f32 %v1453, 0.2
        %v1550 = vmul.f32 %v1455, 0.2
        %v1551 = vmul.f32 %v1496, 0.2
        %v1552 = vmul.f32 %v1498, 0.2
        %v1553 = vmul.f32 %v1539, 0.2
        %v1554 = vmul.f32 %v1541, 0.2
        %v1555 = vmul.f32 %v1414, 0.2
        %v1556 = vmul.f32 %v1416, 0.2
        %v1557 = vmul.f32 %v1457, 0.2
        %v1558 = vmul.f32 %v1459, 0.2
        %v1559 = vmul.f32 %v1500, 0.2
        %v1560 = vmul.f32 %v1502, 0.2
        %v1561 = vmul.f32 %v1543, 0.2
        %v1562 = vmul.f32 %v1545, 0.2
        %v1563 = vmax.f32 %v1410, %v1547
        %v1564 = vmax.f32 %v1412, %v1548
        %v1565 = vmax.f32 %v1453, %v1549
        %v1566 = vmax.f32 %v1455, %v1550
        %v1567 = vmax.f32 %v1496, %v1551
        %v1568 = vmax.f32 %v1498, %v1552
        %v1569 = vmax.f32 %v1539, %v1553
        %v1570 = vmax.f32 %v1541, %v1554
        %v1571 = vmax.f32 %v1414, %v1555
        %v1572 = vmax.f32 %v1416, %v1556
        %v1573 = vmax.f32 %v1457, %v1557
        %v1574 = vmax.f32 %v1459, %v1558
        %v1575 = vmax.f32 %v1500, %v1559
        %v1576 = vmax.f32 %v1502, %v1560
        %v1577 = vmax.f32 %v1543, %v1561
        %v1578 = vmax.f32 %v1545, %v1562
        %v1579 = vmax.f32 %v1563, %v1571
        %v1580 = vrot.slane %v1579, 4
        %v1581 = vmax.f32 %v1579, %v1580
        %v1582 = vrot.slane %v1581, 2
        %v1583 = vmax.f32 %v1581, %v1582
        %v1584 = vrot.slane %v1583, 1
        %v1585 = vmax.f32 %v1583, %v1584
        %v1586 = vmax.f32 %v1564, %v1572
        %v1587 = vrot.slane %v1586, 4
        %v1588 = vmax.f32 %v1586, %v1587
        %v1589 = vrot.slane %v1588, 2
        %v1590 = vmax.f32 %v1588, %v1589
        %v1591 = vrot.slane %v1590, 1
        %v1592 = vmax.f32 %v1590, %v1591
        %v1593 = vmax.f32 %v1565, %v1573
        %v1594 = vrot.slane %v1593, 4
        %v1595 = vmax.f32 %v1593, %v1594
        %v1596 = vrot.slane %v1595, 2
        %v1597 = vmax.f32 %v1595, %v1596
        %v1598 = vrot.slane %v1597, 1
        %v1599 = vmax.f32 %v1597, %v1598
        %v1600 = vmax.f32 %v1566, %v1574
        %v1601 = vrot.slane %v1600, 4
        %v1602 = vmax.f32 %v1600, %v1601
        %v1603 = vrot.slane %v1602, 2
        %v1604 = vmax.f32 %v1602, %v1603
        %v1605 = vrot.slane %v1604, 1
        %v1606 = vmax.f32 %v1604, %v1605
        %v1607 = vmax.f32 %v1567, %v1575
        %v1608 = vrot.slane %v1607, 4
        %v1609 = vmax.f32 %v1607, %v1608
        %v1610 = vrot.slane %v1609, 2
        %v1611 = vmax.f32 %v1609, %v1610
        %v1612 = vrot.slane %v1611, 1
        %v1613 = vmax.f32 %v1611, %v1612
        %v1614 = vmax.f32 %v1568, %v1576
        %v1615 = vrot.slane %v1614, 4
        %v1616 = vmax.f32 %v1614, %v1615
        %v1617 = vrot.slane %v1616, 2
        %v1618 = vmax.f32 %v1616, %v1617
        %v1619 = vrot.slane %v1618, 1
        %v1620 = vmax.f32 %v1618, %v1619
        %v1621 = vmax.f32 %v1569, %v1577
        %v1622 = vrot.slane %v1621, 4
        %v1623 = vmax.f32 %v1621, %v1622
        %v1624 = vrot.slane %v1623, 2
        %v1625 = vmax.f32 %v1623, %v1624
        %v1626 = vrot.slane %v1625, 1
        %v1627 = vmax.f32 %v1625, %v1626
        %v1628 = vmax.f32 %v1570, %v1578
        %v1629 = vrot.slane %v1628, 4
        %v1630 = vmax.f32 %v1628, %v1629
        %v1631 = vrot.slane %v1630, 2
        %v1632 = vmax.f32 %v1630, %v1631
        %v1633 = vrot.slane %v1632, 1
        %v1634 = vmax.f32 %v1632, %v1633
        %p1635 = scmp.eq.s32.totalorder %s34, 0
        // Predicated region
        $region85: #{tpu_custom_call.1} parent=71 // pred_check
          %p1636 = pneg %p1635
        $region86: #{tpu_custom_call.1} parent=71 // pred_check_branch
          %1638 = sbr.rel (%p1636) target = $region88
        $region87: #{tpu_custom_call.1} parent=71 // pred_region
          %1639 = vst [vmem:[#allocation2] sm:$0xff] -inf
        $region88: #{tpu_custom_call.1} parent=71 // pred_fallthru
          _
        %v1640 = vld [vmem:[#allocation2] sm:$0xff]
        %v1649 = vcombine.low %v1585, %v1592
        %v1650 = vcombine.low %v1599, %v1606
        %v1651 = vcombine.low %v1613, %v1620
        %v1652 = vcombine.low %v1627, %v1634
        %v1654 = vunpack.c.l.s4 1966171168
        %v1655 = vunpack.c.0.s8 %v1654
        %v1656 = vlaneseq
        %v1657 = vshrl.u32 %v1656, 7
        %v1658 = vsub.s32 %v1655, %v1657
        %v1659 = vrot.slane %v1649, %v1658
        %v1661 = vunpack.c.l.s4 1966171168
        %v1662 = vunpack.c.0.s8 %v1661
        %v1663 = vlaneseq
        %v1664 = vshrl.u32 %v1663, 7
        %v1665 = vsub.s32 %v1662, %v1664
        %v1666 = vrot.slane %v1650, %v1665
        %v1668 = vunpack.c.l.s4 1966171168
        %v1669 = vunpack.c.0.s8 %v1668
        %v1670 = vlaneseq
        %v1671 = vshrl.u32 %v1670, 7
        %v1672 = vsub.s32 %v1669, %v1671
        %v1673 = vrot.slane %v1651, %v1672
        %v1675 = vunpack.c.l.s4 1966171168
        %v1676 = vunpack.c.0.s8 %v1675
        %v1677 = vlaneseq
        %v1678 = vshrl.u32 %v1677, 7
        %v1679 = vsub.s32 %v1676, %v1678
        %v1680 = vrot.slane %v1652, %v1679
        %v1681 = vcombine.low %v1659, %v1666
        %v1682 = vcombine.low %v1673, %v1680
        %v1684 = vunpack.c.l.s4 1966171168
        %v1685 = vunpack.c.0.s8 %v1684
        %v1686 = vlaneseq
        %v1687 = vshrl.u32 %v1686, 7
        %v1688 = vsub.s32 %v1685, %v1687
        %v1689 = vrot.slane %v1681, %v1688
        %v1691 = vunpack.c.l.s4 1966171168
        %v1692 = vunpack.c.0.s8 %v1691
        %v1693 = vlaneseq
        %v1694 = vshrl.u32 %v1693, 7
        %v1695 = vsub.s32 %v1692, %v1694
        %v1696 = vrot.slane %v1682, %v1695
        %v1697 = vcombine.low %v1689, %v1696
        %v1699 = vmax.f32 %v1640, %v1697
        %1700 = vst [vmem:[#allocation2] sm:$0xff] %v1699
        // Predicated region
        $region89: #{tpu_custom_call.1} parent=71 // pred_check
          %p1701 = pneg %p1635
        $region90: #{tpu_custom_call.1} parent=71 // pred_check_branch
          %1703 = sbr.rel (%p1701) target = $region92
        $region91: #{tpu_custom_call.1} parent=71 // pred_region
          %v1704 = vld [vmem:[#allocation2] sm:$0xff]
          %v1706 = vlaneseq
          %v1707 = vshrl.u32 %v1706, 7
          %v1708 = vsub.s32 0, %v1707
          %v1709 = vrot.slane %v1704, %v1708
          %v1710 = vlaneseq
          %v1711 = vshrl.u32 %v1710, 7
          %v1712 = vsub.s32 1, %v1711
          %v1713 = vrot.slane %v1704, %v1712
          %v1714 = vlaneseq
          %v1715 = vshrl.u32 %v1714, 7
          %v1716 = vsub.s32 2, %v1715
          %v1717 = vrot.slane %v1704, %v1716
          %v1718 = vlaneseq
          %v1719 = vshrl.u32 %v1718, 7
          %v1720 = vsub.s32 3, %v1719
          %v1721 = vrot.slane %v1704, %v1720
          %v1722 = vlaneseq
          %v1723 = vshrl.u32 %v1722, 7
          %v1724 = vsub.s32 4, %v1723
          %v1725 = vrot.slane %v1704, %v1724
          %v1726 = vlaneseq
          %v1727 = vshrl.u32 %v1726, 7
          %v1728 = vsub.s32 5, %v1727
          %v1729 = vrot.slane %v1704, %v1728
          %v1730 = vlaneseq
          %v1731 = vshrl.u32 %v1730, 7
          %v1732 = vsub.s32 6, %v1731
          %v1733 = vrot.slane %v1704, %v1732
          %v1734 = vlaneseq
          %v1735 = vshrl.u32 %v1734, 7
          %v1736 = vsub.s32 7, %v1735
          %v1737 = vrot.slane %v1704, %v1736
          %v1746 = vpack.c.bf16 %v1709, %v1709
          %v1747 = vpack.c.bf16 %v1713, %v1713
          %v1748 = vpack.c.bf16 %v1717, %v1717
          %v1749 = vpack.c.bf16 %v1721, %v1721
          %v1750 = vpack.c.bf16 %v1725, %v1725
          %v1751 = vpack.c.bf16 %v1729, %v1729
          %v1752 = vpack.c.bf16 %v1733, %v1733
          %v1753 = vpack.c.bf16 %v1737, %v1737
          %v1754 = vld [vmem:[#allocation6] sm:$0xff]
          %v1755 = vld [vmem:[#allocation6 + $0x8] sm:$0xff]
          %v1756 = vld [vmem:[#allocation6 + $0x10] sm:$0xff]
          %v1757 = vld [vmem:[#allocation6 + $0x18] sm:$0xff]
          %v1758 = vld [vmem:[#allocation6 + $0x20] sm:$0xff]
          %v1759 = vld [vmem:[#allocation6 + $0x28] sm:$0xff]
          %v1760 = vld [vmem:[#allocation6 + $0x30] sm:$0xff]
          %v1761 = vld [vmem:[#allocation6 + $0x38] sm:$0xff]
          %v1762 = vld [vmem:[#allocation6 + $0x40] sm:$0xff]
          %v1763 = vld [vmem:[#allocation6 + $0x48] sm:$0xff]
          %v1764 = vld [vmem:[#allocation6 + $0x50] sm:$0xff]
          %v1765 = vld [vmem:[#allocation6 + $0x58] sm:$0xff]
          %v1766 = vld [vmem:[#allocation6 + $0x60] sm:$0xff]
          %v1767 = vld [vmem:[#allocation6 + $0x68] sm:$0xff]
          %v1768 = vld [vmem:[#allocation6 + $0x70] sm:$0xff]
          %v1769 = vld [vmem:[#allocation6 + $0x78] sm:$0xff]
          %v1770 = vld [vmem:[#allocation6 + $0x80] sm:$0xff]
          %v1771 = vld [vmem:[#allocation6 + $0x88] sm:$0xff]
          %v1772 = vld [vmem:[#allocation6 + $0x90] sm:$0xff]
          %v1773 = vld [vmem:[#allocation6 + $0x98] sm:$0xff]
          %v1774 = vld [vmem:[#allocation6 + $0xa0] sm:$0xff]
          %v1775 = vld [vmem:[#allocation6 + $0xa8] sm:$0xff]
          %v1776 = vld [vmem:[#allocation6 + $0xb0] sm:$0xff]
          %v1777 = vld [vmem:[#allocation6 + $0xb8] sm:$0xff]
          %v1778 = vld [vmem:[#allocation6 + $0xc0] sm:$0xff]
          %v1779 = vld [vmem:[#allocation6 + $0xc8] sm:$0xff]
          %v1780 = vld [vmem:[#allocation6 + $0xd0] sm:$0xff]
          %v1781 = vld [vmem:[#allocation6 + $0xd8] sm:$0xff]
          %v1782 = vld [vmem:[#allocation6 + $0xe0] sm:$0xff]
          %v1783 = vld [vmem:[#allocation6 + $0xe8] sm:$0xff]
          %v1784 = vld [vmem:[#allocation6 + $0xf0] sm:$0xff]
          %v1785 = vld [vmem:[#allocation6 + $0xf8] sm:$0xff]
          %v1786 = vld [vmem:[#allocation6 + $0x100] sm:$0xff]
          %v1787 = vld [vmem:[#allocation6 + $0x108] sm:$0xff]
          %v1788 = vld [vmem:[#allocation6 + $0x110] sm:$0xff]
          %v1789 = vld [vmem:[#allocation6 + $0x118] sm:$0xff]
          %v1790 = vld [vmem:[#allocation6 + $0x120] sm:$0xff]
          %v1791 = vld [vmem:[#allocation6 + $0x128] sm:$0xff]
          %v1792 = vld [vmem:[#allocation6 + $0x130] sm:$0xff]
          %v1793 = vld [vmem:[#allocation6 + $0x138] sm:$0xff]
          %v1794 = vld [vmem:[#allocation6 + $0x140] sm:$0xff]
          %v1795 = vld [vmem:[#allocation6 + $0x148] sm:$0xff]
          %v1796 = vld [vmem:[#allocation6 + $0x150] sm:$0xff]
          %v1797 = vld [vmem:[#allocation6 + $0x158] sm:$0xff]
          %v1798 = vld [vmem:[#allocation6 + $0x160] sm:$0xff]
          %v1799 = vld [vmem:[#allocation6 + $0x168] sm:$0xff]
          %v1800 = vld [vmem:[#allocation6 + $0x170] sm:$0xff]
          %v1801 = vld [vmem:[#allocation6 + $0x178] sm:$0xff]
          %v1802 = vld [vmem:[#allocation6 + $0x180] sm:$0xff]
          %v1803 = vld [vmem:[#allocation6 + $0x188] sm:$0xff]
          %v1804 = vld [vmem:[#allocation6 + $0x190] sm:$0xff]
          %v1805 = vld [vmem:[#allocation6 + $0x198] sm:$0xff]
          %v1806 = vld [vmem:[#allocation6 + $0x1a0] sm:$0xff]
          %v1807 = vld [vmem:[#allocation6 + $0x1a8] sm:$0xff]
          %v1808 = vld [vmem:[#allocation6 + $0x1b0] sm:$0xff]
          %v1809 = vld [vmem:[#allocation6 + $0x1b8] sm:$0xff]
          %v1810 = vld [vmem:[#allocation6 + $0x1c0] sm:$0xff]
          %v1811 = vld [vmem:[#allocation6 + $0x1c8] sm:$0xff]
          %v1812 = vld [vmem:[#allocation6 + $0x1d0] sm:$0xff]
          %v1813 = vld [vmem:[#allocation6 + $0x1d8] sm:$0xff]
          %v1814 = vld [vmem:[#allocation6 + $0x1e0] sm:$0xff]
          %v1815 = vld [vmem:[#allocation6 + $0x1e8] sm:$0xff]
          %v1816 = vld [vmem:[#allocation6 + $0x1f0] sm:$0xff]
          %v1817 = vld [vmem:[#allocation6 + $0x1f8] sm:$0xff]
          %v1818 = vld [vmem:[#allocation6 + $0x200] sm:$0xff]
          %v1819 = vld [vmem:[#allocation6 + $0x208] sm:$0xff]
          %v1820 = vld [vmem:[#allocation6 + $0x210] sm:$0xff]
          %v1821 = vld [vmem:[#allocation6 + $0x218] sm:$0xff]
          %v1822 = vld [vmem:[#allocation6 + $0x220] sm:$0xff]
          %v1823 = vld [vmem:[#allocation6 + $0x228] sm:$0xff]
          %v1824 = vld [vmem:[#allocation6 + $0x230] sm:$0xff]
          %v1825 = vld [vmem:[#allocation6 + $0x238] sm:$0xff]
          %v1826 = vld [vmem:[#allocation6 + $0x240] sm:$0xff]
          %v1827 = vld [vmem:[#allocation6 + $0x248] sm:$0xff]
          %v1828 = vld [vmem:[#allocation6 + $0x250] sm:$0xff]
          %v1829 = vld [vmem:[#allocation6 + $0x258] sm:$0xff]
          %v1830 = vld [vmem:[#allocation6 + $0x260] sm:$0xff]
          %v1831 = vld [vmem:[#allocation6 + $0x268] sm:$0xff]
          %v1832 = vld [vmem:[#allocation6 + $0x270] sm:$0xff]
          %v1833 = vld [vmem:[#allocation6 + $0x278] sm:$0xff]
          %v1834 = vld [vmem:[#allocation6 + $0x280] sm:$0xff]
          %v1835 = vld [vmem:[#allocation6 + $0x288] sm:$0xff]
          %v1836 = vld [vmem:[#allocation6 + $0x290] sm:$0xff]
          %v1837 = vld [vmem:[#allocation6 + $0x298] sm:$0xff]
          %v1838 = vld [vmem:[#allocation6 + $0x2a0] sm:$0xff]
          %v1839 = vld [vmem:[#allocation6 + $0x2a8] sm:$0xff]
          %v1840 = vld [vmem:[#allocation6 + $0x2b0] sm:$0xff]
          %v1841 = vld [vmem:[#allocation6 + $0x2b8] sm:$0xff]
          %v1842 = vld [vmem:[#allocation6 + $0x2c0] sm:$0xff]
          %v1843 = vld [vmem:[#allocation6 + $0x2c8] sm:$0xff]
          %v1844 = vld [vmem:[#allocation6 + $0x2d0] sm:$0xff]
          %v1845 = vld [vmem:[#allocation6 + $0x2d8] sm:$0xff]
          %v1846 = vld [vmem:[#allocation6 + $0x2e0] sm:$0xff]
          %v1847 = vld [vmem:[#allocation6 + $0x2e8] sm:$0xff]
          %v1848 = vld [vmem:[#allocation6 + $0x2f0] sm:$0xff]
          %v1849 = vld [vmem:[#allocation6 + $0x2f8] sm:$0xff]
          %v1850 = vld [vmem:[#allocation6 + $0x300] sm:$0xff]
          %v1851 = vld [vmem:[#allocation6 + $0x308] sm:$0xff]
          %v1852 = vld [vmem:[#allocation6 + $0x310] sm:$0xff]
          %v1853 = vld [vmem:[#allocation6 + $0x318] sm:$0xff]
          %v1854 = vld [vmem:[#allocation6 + $0x320] sm:$0xff]
          %v1855 = vld [vmem:[#allocation6 + $0x328] sm:$0xff]
          %v1856 = vld [vmem:[#allocation6 + $0x330] sm:$0xff]
          %v1857 = vld [vmem:[#allocation6 + $0x338] sm:$0xff]
          %v1858 = vld [vmem:[#allocation6 + $0x340] sm:$0xff]
          %v1859 = vld [vmem:[#allocation6 + $0x348] sm:$0xff]
          %v1860 = vld [vmem:[#allocation6 + $0x350] sm:$0xff]
          %v1861 = vld [vmem:[#allocation6 + $0x358] sm:$0xff]
          %v1862 = vld [vmem:[#allocation6 + $0x360] sm:$0xff]
          %v1863 = vld [vmem:[#allocation6 + $0x368] sm:$0xff]
          %v1864 = vld [vmem:[#allocation6 + $0x370] sm:$0xff]
          %v1865 = vld [vmem:[#allocation6 + $0x378] sm:$0xff]
          %v1866 = vld [vmem:[#allocation6 + $0x380] sm:$0xff]
          %v1867 = vld [vmem:[#allocation6 + $0x388] sm:$0xff]
          %v1868 = vld [vmem:[#allocation6 + $0x390] sm:$0xff]
          %v1869 = vld [vmem:[#allocation6 + $0x398] sm:$0xff]
          %v1870 = vld [vmem:[#allocation6 + $0x3a0] sm:$0xff]
          %v1871 = vld [vmem:[#allocation6 + $0x3a8] sm:$0xff]
          %v1872 = vld [vmem:[#allocation6 + $0x3b0] sm:$0xff]
          %v1873 = vld [vmem:[#allocation6 + $0x3b8] sm:$0xff]
          %v1874 = vld [vmem:[#allocation6 + $0x3c0] sm:$0xff]
          %v1875 = vld [vmem:[#allocation6 + $0x3c8] sm:$0xff]
          %v1876 = vld [vmem:[#allocation6 + $0x3d0] sm:$0xff]
          %v1877 = vld [vmem:[#allocation6 + $0x3d8] sm:$0xff]
          %v1878 = vld [vmem:[#allocation6 + $0x3e0] sm:$0xff]
          %v1879 = vld [vmem:[#allocation6 + $0x3e8] sm:$0xff]
          %v1880 = vld [vmem:[#allocation6 + $0x3f0] sm:$0xff]
          %v1881 = vld [vmem:[#allocation6 + $0x3f8] sm:$0xff]
          %v1882 = vld [vmem:[#allocation6 + $0x400] sm:$0xff]
          %v1883 = vld [vmem:[#allocation6 + $0x408] sm:$0xff]
          %v1884 = vld [vmem:[#allocation6 + $0x410] sm:$0xff]
          %v1885 = vld [vmem:[#allocation6 + $0x418] sm:$0xff]
          %v1886 = vld [vmem:[#allocation6 + $0x420] sm:$0xff]
          %v1887 = vld [vmem:[#allocation6 + $0x428] sm:$0xff]
          %v1888 = vld [vmem:[#allocation6 + $0x430] sm:$0xff]
          %v1889 = vld [vmem:[#allocation6 + $0x438] sm:$0xff]
          %v1890 = vld [vmem:[#allocation6 + $0x440] sm:$0xff]
          %v1891 = vld [vmem:[#allocation6 + $0x448] sm:$0xff]
          %v1892 = vld [vmem:[#allocation6 + $0x450] sm:$0xff]
          %v1893 = vld [vmem:[#allocation6 + $0x458] sm:$0xff]
          %v1894 = vld [vmem:[#allocation6 + $0x460] sm:$0xff]
          %v1895 = vld [vmem:[#allocation6 + $0x468] sm:$0xff]
          %v1896 = vld [vmem:[#allocation6 + $0x470] sm:$0xff]
          %v1897 = vld [vmem:[#allocation6 + $0x478] sm:$0xff]
          %v1898 = vld [vmem:[#allocation6 + $0x480] sm:$0xff]
          %v1899 = vld [vmem:[#allocation6 + $0x488] sm:$0xff]
          %v1900 = vld [vmem:[#allocation6 + $0x490] sm:$0xff]
          %v1901 = vld [vmem:[#allocation6 + $0x498] sm:$0xff]
          %v1902 = vld [vmem:[#allocation6 + $0x4a0] sm:$0xff]
          %v1903 = vld [vmem:[#allocation6 + $0x4a8] sm:$0xff]
          %v1904 = vld [vmem:[#allocation6 + $0x4b0] sm:$0xff]
          %v1905 = vld [vmem:[#allocation6 + $0x4b8] sm:$0xff]
          %v1906 = vld [vmem:[#allocation6 + $0x4c0] sm:$0xff]
          %v1907 = vld [vmem:[#allocation6 + $0x4c8] sm:$0xff]
          %v1908 = vld [vmem:[#allocation6 + $0x4d0] sm:$0xff]
          %v1909 = vld [vmem:[#allocation6 + $0x4d8] sm:$0xff]
          %v1910 = vld [vmem:[#allocation6 + $0x4e0] sm:$0xff]
          %v1911 = vld [vmem:[#allocation6 + $0x4e8] sm:$0xff]
          %v1912 = vld [vmem:[#allocation6 + $0x4f0] sm:$0xff]
          %v1913 = vld [vmem:[#allocation6 + $0x4f8] sm:$0xff]
          %v1914 = vld [vmem:[#allocation6 + $0x500] sm:$0xff]
          %v1915 = vld [vmem:[#allocation6 + $0x508] sm:$0xff]
          %v1916 = vld [vmem:[#allocation6 + $0x510] sm:$0xff]
          %v1917 = vld [vmem:[#allocation6 + $0x518] sm:$0xff]
          %v1918 = vld [vmem:[#allocation6 + $0x520] sm:$0xff]
          %v1919 = vld [vmem:[#allocation6 + $0x528] sm:$0xff]
          %v1920 = vld [vmem:[#allocation6 + $0x530] sm:$0xff]
          %v1921 = vld [vmem:[#allocation6 + $0x538] sm:$0xff]
          %v1922 = vld [vmem:[#allocation6 + $0x540] sm:$0xff]
          %v1923 = vld [vmem:[#allocation6 + $0x548] sm:$0xff]
          %v1924 = vld [vmem:[#allocation6 + $0x550] sm:$0xff]
          %v1925 = vld [vmem:[#allocation6 + $0x558] sm:$0xff]
          %v1926 = vld [vmem:[#allocation6 + $0x560] sm:$0xff]
          %v1927 = vld [vmem:[#allocation6 + $0x568] sm:$0xff]
          %v1928 = vld [vmem:[#allocation6 + $0x570] sm:$0xff]
          %v1929 = vld [vmem:[#allocation6 + $0x578] sm:$0xff]
          %v1930 = vld [vmem:[#allocation6 + $0x580] sm:$0xff]
          %v1931 = vld [vmem:[#allocation6 + $0x588] sm:$0xff]
          %v1932 = vld [vmem:[#allocation6 + $0x590] sm:$0xff]
          %v1933 = vld [vmem:[#allocation6 + $0x598] sm:$0xff]
          %v1934 = vld [vmem:[#allocation6 + $0x5a0] sm:$0xff]
          %v1935 = vld [vmem:[#allocation6 + $0x5a8] sm:$0xff]
          %v1936 = vld [vmem:[#allocation6 + $0x5b0] sm:$0xff]
          %v1937 = vld [vmem:[#allocation6 + $0x5b8] sm:$0xff]
          %v1938 = vld [vmem:[#allocation6 + $0x5c0] sm:$0xff]
          %v1939 = vld [vmem:[#allocation6 + $0x5c8] sm:$0xff]
          %v1940 = vld [vmem:[#allocation6 + $0x5d0] sm:$0xff]
          %v1941 = vld [vmem:[#allocation6 + $0x5d8] sm:$0xff]
          %v1942 = vld [vmem:[#allocation6 + $0x5e0] sm:$0xff]
          %v1943 = vld [vmem:[#allocation6 + $0x5e8] sm:$0xff]
          %v1944 = vld [vmem:[#allocation6 + $0x5f0] sm:$0xff]
          %v1945 = vld [vmem:[#allocation6 + $0x5f8] sm:$0xff]
          %v1946 = vld [vmem:[#allocation6 + $0x600] sm:$0xff]
          %v1947 = vld [vmem:[#allocation6 + $0x608] sm:$0xff]
          %v1948 = vld [vmem:[#allocation6 + $0x610] sm:$0xff]
          %v1949 = vld [vmem:[#allocation6 + $0x618] sm:$0xff]
          %v1950 = vld [vmem:[#allocation6 + $0x620] sm:$0xff]
          %v1951 = vld [vmem:[#allocation6 + $0x628] sm:$0xff]
          %v1952 = vld [vmem:[#allocation6 + $0x630] sm:$0xff]
          %v1953 = vld [vmem:[#allocation6 + $0x638] sm:$0xff]
          %v1954 = vld [vmem:[#allocation6 + $0x640] sm:$0xff]
          %v1955 = vld [vmem:[#allocation6 + $0x648] sm:$0xff]
          %v1956 = vld [vmem:[#allocation6 + $0x650] sm:$0xff]
          %v1957 = vld [vmem:[#allocation6 + $0x658] sm:$0xff]
          %v1958 = vld [vmem:[#allocation6 + $0x660] sm:$0xff]
          %v1959 = vld [vmem:[#allocation6 + $0x668] sm:$0xff]
          %v1960 = vld [vmem:[#allocation6 + $0x670] sm:$0xff]
          %v1961 = vld [vmem:[#allocation6 + $0x678] sm:$0xff]
          %v1962 = vld [vmem:[#allocation6 + $0x680] sm:$0xff]
          %v1963 = vld [vmem:[#allocation6 + $0x688] sm:$0xff]
          %v1964 = vld [vmem:[#allocation6 + $0x690] sm:$0xff]
          %v1965 = vld [vmem:[#allocation6 + $0x698] sm:$0xff]
          %v1966 = vld [vmem:[#allocation6 + $0x6a0] sm:$0xff]
          %v1967 = vld [vmem:[#allocation6 + $0x6a8] sm:$0xff]
          %v1968 = vld [vmem:[#allocation6 + $0x6b0] sm:$0xff]
          %v1969 = vld [vmem:[#allocation6 + $0x6b8] sm:$0xff]
          %v1970 = vld [vmem:[#allocation6 + $0x6c0] sm:$0xff]
          %v1971 = vld [vmem:[#allocation6 + $0x6c8] sm:$0xff]
          %v1972 = vld [vmem:[#allocation6 + $0x6d0] sm:$0xff]
          %v1973 = vld [vmem:[#allocation6 + $0x6d8] sm:$0xff]
          %v1974 = vld [vmem:[#allocation6 + $0x6e0] sm:$0xff]
          %v1975 = vld [vmem:[#allocation6 + $0x6e8] sm:$0xff]
          %v1976 = vld [vmem:[#allocation6 + $0x6f0] sm:$0xff]
          %v1977 = vld [vmem:[#allocation6 + $0x6f8] sm:$0xff]
          %v1978 = vld [vmem:[#allocation6 + $0x700] sm:$0xff]
          %v1979 = vld [vmem:[#allocation6 + $0x708] sm:$0xff]
          %v1980 = vld [vmem:[#allocation6 + $0x710] sm:$0xff]
          %v1981 = vld [vmem:[#allocation6 + $0x718] sm:$0xff]
          %v1982 = vld [vmem:[#allocation6 + $0x720] sm:$0xff]
          %v1983 = vld [vmem:[#allocation6 + $0x728] sm:$0xff]
          %v1984 = vld [vmem:[#allocation6 + $0x730] sm:$0xff]
          %v1985 = vld [vmem:[#allocation6 + $0x738] sm:$0xff]
          %v1986 = vld [vmem:[#allocation6 + $0x740] sm:$0xff]
          %v1987 = vld [vmem:[#allocation6 + $0x748] sm:$0xff]
          %v1988 = vld [vmem:[#allocation6 + $0x750] sm:$0xff]
          %v1989 = vld [vmem:[#allocation6 + $0x758] sm:$0xff]
          %v1990 = vld [vmem:[#allocation6 + $0x760] sm:$0xff]
          %v1991 = vld [vmem:[#allocation6 + $0x768] sm:$0xff]
          %v1992 = vld [vmem:[#allocation6 + $0x770] sm:$0xff]
          %v1993 = vld [vmem:[#allocation6 + $0x778] sm:$0xff]
          %v1994 = vld [vmem:[#allocation6 + $0x780] sm:$0xff]
          %v1995 = vld [vmem:[#allocation6 + $0x788] sm:$0xff]
          %v1996 = vld [vmem:[#allocation6 + $0x790] sm:$0xff]
          %v1997 = vld [vmem:[#allocation6 + $0x798] sm:$0xff]
          %v1998 = vld [vmem:[#allocation6 + $0x7a0] sm:$0xff]
          %v1999 = vld [vmem:[#allocation6 + $0x7a8] sm:$0xff]
          %v2000 = vld [vmem:[#allocation6 + $0x7b0] sm:$0xff]
          %v2001 = vld [vmem:[#allocation6 + $0x7b8] sm:$0xff]
          %v2002 = vld [vmem:[#allocation6 + $0x7c0] sm:$0xff]
          %v2003 = vld [vmem:[#allocation6 + $0x7c8] sm:$0xff]
          %v2004 = vld [vmem:[#allocation6 + $0x7d0] sm:$0xff]
          %v2005 = vld [vmem:[#allocation6 + $0x7d8] sm:$0xff]
          %v2006 = vld [vmem:[#allocation6 + $0x7e0] sm:$0xff]
          %v2007 = vld [vmem:[#allocation6 + $0x7e8] sm:$0xff]
          %v2008 = vld [vmem:[#allocation6 + $0x7f0] sm:$0xff]
          %v2009 = vld [vmem:[#allocation6 + $0x7f8] sm:$0xff]
          %v2010 = vld [vmem:[%s8] sm:$0xf]
          %v2267 = vunpack.c.l.b16 %v1754
          %v2268 = vunpack.c.h.b16 %v1754
          %v2269 = vunpack.c.l.b16 %v1755
          %v2270 = vunpack.c.h.b16 %v1755
          %v2271 = vunpack.c.l.b16 %v1756
          %v2272 = vunpack.c.h.b16 %v1756
          %v2273 = vunpack.c.l.b16 %v1757
          %v2274 = vunpack.c.h.b16 %v1757
          %v2275 = vunpack.c.l.b16 %v1758
          %v2276 = vunpack.c.h.b16 %v1758
          %v2277 = vunpack.c.l.b16 %v1759
          %v2278 = vunpack.c.h.b16 %v1759
          %v2279 = vunpack.c.l.b16 %v1760
          %v2280 = vunpack.c.h.b16 %v1760
          %v2281 = vunpack.c.l.b16 %v1761
          %v2282 = vunpack.c.h.b16 %v1761
          %v2283 = vunpack.c.l.b16 %v1762
          %v2284 = vunpack.c.h.b16 %v1762
          %v2285 = vunpack.c.l.b16 %v1763
          %v2286 = vunpack.c.h.b16 %v1763
          %v2287 = vunpack.c.l.b16 %v1764
          %v2288 = vunpack.c.h.b16 %v1764
          %v2289 = vunpack.c.l.b16 %v1765
          %v2290 = vunpack.c.h.b16 %v1765
          %v2291 = vunpack.c.l.b16 %v1766
          %v2292 = vunpack.c.h.b16 %v1766
          %v2293 = vunpack.c.l.b16 %v1767
          %v2294 = vunpack.c.h.b16 %v1767
          %v2295 = vunpack.c.l.b16 %v1768
          %v2296 = vunpack.c.h.b16 %v1768
          %v2297 = vunpack.c.l.b16 %v1769
          %v2298 = vunpack.c.h.b16 %v1769
          %v2299 = vunpack.c.l.b16 %v1770
          %v2300 = vunpack.c.h.b16 %v1770
          %v2301 = vunpack.c.l.b16 %v1771
          %v2302 = vunpack.c.h.b16 %v1771
          %v2303 = vunpack.c.l.b16 %v1772
          %v2304 = vunpack.c.h.b16 %v1772
          %v2305 = vunpack.c.l.b16 %v1773
          %v2306 = vunpack.c.h.b16 %v1773
          %v2307 = vunpack.c.l.b16 %v1774
          %v2308 = vunpack.c.h.b16 %v1774
          %v2309 = vunpack.c.l.b16 %v1775
          %v2310 = vunpack.c.h.b16 %v1775
          %v2311 = vunpack.c.l.b16 %v1776
          %v2312 = vunpack.c.h.b16 %v1776
          %v2313 = vunpack.c.l.b16 %v1777
          %v2314 = vunpack.c.h.b16 %v1777
          %v2315 = vunpack.c.l.b16 %v1778
          %v2316 = vunpack.c.h.b16 %v1778
          %v2317 = vunpack.c.l.b16 %v1779
          %v2318 = vunpack.c.h.b16 %v1779
          %v2319 = vunpack.c.l.b16 %v1780
          %v2320 = vunpack.c.h.b16 %v1780
          %v2321 = vunpack.c.l.b16 %v1781
          %v2322 = vunpack.c.h.b16 %v1781
          %v2323 = vunpack.c.l.b16 %v1782
          %v2324 = vunpack.c.h.b16 %v1782
          %v2325 = vunpack.c.l.b16 %v1783
          %v2326 = vunpack.c.h.b16 %v1783
          %v2327 = vunpack.c.l.b16 %v1784
          %v2328 = vunpack.c.h.b16 %v1784
          %v2329 = vunpack.c.l.b16 %v1785
          %v2330 = vunpack.c.h.b16 %v1785
          %v2331 = vunpack.c.l.b16 %v1786
          %v2332 = vunpack.c.h.b16 %v1786
          %v2333 = vunpack.c.l.b16 %v1787
          %v2334 = vunpack.c.h.b16 %v1787
          %v2335 = vunpack.c.l.b16 %v1788
          %v2336 = vunpack.c.h.b16 %v1788
          %v2337 = vunpack.c.l.b16 %v1789
          %v2338 = vunpack.c.h.b16 %v1789
          %v2339 = vunpack.c.l.b16 %v1790
          %v2340 = vunpack.c.h.b16 %v1790
          %v2341 = vunpack.c.l.b16 %v1791
          %v2342 = vunpack.c.h.b16 %v1791
          %v2343 = vunpack.c.l.b16 %v1792
          %v2344 = vunpack.c.h.b16 %v1792
          %v2345 = vunpack.c.l.b16 %v1793
          %v2346 = vunpack.c.h.b16 %v1793
          %v2347 = vunpack.c.l.b16 %v1794
          %v2348 = vunpack.c.h.b16 %v1794
          %v2349 = vunpack.c.l.b16 %v1795
          %v2350 = vunpack.c.h.b16 %v1795
          %v2351 = vunpack.c.l.b16 %v1796
          %v2352 = vunpack.c.h.b16 %v1796
          %v2353 = vunpack.c.l.b16 %v1797
          %v2354 = vunpack.c.h.b16 %v1797
          %v2355 = vunpack.c.l.b16 %v1798
          %v2356 = vunpack.c.h.b16 %v1798
          %v2357 = vunpack.c.l.b16 %v1799
          %v2358 = vunpack.c.h.b16 %v1799
          %v2359 = vunpack.c.l.b16 %v1800
          %v2360 = vunpack.c.h.b16 %v1800
          %v2361 = vunpack.c.l.b16 %v1801
          %v2362 = vunpack.c.h.b16 %v1801
          %v2363 = vunpack.c.l.b16 %v1802
          %v2364 = vunpack.c.h.b16 %v1802
          %v2365 = vunpack.c.l.b16 %v1803
          %v2366 = vunpack.c.h.b16 %v1803
          %v2367 = vunpack.c.l.b16 %v1804
          %v2368 = vunpack.c.h.b16 %v1804
          %v2369 = vunpack.c.l.b16 %v1805
          %v2370 = vunpack.c.h.b16 %v1805
          %v2371 = vunpack.c.l.b16 %v1806
          %v2372 = vunpack.c.h.b16 %v1806
          %v2373 = vunpack.c.l.b16 %v1807
          %v2374 = vunpack.c.h.b16 %v1807
          %v2375 = vunpack.c.l.b16 %v1808
          %v2376 = vunpack.c.h.b16 %v1808
          %v2377 = vunpack.c.l.b16 %v1809
          %v2378 = vunpack.c.h.b16 %v1809
          %v2379 = vunpack.c.l.b16 %v1810
          %v2380 = vunpack.c.h.b16 %v1810
          %v2381 = vunpack.c.l.b16 %v1811
          %v2382 = vunpack.c.h.b16 %v1811
          %v2383 = vunpack.c.l.b16 %v1812
          %v2384 = vunpack.c.h.b16 %v1812
          %v2385 = vunpack.c.l.b16 %v1813
          %v2386 = vunpack.c.h.b16 %v1813
          %v2387 = vunpack.c.l.b16 %v1814
          %v2388 = vunpack.c.h.b16 %v1814
          %v2389 = vunpack.c.l.b16 %v1815
          %v2390 = vunpack.c.h.b16 %v1815
          %v2391 = vunpack.c.l.b16 %v1816
          %v2392 = vunpack.c.h.b16 %v1816
          %v2393 = vunpack.c.l.b16 %v1817
          %v2394 = vunpack.c.h.b16 %v1817
          %v2395 = vunpack.c.l.b16 %v1818
          %v2396 = vunpack.c.h.b16 %v1818
          %v2397 = vunpack.c.l.b16 %v1819
          %v2398 = vunpack.c.h.b16 %v1819
          %v2399 = vunpack.c.l.b16 %v1820
          %v2400 = vunpack.c.h.b16 %v1820
          %v2401 = vunpack.c.l.b16 %v1821
          %v2402 = vunpack.c.h.b16 %v1821
          %v2403 = vunpack.c.l.b16 %v1822
          %v2404 = vunpack.c.h.b16 %v1822
          %v2405 = vunpack.c.l.b16 %v1823
          %v2406 = vunpack.c.h.b16 %v1823
          %v2407 = vunpack.c.l.b16 %v1824
          %v2408 = vunpack.c.h.b16 %v1824
          %v2409 = vunpack.c.l.b16 %v1825
          %v2410 = vunpack.c.h.b16 %v1825
          %v2411 = vunpack.c.l.b16 %v1826
          %v2412 = vunpack.c.h.b16 %v1826
          %v2413 = vunpack.c.l.b16 %v1827
          %v2414 = vunpack.c.h.b16 %v1827
          %v2415 = vunpack.c.l.b16 %v1828
          %v2416 = vunpack.c.h.b16 %v1828
          %v2417 = vunpack.c.l.b16 %v1829
          %v2418 = vunpack.c.h.b16 %v1829
          %v2419 = vunpack.c.l.b16 %v1830
          %v2420 = vunpack.c.h.b16 %v1830
          %v2421 = vunpack.c.l.b16 %v1831
          %v2422 = vunpack.c.h.b16 %v1831
          %v2423 = vunpack.c.l.b16 %v1832
          %v2424 = vunpack.c.h.b16 %v1832
          %v2425 = vunpack.c.l.b16 %v1833
          %v2426 = vunpack.c.h.b16 %v1833
          %v2427 = vunpack.c.l.b16 %v1834
          %v2428 = vunpack.c.h.b16 %v1834
          %v2429 = vunpack.c.l.b16 %v1835
          %v2430 = vunpack.c.h.b16 %v1835
          %v2431 = vunpack.c.l.b16 %v1836
          %v2432 = vunpack.c.h.b16 %v1836
          %v2433 = vunpack.c.l.b16 %v1837
          %v2434 = vunpack.c.h.b16 %v1837
          %v2435 = vunpack.c.l.b16 %v1838
          %v2436 = vunpack.c.h.b16 %v1838
          %v2437 = vunpack.c.l.b16 %v1839
          %v2438 = vunpack.c.h.b16 %v1839
          %v2439 = vunpack.c.l.b16 %v1840
          %v2440 = vunpack.c.h.b16 %v1840
          %v2441 = vunpack.c.l.b16 %v1841
          %v2442 = vunpack.c.h.b16 %v1841
          %v2443 = vunpack.c.l.b16 %v1842
          %v2444 = vunpack.c.h.b16 %v1842
          %v2445 = vunpack.c.l.b16 %v1843
          %v2446 = vunpack.c.h.b16 %v1843
          %v2447 = vunpack.c.l.b16 %v1844
          %v2448 = vunpack.c.h.b16 %v1844
          %v2449 = vunpack.c.l.b16 %v1845
          %v2450 = vunpack.c.h.b16 %v1845
          %v2451 = vunpack.c.l.b16 %v1846
          %v2452 = vunpack.c.h.b16 %v1846
          %v2453 = vunpack.c.l.b16 %v1847
          %v2454 = vunpack.c.h.b16 %v1847
          %v2455 = vunpack.c.l.b16 %v1848
          %v2456 = vunpack.c.h.b16 %v1848
          %v2457 = vunpack.c.l.b16 %v1849
          %v2458 = vunpack.c.h.b16 %v1849
          %v2459 = vunpack.c.l.b16 %v1850
          %v2460 = vunpack.c.h.b16 %v1850
          %v2461 = vunpack.c.l.b16 %v1851
          %v2462 = vunpack.c.h.b16 %v1851
          %v2463 = vunpack.c.l.b16 %v1852
          %v2464 = vunpack.c.h.b16 %v1852
          %v2465 = vunpack.c.l.b16 %v1853
          %v2466 = vunpack.c.h.b16 %v1853
          %v2467 = vunpack.c.l.b16 %v1854
          %v2468 = vunpack.c.h.b16 %v1854
          %v2469 = vunpack.c.l.b16 %v1855
          %v2470 = vunpack.c.h.b16 %v1855
          %v2471 = vunpack.c.l.b16 %v1856
          %v2472 = vunpack.c.h.b16 %v1856
          %v2473 = vunpack.c.l.b16 %v1857
          %v2474 = vunpack.c.h.b16 %v1857
          %v2475 = vunpack.c.l.b16 %v1858
          %v2476 = vunpack.c.h.b16 %v1858
          %v2477 = vunpack.c.l.b16 %v1859
          %v2478 = vunpack.c.h.b16 %v1859
          %v2479 = vunpack.c.l.b16 %v1860
          %v2480 = vunpack.c.h.b16 %v1860
          %v2481 = vunpack.c.l.b16 %v1861
          %v2482 = vunpack.c.h.b16 %v1861
          %v2483 = vunpack.c.l.b16 %v1862
          %v2484 = vunpack.c.h.b16 %v1862
          %v2485 = vunpack.c.l.b16 %v1863
          %v2486 = vunpack.c.h.b16 %v1863
          %v2487 = vunpack.c.l.b16 %v1864
          %v2488 = vunpack.c.h.b16 %v1864
          %v2489 = vunpack.c.l.b16 %v1865
          %v2490 = vunpack.c.h.b16 %v1865
          %v2491 = vunpack.c.l.b16 %v1866
          %v2492 = vunpack.c.h.b16 %v1866
          %v2493 = vunpack.c.l.b16 %v1867
          %v2494 = vunpack.c.h.b16 %v1867
          %v2495 = vunpack.c.l.b16 %v1868
          %v2496 = vunpack.c.h.b16 %v1868
          %v2497 = vunpack.c.l.b16 %v1869
          %v2498 = vunpack.c.h.b16 %v1869
          %v2499 = vunpack.c.l.b16 %v1870
          %v2500 = vunpack.c.h.b16 %v1870
          %v2501 = vunpack.c.l.b16 %v1871
          %v2502 = vunpack.c.h.b16 %v1871
          %v2503 = vunpack.c.l.b16 %v1872
          %v2504 = vunpack.c.h.b16 %v1872
          %v2505 = vunpack.c.l.b16 %v1873
          %v2506 = vunpack.c.h.b16 %v1873
          %v2507 = vunpack.c.l.b16 %v1874
          %v2508 = vunpack.c.h.b16 %v1874
          %v2509 = vunpack.c.l.b16 %v1875
          %v2510 = vunpack.c.h.b16 %v1875
          %v2511 = vunpack.c.l.b16 %v1876
          %v2512 = vunpack.c.h.b16 %v1876
          %v2513 = vunpack.c.l.b16 %v1877
          %v2514 = vunpack.c.h.b16 %v1877
          %v2515 = vunpack.c.l.b16 %v1878
          %v2516 = vunpack.c.h.b16 %v1878
          %v2517 = vunpack.c.l.b16 %v1879
          %v2518 = vunpack.c.h.b16 %v1879
          %v2519 = vunpack.c.l.b16 %v1880
          %v2520 = vunpack.c.h.b16 %v1880
          %v2521 = vunpack.c.l.b16 %v1881
          %v2522 = vunpack.c.h.b16 %v1881
          %v2523 = vunpack.c.l.b16 %v1882
          %v2524 = vunpack.c.h.b16 %v1882
          %v2525 = vunpack.c.l.b16 %v1883
          %v2526 = vunpack.c.h.b16 %v1883
          %v2527 = vunpack.c.l.b16 %v1884
          %v2528 = vunpack.c.h.b16 %v1884
          %v2529 = vunpack.c.l.b16 %v1885
          %v2530 = vunpack.c.h.b16 %v1885
          %v2531 = vunpack.c.l.b16 %v1886
          %v2532 = vunpack.c.h.b16 %v1886
          %v2533 = vunpack.c.l.b16 %v1887
          %v2534 = vunpack.c.h.b16 %v1887
          %v2535 = vunpack.c.l.b16 %v1888
          %v2536 = vunpack.c.h.b16 %v1888
          %v2537 = vunpack.c.l.b16 %v1889
          %v2538 = vunpack.c.h.b16 %v1889
          %v2539 = vunpack.c.l.b16 %v1890
          %v2540 = vunpack.c.h.b16 %v1890
          %v2541 = vunpack.c.l.b16 %v1891
          %v2542 = vunpack.c.h.b16 %v1891
          %v2543 = vunpack.c.l.b16 %v1892
          %v2544 = vunpack.c.h.b16 %v1892
          %v2545 = vunpack.c.l.b16 %v1893
          %v2546 = vunpack.c.h.b16 %v1893
          %v2547 = vunpack.c.l.b16 %v1894
          %v2548 = vunpack.c.h.b16 %v1894
          %v2549 = vunpack.c.l.b16 %v1895
          %v2550 = vunpack.c.h.b16 %v1895
          %v2551 = vunpack.c.l.b16 %v1896
          %v2552 = vunpack.c.h.b16 %v1896
          %v2553 = vunpack.c.l.b16 %v1897
          %v2554 = vunpack.c.h.b16 %v1897
          %v2555 = vunpack.c.l.b16 %v1898
          %v2556 = vunpack.c.h.b16 %v1898
          %v2557 = vunpack.c.l.b16 %v1899
          %v2558 = vunpack.c.h.b16 %v1899
          %v2559 = vunpack.c.l.b16 %v1900
          %v2560 = vunpack.c.h.b16 %v1900
          %v2561 = vunpack.c.l.b16 %v1901
          %v2562 = vunpack.c.h.b16 %v1901
          %v2563 = vunpack.c.l.b16 %v1902
          %v2564 = vunpack.c.h.b16 %v1902
          %v2565 = vunpack.c.l.b16 %v1903
          %v2566 = vunpack.c.h.b16 %v1903
          %v2567 = vunpack.c.l.b16 %v1904
          %v2568 = vunpack.c.h.b16 %v1904
          %v2569 = vunpack.c.l.b16 %v1905
          %v2570 = vunpack.c.h.b16 %v1905
          %v2571 = vunpack.c.l.b16 %v1906
          %v2572 = vunpack.c.h.b16 %v1906
          %v2573 = vunpack.c.l.b16 %v1907
          %v2574 = vunpack.c.h.b16 %v1907
          %v2575 = vunpack.c.l.b16 %v1908
          %v2576 = vunpack.c.h.b16 %v1908
          %v2577 = vunpack.c.l.b16 %v1909
          %v2578 = vunpack.c.h.b16 %v1909
          %v2579 = vunpack.c.l.b16 %v1910
          %v2580 = vunpack.c.h.b16 %v1910
          %v2581 = vunpack.c.l.b16 %v1911
          %v2582 = vunpack.c.h.b16 %v1911
          %v2583 = vunpack.c.l.b16 %v1912
          %v2584 = vunpack.c.h.b16 %v1912
          %v2585 = vunpack.c.l.b16 %v1913
          %v2586 = vunpack.c.h.b16 %v1913
          %v2587 = vunpack.c.l.b16 %v1914
          %v2588 = vunpack.c.h.b16 %v1914
          %v2589 = vunpack.c.l.b16 %v1915
          %v2590 = vunpack.c.h.b16 %v1915
          %v2591 = vunpack.c.l.b16 %v1916
          %v2592 = vunpack.c.h.b16 %v1916
          %v2593 = vunpack.c.l.b16 %v1917
          %v2594 = vunpack.c.h.b16 %v1917
          %v2595 = vunpack.c.l.b16 %v1918
          %v2596 = vunpack.c.h.b16 %v1918
          %v2597 = vunpack.c.l.b16 %v1919
          %v2598 = vunpack.c.h.b16 %v1919
          %v2599 = vunpack.c.l.b16 %v1920
          %v2600 = vunpack.c.h.b16 %v1920
          %v2601 = vunpack.c.l.b16 %v1921
          %v2602 = vunpack.c.h.b16 %v1921
          %v2603 = vunpack.c.l.b16 %v1922
          %v2604 = vunpack.c.h.b16 %v1922
          %v2605 = vunpack.c.l.b16 %v1923
          %v2606 = vunpack.c.h.b16 %v1923
          %v2607 = vunpack.c.l.b16 %v1924
          %v2608 = vunpack.c.h.b16 %v1924
          %v2609 = vunpack.c.l.b16 %v1925
          %v2610 = vunpack.c.h.b16 %v1925
          %v2611 = vunpack.c.l.b16 %v1926
          %v2612 = vunpack.c.h.b16 %v1926
          %v2613 = vunpack.c.l.b16 %v1927
          %v2614 = vunpack.c.h.b16 %v1927
          %v2615 = vunpack.c.l.b16 %v1928
          %v2616 = vunpack.c.h.b16 %v1928
          %v2617 = vunpack.c.l.b16 %v1929
          %v2618 = vunpack.c.h.b16 %v1929
          %v2619 = vunpack.c.l.b16 %v1930
          %v2620 = vunpack.c.h.b16 %v1930
          %v2621 = vunpack.c.l.b16 %v1931
          %v2622 = vunpack.c.h.b16 %v1931
          %v2623 = vunpack.c.l.b16 %v1932
          %v2624 = vunpack.c.h.b16 %v1932
          %v2625 = vunpack.c.l.b16 %v1933
          %v2626 = vunpack.c.h.b16 %v1933
          %v2627 = vunpack.c.l.b16 %v1934
          %v2628 = vunpack.c.h.b16 %v1934
          %v2629 = vunpack.c.l.b16 %v1935
          %v2630 = vunpack.c.h.b16 %v1935
          %v2631 = vunpack.c.l.b16 %v1936
          %v2632 = vunpack.c.h.b16 %v1936
          %v2633 = vunpack.c.l.b16 %v1937
          %v2634 = vunpack.c.h.b16 %v1937
          %v2635 = vunpack.c.l.b16 %v1938
          %v2636 = vunpack.c.h.b16 %v1938
          %v2637 = vunpack.c.l.b16 %v1939
          %v2638 = vunpack.c.h.b16 %v1939
          %v2639 = vunpack.c.l.b16 %v1940
          %v2640 = vunpack.c.h.b16 %v1940
          %v2641 = vunpack.c.l.b16 %v1941
          %v2642 = vunpack.c.h.b16 %v1941
          %v2643 = vunpack.c.l.b16 %v1942
          %v2644 = vunpack.c.h.b16 %v1942
          %v2645 = vunpack.c.l.b16 %v1943
          %v2646 = vunpack.c.h.b16 %v1943
          %v2647 = vunpack.c.l.b16 %v1944
          %v2648 = vunpack.c.h.b16 %v1944
          %v2649 = vunpack.c.l.b16 %v1945
          %v2650 = vunpack.c.h.b16 %v1945
          %v2651 = vunpack.c.l.b16 %v1946
          %v2652 = vunpack.c.h.b16 %v1946
          %v2653 = vunpack.c.l.b16 %v1947
          %v2654 = vunpack.c.h.b16 %v1947
          %v2655 = vunpack.c.l.b16 %v1948
          %v2656 = vunpack.c.h.b16 %v1948
          %v2657 = vunpack.c.l.b16 %v1949
          %v2658 = vunpack.c.h.b16 %v1949
          %v2659 = vunpack.c.l.b16 %v1950
          %v2660 = vunpack.c.h.b16 %v1950
          %v2661 = vunpack.c.l.b16 %v1951
          %v2662 = vunpack.c.h.b16 %v1951
          %v2663 = vunpack.c.l.b16 %v1952
          %v2664 = vunpack.c.h.b16 %v1952
          %v2665 = vunpack.c.l.b16 %v1953
          %v2666 = vunpack.c.h.b16 %v1953
          %v2667 = vunpack.c.l.b16 %v1954
          %v2668 = vunpack.c.h.b16 %v1954
          %v2669 = vunpack.c.l.b16 %v1955
          %v2670 = vunpack.c.h.b16 %v1955
          %v2671 = vunpack.c.l.b16 %v1956
          %v2672 = vunpack.c.h.b16 %v1956
          %v2673 = vunpack.c.l.b16 %v1957
          %v2674 = vunpack.c.h.b16 %v1957
          %v2675 = vunpack.c.l.b16 %v1958
          %v2676 = vunpack.c.h.b16 %v1958
          %v2677 = vunpack.c.l.b16 %v1959
          %v2678 = vunpack.c.h.b16 %v1959
          %v2679 = vunpack.c.l.b16 %v1960
          %v2680 = vunpack.c.h.b16 %v1960
          %v2681 = vunpack.c.l.b16 %v1961
          %v2682 = vunpack.c.h.b16 %v1961
          %v2683 = vunpack.c.l.b16 %v1962
          %v2684 = vunpack.c.h.b16 %v1962
          %v2685 = vunpack.c.l.b16 %v1963
          %v2686 = vunpack.c.h.b16 %v1963
          %v2687 = vunpack.c.l.b16 %v1964
          %v2688 = vunpack.c.h.b16 %v1964
          %v2689 = vunpack.c.l.b16 %v1965
          %v2690 = vunpack.c.h.b16 %v1965
          %v2691 = vunpack.c.l.b16 %v1966
          %v2692 = vunpack.c.h.b16 %v1966
          %v2693 = vunpack.c.l.b16 %v1967
          %v2694 = vunpack.c.h.b16 %v1967
          %v2695 = vunpack.c.l.b16 %v1968
          %v2696 = vunpack.c.h.b16 %v1968
          %v2697 = vunpack.c.l.b16 %v1969
          %v2698 = vunpack.c.h.b16 %v1969
          %v2699 = vunpack.c.l.b16 %v1970
          %v2700 = vunpack.c.h.b16 %v1970
          %v2701 = vunpack.c.l.b16 %v1971
          %v2702 = vunpack.c.h.b16 %v1971
          %v2703 = vunpack.c.l.b16 %v1972
          %v2704 = vunpack.c.h.b16 %v1972
          %v2705 = vunpack.c.l.b16 %v1973
          %v2706 = vunpack.c.h.b16 %v1973
          %v2707 = vunpack.c.l.b16 %v1974
          %v2708 = vunpack.c.h.b16 %v1974
          %v2709 = vunpack.c.l.b16 %v1975
          %v2710 = vunpack.c.h.b16 %v1975
          %v2711 = vunpack.c.l.b16 %v1976
          %v2712 = vunpack.c.h.b16 %v1976
          %v2713 = vunpack.c.l.b16 %v1977
          %v2714 = vunpack.c.h.b16 %v1977
          %v2715 = vunpack.c.l.b16 %v1978
          %v2716 = vunpack.c.h.b16 %v1978
          %v2717 = vunpack.c.l.b16 %v1979
          %v2718 = vunpack.c.h.b16 %v1979
          %v2719 = vunpack.c.l.b16 %v1980
          %v2720 = vunpack.c.h.b16 %v1980
          %v2721 = vunpack.c.l.b16 %v1981
          %v2722 = vunpack.c.h.b16 %v1981
          %v2723 = vunpack.c.l.b16 %v1982
          %v2724 = vunpack.c.h.b16 %v1982
          %v2725 = vunpack.c.l.b16 %v1983
          %v2726 = vunpack.c.h.b16 %v1983
          %v2727 = vunpack.c.l.b16 %v1984
          %v2728 = vunpack.c.h.b16 %v1984
          %v2729 = vunpack.c.l.b16 %v1985
          %v2730 = vunpack.c.h.b16 %v1985
          %v2731 = vunpack.c.l.b16 %v1986
          %v2732 = vunpack.c.h.b16 %v1986
          %v2733 = vunpack.c.l.b16 %v1987
          %v2734 = vunpack.c.h.b16 %v1987
          %v2735 = vunpack.c.l.b16 %v1988
          %v2736 = vunpack.c.h.b16 %v1988
          %v2737 = vunpack.c.l.b16 %v1989
          %v2738 = vunpack.c.h.b16 %v1989
          %v2739 = vunpack.c.l.b16 %v1990
          %v2740 = vunpack.c.h.b16 %v1990
          %v2741 = vunpack.c.l.b16 %v1991
          %v2742 = vunpack.c.h.b16 %v1991
          %v2743 = vunpack.c.l.b16 %v1992
          %v2744 = vunpack.c.h.b16 %v1992
          %v2745 = vunpack.c.l.b16 %v1993
          %v2746 = vunpack.c.h.b16 %v1993
          %v2747 = vunpack.c.l.b16 %v1994
          %v2748 = vunpack.c.h.b16 %v1994
          %v2749 = vunpack.c.l.b16 %v1995
          %v2750 = vunpack.c.h.b16 %v1995
          %v2751 = vunpack.c.l.b16 %v1996
          %v2752 = vunpack.c.h.b16 %v1996
          %v2753 = vunpack.c.l.b16 %v1997
          %v2754 = vunpack.c.h.b16 %v1997
          %v2755 = vunpack.c.l.b16 %v1998
          %v2756 = vunpack.c.h.b16 %v1998
          %v2757 = vunpack.c.l.b16 %v1999
          %v2758 = vunpack.c.h.b16 %v1999
          %v2759 = vunpack.c.l.b16 %v2000
          %v2760 = vunpack.c.h.b16 %v2000
          %v2761 = vunpack.c.l.b16 %v2001
          %v2762 = vunpack.c.h.b16 %v2001
          %v2763 = vunpack.c.l.b16 %v2002
          %v2764 = vunpack.c.h.b16 %v2002
          %v2765 = vunpack.c.l.b16 %v2003
          %v2766 = vunpack.c.h.b16 %v2003
          %v2767 = vunpack.c.l.b16 %v2004
          %v2768 = vunpack.c.h.b16 %v2004
          %v2769 = vunpack.c.l.b16 %v2005
          %v2770 = vunpack.c.h.b16 %v2005
          %v2771 = vunpack.c.l.b16 %v2006
          %v2772 = vunpack.c.h.b16 %v2006
          %v2773 = vunpack.c.l.b16 %v2007
          %v2774 = vunpack.c.h.b16 %v2007
          %v2775 = vunpack.c.l.b16 %v2008
          %v2776 = vunpack.c.h.b16 %v2008
          %v2777 = vunpack.c.l.b16 %v2009
          %v2778 = vunpack.c.h.b16 %v2009
          %v2779 = vpack.c.b16 %v2271, %v2267
          %v2780 = vpack.c.b16 %v2272, %v2268
          %v2781 = vpack.c.b16 %v2273, %v2269
          %v2782 = vpack.c.b16 %v2274, %v2270
          %v2783 = vpack.c.b16 %v2279, %v2275
          %v2784 = vpack.c.b16 %v2280, %v2276
          %v2785 = vpack.c.b16 %v2281, %v2277
          %v2786 = vpack.c.b16 %v2282, %v2278
          %v2787 = vpack.c.b16 %v2287, %v2283
          %v2788 = vpack.c.b16 %v2288, %v2284
          %v2789 = vpack.c.b16 %v2289, %v2285
          %v2790 = vpack.c.b16 %v2290, %v2286
          %v2791 = vpack.c.b16 %v2295, %v2291
          %v2792 = vpack.c.b16 %v2296, %v2292
          %v2793 = vpack.c.b16 %v2297, %v2293
          %v2794 = vpack.c.b16 %v2298, %v2294
          %v2795 = vpack.c.b16 %v2303, %v2299
          %v2796 = vpack.c.b16 %v2304, %v2300
          %v2797 = vpack.c.b16 %v2305, %v2301
          %v2798 = vpack.c.b16 %v2306, %v2302
          %v2799 = vpack.c.b16 %v2311, %v2307
          %v2800 = vpack.c.b16 %v2312, %v2308
          %v2801 = vpack.c.b16 %v2313, %v2309
          %v2802 = vpack.c.b16 %v2314, %v2310
          %v2803 = vpack.c.b16 %v2319, %v2315
          %v2804 = vpack.c.b16 %v2320, %v2316
          %v2805 = vpack.c.b16 %v2321, %v2317
          %v2806 = vpack.c.b16 %v2322, %v2318
          %v2807 = vpack.c.b16 %v2327, %v2323
          %v2808 = vpack.c.b16 %v2328, %v2324
          %v2809 = vpack.c.b16 %v2329, %v2325
          %v2810 = vpack.c.b16 %v2330, %v2326
          %v2811 = vpack.c.b16 %v2335, %v2331
          %v2812 = vpack.c.b16 %v2336, %v2332
          %v2813 = vpack.c.b16 %v2337, %v2333
          %v2814 = vpack.c.b16 %v2338, %v2334
          %v2815 = vpack.c.b16 %v2343, %v2339
          %v2816 = vpack.c.b16 %v2344, %v2340
          %v2817 = vpack.c.b16 %v2345, %v2341
          %v2818 = vpack.c.b16 %v2346, %v2342
          %v2819 = vpack.c.b16 %v2351, %v2347
          %v2820 = vpack.c.b16 %v2352, %v2348
          %v2821 = vpack.c.b16 %v2353, %v2349
          %v2822 = vpack.c.b16 %v2354, %v2350
          %v2823 = vpack.c.b16 %v2359, %v2355
          %v2824 = vpack.c.b16 %v2360, %v2356
          %v2825 = vpack.c.b16 %v2361, %v2357
          %v2826 = vpack.c.b16 %v2362, %v2358
          %v2827 = vpack.c.b16 %v2367, %v2363
          %v2828 = vpack.c.b16 %v2368, %v2364
          %v2829 = vpack.c.b16 %v2369, %v2365
          %v2830 = vpack.c.b16 %v2370, %v2366
          %v2831 = vpack.c.b16 %v2375, %v2371
          %v2832 = vpack.c.b16 %v2376, %v2372
          %v2833 = vpack.c.b16 %v2377, %v2373
          %v2834 = vpack.c.b16 %v2378, %v2374
          %v2835 = vpack.c.b16 %v2383, %v2379
          %v2836 = vpack.c.b16 %v2384, %v2380
          %v2837 = vpack.c.b16 %v2385, %v2381
          %v2838 = vpack.c.b16 %v2386, %v2382
          %v2839 = vpack.c.b16 %v2391, %v2387
          %v2840 = vpack.c.b16 %v2392, %v2388
          %v2841 = vpack.c.b16 %v2393, %v2389
          %v2842 = vpack.c.b16 %v2394, %v2390
          %v2843 = vpack.c.b16 %v2399, %v2395
          %v2844 = vpack.c.b16 %v2400, %v2396
          %v2845 = vpack.c.b16 %v2401, %v2397
          %v2846 = vpack.c.b16 %v2402, %v2398
          %v2847 = vpack.c.b16 %v2407, %v2403
          %v2848 = vpack.c.b16 %v2408, %v2404
          %v2849 = vpack.c.b16 %v2409, %v2405
          %v2850 = vpack.c.b16 %v2410, %v2406
          %v2851 = vpack.c.b16 %v2415, %v2411
          %v2852 = vpack.c.b16 %v2416, %v2412
          %v2853 = vpack.c.b16 %v2417, %v2413
          %v2854 = vpack.c.b16 %v2418, %v2414
          %v2855 = vpack.c.b16 %v2423, %v2419
          %v2856 = vpack.c.b16 %v2424, %v2420
          %v2857 = vpack.c.b16 %v2425, %v2421
          %v2858 = vpack.c.b16 %v2426, %v2422
          %v2859 = vpack.c.b16 %v2431, %v2427
          %v2860 = vpack.c.b16 %v2432, %v2428
          %v2861 = vpack.c.b16 %v2433, %v2429
          %v2862 = vpack.c.b16 %v2434, %v2430
          %v2863 = vpack.c.b16 %v2439, %v2435
          %v2864 = vpack.c.b16 %v2440, %v2436
          %v2865 = vpack.c.b16 %v2441, %v2437
          %v2866 = vpack.c.b16 %v2442, %v2438
          %v2867 = vpack.c.b16 %v2447, %v2443
          %v2868 = vpack.c.b16 %v2448, %v2444
          %v2869 = vpack.c.b16 %v2449, %v2445
          %v2870 = vpack.c.b16 %v2450, %v2446
          %v2871 = vpack.c.b16 %v2455, %v2451
          %v2872 = vpack.c.b16 %v2456, %v2452
          %v2873 = vpack.c.b16 %v2457, %v2453
          %v2874 = vpack.c.b16 %v2458, %v2454
          %v2875 = vpack.c.b16 %v2463, %v2459
          %v2876 = vpack.c.b16 %v2464, %v2460
          %v2877 = vpack.c.b16 %v2465, %v2461
          %v2878 = vpack.c.b16 %v2466, %v2462
          %v2879 = vpack.c.b16 %v2471, %v2467
          %v2880 = vpack.c.b16 %v2472, %v2468
          %v2881 = vpack.c.b16 %v2473, %v2469
          %v2882 = vpack.c.b16 %v2474, %v2470
          %v2883 = vpack.c.b16 %v2479, %v2475
          %v2884 = vpack.c.b16 %v2480, %v2476
          %v2885 = vpack.c.b16 %v2481, %v2477
          %v2886 = vpack.c.b16 %v2482, %v2478
          %v2887 = vpack.c.b16 %v2487, %v2483
          %v2888 = vpack.c.b16 %v2488, %v2484
          %v2889 = vpack.c.b16 %v2489, %v2485
          %v2890 = vpack.c.b16 %v2490, %v2486
          %v2891 = vpack.c.b16 %v2495, %v2491
          %v2892 = vpack.c.b16 %v2496, %v2492
          %v2893 = vpack.c.b16 %v2497, %v2493
          %v2894 = vpack.c.b16 %v2498, %v2494
          %v2895 = vpack.c.b16 %v2503, %v2499
          %v2896 = vpack.c.b16 %v2504, %v2500
          %v2897 = vpack.c.b16 %v2505, %v2501
          %v2898 = vpack.c.b16 %v2506, %v2502
          %v2899 = vpack.c.b16 %v2511, %v2507
          %v2900 = vpack.c.b16 %v2512, %v2508
          %v2901 = vpack.c.b16 %v2513, %v2509
          %v2902 = vpack.c.b16 %v2514, %v2510
          %v2903 = vpack.c.b16 %v2519, %v2515
          %v2904 = vpack.c.b16 %v2520, %v2516
          %v2905 = vpack.c.b16 %v2521, %v2517
          %v2906 = vpack.c.b16 %v2522, %v2518
          %v2907 = vpack.c.b16 %v2527, %v2523
          %v2908 = vpack.c.b16 %v2528, %v2524
          %v2909 = vpack.c.b16 %v2529, %v2525
          %v2910 = vpack.c.b16 %v2530, %v2526
          %v2911 = vpack.c.b16 %v2535, %v2531
          %v2912 = vpack.c.b16 %v2536, %v2532
          %v2913 = vpack.c.b16 %v2537, %v2533
          %v2914 = vpack.c.b16 %v2538, %v2534
          %v2915 = vpack.c.b16 %v2543, %v2539
          %v2916 = vpack.c.b16 %v2544, %v2540
          %v2917 = vpack.c.b16 %v2545, %v2541
          %v2918 = vpack.c.b16 %v2546, %v2542
          %v2919 = vpack.c.b16 %v2551, %v2547
          %v2920 = vpack.c.b16 %v2552, %v2548
          %v2921 = vpack.c.b16 %v2553, %v2549
          %v2922 = vpack.c.b16 %v2554, %v2550
          %v2923 = vpack.c.b16 %v2559, %v2555
          %v2924 = vpack.c.b16 %v2560, %v2556
          %v2925 = vpack.c.b16 %v2561, %v2557
          %v2926 = vpack.c.b16 %v2562, %v2558
          %v2927 = vpack.c.b16 %v2567, %v2563
          %v2928 = vpack.c.b16 %v2568, %v2564
          %v2929 = vpack.c.b16 %v2569, %v2565
          %v2930 = vpack.c.b16 %v2570, %v2566
          %v2931 = vpack.c.b16 %v2575, %v2571
          %v2932 = vpack.c.b16 %v2576, %v2572
          %v2933 = vpack.c.b16 %v2577, %v2573
          %v2934 = vpack.c.b16 %v2578, %v2574
          %v2935 = vpack.c.b16 %v2583, %v2579
          %v2936 = vpack.c.b16 %v2584, %v2580
          %v2937 = vpack.c.b16 %v2585, %v2581
          %v2938 = vpack.c.b16 %v2586, %v2582
          %v2939 = vpack.c.b16 %v2591, %v2587
          %v2940 = vpack.c.b16 %v2592, %v2588
          %v2941 = vpack.c.b16 %v2593, %v2589
          %v2942 = vpack.c.b16 %v2594, %v2590
          %v2943 = vpack.c.b16 %v2599, %v2595
          %v2944 = vpack.c.b16 %v2600, %v2596
          %v2945 = vpack.c.b16 %v2601, %v2597
          %v2946 = vpack.c.b16 %v2602, %v2598
          %v2947 = vpack.c.b16 %v2607, %v2603
          %v2948 = vpack.c.b16 %v2608, %v2604
          %v2949 = vpack.c.b16 %v2609, %v2605
          %v2950 = vpack.c.b16 %v2610, %v2606
          %v2951 = vpack.c.b16 %v2615, %v2611
          %v2952 = vpack.c.b16 %v2616, %v2612
          %v2953 = vpack.c.b16 %v2617, %v2613
          %v2954 = vpack.c.b16 %v2618, %v2614
          %v2955 = vpack.c.b16 %v2623, %v2619
          %v2956 = vpack.c.b16 %v2624, %v2620
          %v2957 = vpack.c.b16 %v2625, %v2621
          %v2958 = vpack.c.b16 %v2626, %v2622
          %v2959 = vpack.c.b16 %v2631, %v2627
          %v2960 = vpack.c.b16 %v2632, %v2628
          %v2961 = vpack.c.b16 %v2633, %v2629
          %v2962 = vpack.c.b16 %v2634, %v2630
          %v2963 = vpack.c.b16 %v2639, %v2635
          %v2964 = vpack.c.b16 %v2640, %v2636
          %v2965 = vpack.c.b16 %v2641, %v2637
          %v2966 = vpack.c.b16 %v2642, %v2638
          %v2967 = vpack.c.b16 %v2647, %v2643
          %v2968 = vpack.c.b16 %v2648, %v2644
          %v2969 = vpack.c.b16 %v2649, %v2645
          %v2970 = vpack.c.b16 %v2650, %v2646
          %v2971 = vpack.c.b16 %v2655, %v2651
          %v2972 = vpack.c.b16 %v2656, %v2652
          %v2973 = vpack.c.b16 %v2657, %v2653
          %v2974 = vpack.c.b16 %v2658, %v2654
          %v2975 = vpack.c.b16 %v2663, %v2659
          %v2976 = vpack.c.b16 %v2664, %v2660
          %v2977 = vpack.c.b16 %v2665, %v2661
          %v2978 = vpack.c.b16 %v2666, %v2662
          %v2979 = vpack.c.b16 %v2671, %v2667
          %v2980 = vpack.c.b16 %v2672, %v2668
          %v2981 = vpack.c.b16 %v2673, %v2669
          %v2982 = vpack.c.b16 %v2674, %v2670
          %v2983 = vpack.c.b16 %v2679, %v2675
          %v2984 = vpack.c.b16 %v2680, %v2676
          %v2985 = vpack.c.b16 %v2681, %v2677
          %v2986 = vpack.c.b16 %v2682, %v2678
          %v2987 = vpack.c.b16 %v2687, %v2683
          %v2988 = vpack.c.b16 %v2688, %v2684
          %v2989 = vpack.c.b16 %v2689, %v2685
          %v2990 = vpack.c.b16 %v2690, %v2686
          %v2991 = vpack.c.b16 %v2695, %v2691
          %v2992 = vpack.c.b16 %v2696, %v2692
          %v2993 = vpack.c.b16 %v2697, %v2693
          %v2994 = vpack.c.b16 %v2698, %v2694
          %v2995 = vpack.c.b16 %v2703, %v2699
          %v2996 = vpack.c.b16 %v2704, %v2700
          %v2997 = vpack.c.b16 %v2705, %v2701
          %v2998 = vpack.c.b16 %v2706, %v2702
          %v2999 = vpack.c.b16 %v2711, %v2707
          %v3000 = vpack.c.b16 %v2712, %v2708
          %v3001 = vpack.c.b16 %v2713, %v2709
          %v3002 = vpack.c.b16 %v2714, %v2710
          %v3003 = vpack.c.b16 %v2719, %v2715
          %v3004 = vpack.c.b16 %v2720, %v2716
          %v3005 = vpack.c.b16 %v2721, %v2717
          %v3006 = vpack.c.b16 %v2722, %v2718
          %v3007 = vpack.c.b16 %v2727, %v2723
          %v3008 = vpack.c.b16 %v2728, %v2724
          %v3009 = vpack.c.b16 %v2729, %v2725
          %v3010 = vpack.c.b16 %v2730, %v2726
          %v3011 = vpack.c.b16 %v2735, %v2731
          %v3012 = vpack.c.b16 %v2736, %v2732
          %v3013 = vpack.c.b16 %v2737, %v2733
          %v3014 = vpack.c.b16 %v2738, %v2734
          %v3015 = vpack.c.b16 %v2743, %v2739
          %v3016 = vpack.c.b16 %v2744, %v2740
          %v3017 = vpack.c.b16 %v2745, %v2741
          %v3018 = vpack.c.b16 %v2746, %v2742
          %v3019 = vpack.c.b16 %v2751, %v2747
          %v3020 = vpack.c.b16 %v2752, %v2748
          %v3021 = vpack.c.b16 %v2753, %v2749
          %v3022 = vpack.c.b16 %v2754, %v2750
          %v3023 = vpack.c.b16 %v2759, %v2755
          %v3024 = vpack.c.b16 %v2760, %v2756
          %v3025 = vpack.c.b16 %v2761, %v2757
          %v3026 = vpack.c.b16 %v2762, %v2758
          %v3027 = vpack.c.b16 %v2767, %v2763
          %v3028 = vpack.c.b16 %v2768, %v2764
          %v3029 = vpack.c.b16 %v2769, %v2765
          %v3030 = vpack.c.b16 %v2770, %v2766
          %v3031 = vpack.c.b16 %v2775, %v2771
          %v3032 = vpack.c.b16 %v2776, %v2772
          %v3033 = vpack.c.b16 %v2777, %v2773
          %v3034 = vpack.c.b16 %v2778, %v2774
          %v3292 = vlaneseq
          %v3293 = vshrl.u32 %v3292, 7
          %v3294 = vsub.s32 0, %v3293
          %v3295 = vrot.slane %v2010, %v3294
          %v3296 = vlaneseq
          %v3297 = vshrl.u32 %v3296, 7
          %v3298 = vsub.s32 1, %v3297
          %v3299 = vrot.slane %v2010, %v3298
          %v3300 = vlaneseq
          %v3301 = vshrl.u32 %v3300, 7
          %v3302 = vsub.s32 2, %v3301
          %v3303 = vrot.slane %v2010, %v3302
          %v3304 = vlaneseq
          %v3305 = vshrl.u32 %v3304, 7
          %v3306 = vsub.s32 3, %v3305
          %v3307 = vrot.slane %v2010, %v3306
          %3312 = vmatprep.subr.bf16.mxu0 %v2808
          %3313 = vmatpush1.bf16.msra.mxu0 %v2807
          %3314 = vmatprep.subr.bf16.mxu0 %v2804
          %3315 = vmatpush1.bf16.msra.mxu0 %v2803
          %3316 = vmatprep.subr.bf16.mxu0 %v2800
          %3317 = vmatpush1.bf16.msra.mxu0 %v2799
          %3318 = vmatprep.subr.bf16.mxu0 %v2796
          %3319 = vmatpush1.bf16.msra.mxu0 %v2795
          %3320 = vmatprep.subr.bf16.mxu0 %v2792
          %3321 = vmatpush1.bf16.msra.mxu0 %v2791
          %3322 = vmatprep.subr.bf16.mxu0 %v2788
          %3323 = vmatpush1.bf16.msra.mxu0 %v2787
          %3324 = vmatprep.subr.bf16.mxu0 %v2784
          %3325 = vmatpush1.bf16.msra.mxu0 %v2783
          %3326 = vmatprep.subr.bf16.mxu0 %v2780
          %3327 = vmatpush1.bf16.msra.mxu0 %v2779
          %3328 = vmatprep.subr.bf16.mxu0 %v2840
          %3329 = vmatpush2.bf16.msra.mxu0 %v2839
          %3330 = vmatprep.subr.bf16.mxu0 %v2836
          %3331 = vmatpush2.bf16.msra.mxu0 %v2835
          %3332 = vmatprep.subr.bf16.mxu0 %v2832
          %3333 = vmatpush2.bf16.msra.mxu0 %v2831
          %3334 = vmatprep.subr.bf16.mxu0 %v2828
          %3335 = vmatpush2.bf16.msra.mxu0 %v2827
          %3336 = vmatprep.subr.bf16.mxu0 %v2824
          %3337 = vmatpush2.bf16.msra.mxu0 %v2823
          %3338 = vmatprep.subr.bf16.mxu0 %v2820
          %3339 = vmatpush2.bf16.msra.mxu0 %v2819
          %3340 = vmatprep.subr.bf16.mxu0 %v2816
          %3341 = vmatpush2.bf16.msra.mxu0 %v2815
          %3342 = vmatprep.subr.bf16.mxu0 %v2812
          %3343 = vmatpush2.bf16.msra.mxu0 %v2811
          %3344 = vmatprep.mubr.bf16.mxu0 %v1747
          %3345 = vmatmul.mubr.bf16.gmra.mxu0 %v1746
          %v3346 = vpop.f32.mrf.mxu0
          %v3347 = vadd.f32 %v3295, %v3346
          %v3348 = vpop.f32.mrf.mxu0
          %v3349 = vadd.f32 %v3299, %v3348
          %v3350 = vpop.f32.mrf.mxu0
          %v3351 = vpop.f32.mrf.mxu0
          %3352 = vdwg.mxu0
          %3353 = vmatprep.subr.bf16.mxu0 %v2872
          %3354 = vmatpush1.bf16.msra.mxu0 %v2871
          %3355 = vmatprep.subr.bf16.mxu0 %v2868
          %3356 = vmatpush1.bf16.msra.mxu0 %v2867
          %3357 = vmatprep.subr.bf16.mxu0 %v2864
          %3358 = vmatpush1.bf16.msra.mxu0 %v2863
          %3359 = vmatprep.subr.bf16.mxu0 %v2860
          %3360 = vmatpush1.bf16.msra.mxu0 %v2859
          %3361 = vmatprep.subr.bf16.mxu0 %v2856
          %3362 = vmatpush1.bf16.msra.mxu0 %v2855
          %3363 = vmatprep.subr.bf16.mxu0 %v2852
          %3364 = vmatpush1.bf16.msra.mxu0 %v2851
          %3365 = vmatprep.subr.bf16.mxu0 %v2848
          %3366 = vmatpush1.bf16.msra.mxu0 %v2847
          %3367 = vmatprep.subr.bf16.mxu0 %v2844
          %3368 = vmatpush1.bf16.msra.mxu0 %v2843
          %3369 = vmatprep.subr.bf16.mxu0 %v2904
          %3370 = vmatpush2.bf16.msra.mxu0 %v2903
          %3371 = vmatprep.subr.bf16.mxu0 %v2900
          %3372 = vmatpush2.bf16.msra.mxu0 %v2899
          %3373 = vmatprep.subr.bf16.mxu0 %v2896
          %3374 = vmatpush2.bf16.msra.mxu0 %v2895
          %3375 = vmatprep.subr.bf16.mxu0 %v2892
          %3376 = vmatpush2.bf16.msra.mxu0 %v2891
          %3377 = vmatprep.subr.bf16.mxu0 %v2888
          %3378 = vmatpush2.bf16.msra.mxu0 %v2887
          %3379 = vmatprep.subr.bf16.mxu0 %v2884
          %3380 = vmatpush2.bf16.msra.mxu0 %v2883
          %3381 = vmatprep.subr.bf16.mxu0 %v2880
          %3382 = vmatpush2.bf16.msra.mxu0 %v2879
          %3383 = vmatprep.subr.bf16.mxu0 %v2876
          %3384 = vmatpush2.bf16.msra.mxu0 %v2875
          %3385 = vmatprep.mubr.bf16.mxu0 %v1749
          %3386 = vmatmul.mubr.bf16.gmra.mxu0 %v1748
          %v3387 = vpop.f32.mrf.mxu0
          %v3388 = vadd.f32 %v3347, %v3387
          %v3389 = vpop.f32.mrf.mxu0
          %v3390 = vadd.f32 %v3349, %v3389
          %v3391 = vpop.f32.mrf.mxu0
          %v3392 = vpop.f32.mrf.mxu0
          %3393 = vdwg.mxu0
          %3394 = vmatprep.subr.bf16.mxu0 %v2936
          %3395 = vmatpush1.bf16.msra.mxu0 %v2935
          %3396 = vmatprep.subr.bf16.mxu0 %v2932
          %3397 = vmatpush1.bf16.msra.mxu0 %v2931
          %3398 = vmatprep.subr.bf16.mxu0 %v2928
          %3399 = vmatpush1.bf16.msra.mxu0 %v2927
          %3400 = vmatprep.subr.bf16.mxu0 %v2924
          %3401 = vmatpush1.bf16.msra.mxu0 %v2923
          %3402 = vmatprep.subr.bf16.mxu0 %v2920
          %3403 = vmatpush1.bf16.msra.mxu0 %v2919
          %3404 = vmatprep.subr.bf16.mxu0 %v2916
          %3405 = vmatpush1.bf16.msra.mxu0 %v2915
          %3406 = vmatprep.subr.bf16.mxu0 %v2912
          %3407 = vmatpush1.bf16.msra.mxu0 %v2911
          %3408 = vmatprep.subr.bf16.mxu0 %v2908
          %3409 = vmatpush1.bf16.msra.mxu0 %v2907
          %3410 = vmatprep.subr.bf16.mxu0 %v2968
          %3411 = vmatpush2.bf16.msra.mxu0 %v2967
          %3412 = vmatprep.subr.bf16.mxu0 %v2964
          %3413 = vmatpush2.bf16.msra.mxu0 %v2963
          %3414 = vmatprep.subr.bf16.mxu0 %v2960
          %3415 = vmatpush2.bf16.msra.mxu0 %v2959
          %3416 = vmatprep.subr.bf16.mxu0 %v2956
          %3417 = vmatpush2.bf16.msra.mxu0 %v2955
          %3418 = vmatprep.subr.bf16.mxu0 %v2952
          %3419 = vmatpush2.bf16.msra.mxu0 %v2951
          %3420 = vmatprep.subr.bf16.mxu0 %v2948
          %3421 = vmatpush2.bf16.msra.mxu0 %v2947
          %3422 = vmatprep.subr.bf16.mxu0 %v2944
          %3423 = vmatpush2.bf16.msra.mxu0 %v2943
          %3424 = vmatprep.subr.bf16.mxu0 %v2940
          %3425 = vmatpush2.bf16.msra.mxu0 %v2939
          %3426 = vmatprep.mubr.bf16.mxu0 %v1751
          %3427 = vmatmul.mubr.bf16.gmra.mxu0 %v1750
          %v3428 = vpop.f32.mrf.mxu0
          %v3429 = vadd.f32 %v3388, %v3428
          %v3430 = vpop.f32.mrf.mxu0
          %v3431 = vadd.f32 %v3390, %v3430
          %v3432 = vpop.f32.mrf.mxu0
          %v3433 = vpop.f32.mrf.mxu0
          %3434 = vdwg.mxu0
          %3435 = vmatprep.subr.bf16.mxu0 %v3000
          %3436 = vmatpush1.bf16.msra.mxu0 %v2999
          %3437 = vmatprep.subr.bf16.mxu0 %v2996
          %3438 = vmatpush1.bf16.msra.mxu0 %v2995
          %3439 = vmatprep.subr.bf16.mxu0 %v2992
          %3440 = vmatpush1.bf16.msra.mxu0 %v2991
          %3441 = vmatprep.subr.bf16.mxu0 %v2988
          %3442 = vmatpush1.bf16.msra.mxu0 %v2987
          %3443 = vmatprep.subr.bf16.mxu0 %v2984
          %3444 = vmatpush1.bf16.msra.mxu0 %v2983
          %3445 = vmatprep.subr.bf16.mxu0 %v2980
          %3446 = vmatpush1.bf16.msra.mxu0 %v2979
          %3447 = vmatprep.subr.bf16.mxu0 %v2976
          %3448 = vmatpush1.bf16.msra.mxu0 %v2975
          %3449 = vmatprep.subr.bf16.mxu0 %v2972
          %3450 = vmatpush1.bf16.msra.mxu0 %v2971
          %3451 = vmatprep.subr.bf16.mxu0 %v3032
          %3452 = vmatpush2.bf16.msra.mxu0 %v3031
          %3453 = vmatprep.subr.bf16.mxu0 %v3028
          %3454 = vmatpush2.bf16.msra.mxu0 %v3027
          %3455 = vmatprep.subr.bf16.mxu0 %v3024
          %3456 = vmatpush2.bf16.msra.mxu0 %v3023
          %3457 = vmatprep.subr.bf16.mxu0 %v3020
          %3458 = vmatpush2.bf16.msra.mxu0 %v3019
          %3459 = vmatprep.subr.bf16.mxu0 %v3016
          %3460 = vmatpush2.bf16.msra.mxu0 %v3015
          %3461 = vmatprep.subr.bf16.mxu0 %v3012
          %3462 = vmatpush2.bf16.msra.mxu0 %v3011
          %3463 = vmatprep.subr.bf16.mxu0 %v3008
          %3464 = vmatpush2.bf16.msra.mxu0 %v3007
          %3465 = vmatprep.subr.bf16.mxu0 %v3004
          %3466 = vmatpush2.bf16.msra.mxu0 %v3003
          %3467 = vmatprep.mubr.bf16.mxu0 %v1753
          %3468 = vmatmul.mubr.bf16.gmra.mxu0 %v1752
          %v3469 = vpop.f32.mrf.mxu0
          %v3470 = vadd.f32 %v3429, %v3469
          %v3471 = vpop.f32.mrf.mxu0
          %v3472 = vadd.f32 %v3431, %v3471
          %v3473 = vpop.f32.mrf.mxu0
          %v3474 = vpop.f32.mrf.mxu0
          %3475 = vdwg.mxu0
          %3476 = vmatprep.subr.bf16.mxu0 %v2810
          %3477 = vmatpush1.bf16.msra.mxu0 %v2809
          %3478 = vmatprep.subr.bf16.mxu0 %v2806
          %3479 = vmatpush1.bf16.msra.mxu0 %v2805
          %3480 = vmatprep.subr.bf16.mxu0 %v2802
          %3481 = vmatpush1.bf16.msra.mxu0 %v2801
          %3482 = vmatprep.subr.bf16.mxu0 %v2798
          %3483 = vmatpush1.bf16.msra.mxu0 %v2797
          %3484 = vmatprep.subr.bf16.mxu0 %v2794
          %3485 = vmatpush1.bf16.msra.mxu0 %v2793
          %3486 = vmatprep.subr.bf16.mxu0 %v2790
          %3487 = vmatpush1.bf16.msra.mxu0 %v2789
          %3488 = vmatprep.subr.bf16.mxu0 %v2786
          %3489 = vmatpush1.bf16.msra.mxu0 %v2785
          %3490 = vmatprep.subr.bf16.mxu0 %v2782
          %3491 = vmatpush1.bf16.msra.mxu0 %v2781
          %3492 = vmatprep.subr.bf16.mxu0 %v2842
          %3493 = vmatpush2.bf16.msra.mxu0 %v2841
          %3494 = vmatprep.subr.bf16.mxu0 %v2838
          %3495 = vmatpush2.bf16.msra.mxu0 %v2837
          %3496 = vmatprep.subr.bf16.mxu0 %v2834
          %3497 = vmatpush2.bf16.msra.mxu0 %v2833
          %3498 = vmatprep.subr.bf16.mxu0 %v2830
          %3499 = vmatpush2.bf16.msra.mxu0 %v2829
          %3500 = vmatprep.subr.bf16.mxu0 %v2826
          %3501 = vmatpush2.bf16.msra.mxu0 %v2825
          %3502 = vmatprep.subr.bf16.mxu0 %v2822
          %3503 = vmatpush2.bf16.msra.mxu0 %v2821
          %3504 = vmatprep.subr.bf16.mxu0 %v2818
          %3505 = vmatpush2.bf16.msra.mxu0 %v2817
          %3506 = vmatprep.subr.bf16.mxu0 %v2814
          %3507 = vmatpush2.bf16.msra.mxu0 %v2813
          %3508 = vmatprep.mubr.bf16.mxu0 %v1747
          %3509 = vmatmul.mubr.bf16.gmra.mxu0 %v1746
          %v3510 = vpop.f32.mrf.mxu0
          %v3511 = vadd.f32 %v3303, %v3510
          %v3512 = vpop.f32.mrf.mxu0
          %v3513 = vadd.f32 %v3307, %v3512
          %v3514 = vpop.f32.mrf.mxu0
          %v3515 = vpop.f32.mrf.mxu0
          %3516 = vdwg.mxu0
          %3517 = vmatprep.subr.bf16.mxu0 %v2874
          %3518 = vmatpush1.bf16.msra.mxu0 %v2873
          %3519 = vmatprep.subr.bf16.mxu0 %v2870
          %3520 = vmatpush1.bf16.msra.mxu0 %v2869
          %3521 = vmatprep.subr.bf16.mxu0 %v2866
          %3522 = vmatpush1.bf16.msra.mxu0 %v2865
          %3523 = vmatprep.subr.bf16.mxu0 %v2862
          %3524 = vmatpush1.bf16.msra.mxu0 %v2861
          %3525 = vmatprep.subr.bf16.mxu0 %v2858
          %3526 = vmatpush1.bf16.msra.mxu0 %v2857
          %3527 = vmatprep.subr.bf16.mxu0 %v2854
          %3528 = vmatpush1.bf16.msra.mxu0 %v2853
          %3529 = vmatprep.subr.bf16.mxu0 %v2850
          %3530 = vmatpush1.bf16.msra.mxu0 %v2849
          %3531 = vmatprep.subr.bf16.mxu0 %v2846
          %3532 = vmatpush1.bf16.msra.mxu0 %v2845
          %3533 = vmatprep.subr.bf16.mxu0 %v2906
          %3534 = vmatpush2.bf16.msra.mxu0 %v2905
          %3535 = vmatprep.subr.bf16.mxu0 %v2902
          %3536 = vmatpush2.bf16.msra.mxu0 %v2901
          %3537 = vmatprep.subr.bf16.mxu0 %v2898
          %3538 = vmatpush2.bf16.msra.mxu0 %v2897
          %3539 = vmatprep.subr.bf16.mxu0 %v2894
          %3540 = vmatpush2.bf16.msra.mxu0 %v2893
          %3541 = vmatprep.subr.bf16.mxu0 %v2890
          %3542 = vmatpush2.bf16.msra.mxu0 %v2889
          %3543 = vmatprep.subr.bf16.mxu0 %v2886
          %3544 = vmatpush2.bf16.msra.mxu0 %v2885
          %3545 = vmatprep.subr.bf16.mxu0 %v2882
          %3546 = vmatpush2.bf16.msra.mxu0 %v2881
          %3547 = vmatprep.subr.bf16.mxu0 %v2878
          %3548 = vmatpush2.bf16.msra.mxu0 %v2877
          %3549 = vmatprep.mubr.bf16.mxu0 %v1749
          %3550 = vmatmul.mubr.bf16.gmra.mxu0 %v1748
          %v3551 = vpop.f32.mrf.mxu0
          %v3552 = vadd.f32 %v3511, %v3551
          %v3553 = vpop.f32.mrf.mxu0
          %v3554 = vadd.f32 %v3513, %v3553
          %v3555 = vpop.f32.mrf.mxu0
          %v3556 = vpop.f32.mrf.mxu0
          %3557 = vdwg.mxu0
          %3558 = vmatprep.subr.bf16.mxu0 %v2938
          %3559 = vmatpush1.bf16.msra.mxu0 %v2937
          %3560 = vmatprep.subr.bf16.mxu0 %v2934
          %3561 = vmatpush1.bf16.msra.mxu0 %v2933
          %3562 = vmatprep.subr.bf16.mxu0 %v2930
          %3563 = vmatpush1.bf16.msra.mxu0 %v2929
          %3564 = vmatprep.subr.bf16.mxu0 %v2926
          %3565 = vmatpush1.bf16.msra.mxu0 %v2925
          %3566 = vmatprep.subr.bf16.mxu0 %v2922
          %3567 = vmatpush1.bf16.msra.mxu0 %v2921
          %3568 = vmatprep.subr.bf16.mxu0 %v2918
          %3569 = vmatpush1.bf16.msra.mxu0 %v2917
          %3570 = vmatprep.subr.bf16.mxu0 %v2914
          %3571 = vmatpush1.bf16.msra.mxu0 %v2913
          %3572 = vmatprep.subr.bf16.mxu0 %v2910
          %3573 = vmatpush1.bf16.msra.mxu0 %v2909
          %3574 = vmatprep.subr.bf16.mxu0 %v2970
          %3575 = vmatpush2.bf16.msra.mxu0 %v2969
          %3576 = vmatprep.subr.bf16.mxu0 %v2966
          %3577 = vmatpush2.bf16.msra.mxu0 %v2965
          %3578 = vmatprep.subr.bf16.mxu0 %v2962
          %3579 = vmatpush2.bf16.msra.mxu0 %v2961
          %3580 = vmatprep.subr.bf16.mxu0 %v2958
          %3581 = vmatpush2.bf16.msra.mxu0 %v2957
          %3582 = vmatprep.subr.bf16.mxu0 %v2954
          %3583 = vmatpush2.bf16.msra.mxu0 %v2953
          %3584 = vmatprep.subr.bf16.mxu0 %v2950
          %3585 = vmatpush2.bf16.msra.mxu0 %v2949
          %3586 = vmatprep.subr.bf16.mxu0 %v2946
          %3587 = vmatpush2.bf16.msra.mxu0 %v2945
          %3588 = vmatprep.subr.bf16.mxu0 %v2942
          %3589 = vmatpush2.bf16.msra.mxu0 %v2941
          %3590 = vmatprep.mubr.bf16.mxu0 %v1751
          %3591 = vmatmul.mubr.bf16.gmra.mxu0 %v1750
          %v3592 = vpop.f32.mrf.mxu0
          %v3593 = vadd.f32 %v3552, %v3592
          %v3594 = vpop.f32.mrf.mxu0
          %v3595 = vadd.f32 %v3554, %v3594
          %v3596 = vpop.f32.mrf.mxu0
          %v3597 = vpop.f32.mrf.mxu0
          %3598 = vdwg.mxu0
          %3599 = vmatprep.subr.bf16.mxu0 %v3002
          %3600 = vmatpush1.bf16.msra.mxu0 %v3001
          %3601 = vmatprep.subr.bf16.mxu0 %v2998
          %3602 = vmatpush1.bf16.msra.mxu0 %v2997
          %3603 = vmatprep.subr.bf16.mxu0 %v2994
          %3604 = vmatpush1.bf16.msra.mxu0 %v2993
          %3605 = vmatprep.subr.bf16.mxu0 %v2990
          %3606 = vmatpush1.bf16.msra.mxu0 %v2989
          %3607 = vmatprep.subr.bf16.mxu0 %v2986
          %3608 = vmatpush1.bf16.msra.mxu0 %v2985
          %3609 = vmatprep.subr.bf16.mxu0 %v2982
          %3610 = vmatpush1.bf16.msra.mxu0 %v2981
          %3611 = vmatprep.subr.bf16.mxu0 %v2978
          %3612 = vmatpush1.bf16.msra.mxu0 %v2977
          %3613 = vmatprep.subr.bf16.mxu0 %v2974
          %3614 = vmatpush1.bf16.msra.mxu0 %v2973
          %3615 = vmatprep.subr.bf16.mxu0 %v3034
          %3616 = vmatpush2.bf16.msra.mxu0 %v3033
          %3617 = vmatprep.subr.bf16.mxu0 %v3030
          %3618 = vmatpush2.bf16.msra.mxu0 %v3029
          %3619 = vmatprep.subr.bf16.mxu0 %v3026
          %3620 = vmatpush2.bf16.msra.mxu0 %v3025
          %3621 = vmatprep.subr.bf16.mxu0 %v3022
          %3622 = vmatpush2.bf16.msra.mxu0 %v3021
          %3623 = vmatprep.subr.bf16.mxu0 %v3018
          %3624 = vmatpush2.bf16.msra.mxu0 %v3017
          %3625 = vmatprep.subr.bf16.mxu0 %v3014
          %3626 = vmatpush2.bf16.msra.mxu0 %v3013
          %3627 = vmatprep.subr.bf16.mxu0 %v3010
          %3628 = vmatpush2.bf16.msra.mxu0 %v3009
          %3629 = vmatprep.subr.bf16.mxu0 %v3006
          %3630 = vmatpush2.bf16.msra.mxu0 %v3005
          %3631 = vmatprep.mubr.bf16.mxu0 %v1753
          %3632 = vmatmul.mubr.bf16.gmra.mxu0 %v1752
          %v3633 = vpop.f32.mrf.mxu0
          %v3634 = vadd.f32 %v3593, %v3633
          %v3635 = vpop.f32.mrf.mxu0
          %v3636 = vadd.f32 %v3595, %v3635
          %v3637 = vpop.f32.mrf.mxu0
          %v3638 = vpop.f32.mrf.mxu0
          %3639 = vdwg.mxu0
          %v3640 = vmul.f32 %v3470, 0.2
          %v3641 = vmul.f32 %v3472, 0.2
          %v3642 = vmul.f32 %v3634, 0.2
          %v3643 = vmul.f32 %v3636, 0.2
          %v3644 = vmax.f32 %v3470, %v3640
          %v3645 = vmax.f32 %v3472, %v3641
          %v3646 = vmax.f32 %v3634, %v3642
          %v3647 = vmax.f32 %v3636, %v3643
          %v3648 = vpack.c.bf16 %v3644, %v3644
          %v3649 = vpack.c.bf16 %v3645, %v3645
          %v3650 = vpack.c.bf16 %v3646, %v3646
          %v3651 = vpack.c.bf16 %v3647, %v3647
          %v3652 = vld [vmem:[#allocation8] sm:$0xff]
          %v3653 = vld [vmem:[#allocation8 + $0x8] sm:$0xff]
          %v3654 = vld [vmem:[#allocation8 + $0x10] sm:$0xff]
          %v3655 = vld [vmem:[#allocation8 + $0x18] sm:$0xff]
          %v3656 = vld [vmem:[#allocation8 + $0x20] sm:$0xff]
          %v3657 = vld [vmem:[#allocation8 + $0x28] sm:$0xff]
          %v3658 = vld [vmem:[#allocation8 + $0x30] sm:$0xff]
          %v3659 = vld [vmem:[#allocation8 + $0x38] sm:$0xff]
          %v3660 = vld [vmem:[#allocation8 + $0x40] sm:$0xff]
          %v3661 = vld [vmem:[#allocation8 + $0x48] sm:$0xff]
          %v3662 = vld [vmem:[#allocation8 + $0x50] sm:$0xff]
          %v3663 = vld [vmem:[#allocation8 + $0x58] sm:$0xff]
          %v3664 = vld [vmem:[#allocation8 + $0x60] sm:$0xff]
          %v3665 = vld [vmem:[#allocation8 + $0x68] sm:$0xff]
          %v3666 = vld [vmem:[#allocation8 + $0x70] sm:$0xff]
          %v3667 = vld [vmem:[#allocation8 + $0x78] sm:$0xff]
          %v3668 = vld [vmem:[#allocation8 + $0x80] sm:$0xff]
          %v3669 = vld [vmem:[#allocation8 + $0x88] sm:$0xff]
          %v3670 = vld [vmem:[#allocation8 + $0x90] sm:$0xff]
          %v3671 = vld [vmem:[#allocation8 + $0x98] sm:$0xff]
          %v3672 = vld [vmem:[#allocation8 + $0xa0] sm:$0xff]
          %v3673 = vld [vmem:[#allocation8 + $0xa8] sm:$0xff]
          %v3674 = vld [vmem:[#allocation8 + $0xb0] sm:$0xff]
          %v3675 = vld [vmem:[#allocation8 + $0xb8] sm:$0xff]
          %v3676 = vld [vmem:[#allocation8 + $0xc0] sm:$0xff]
          %v3677 = vld [vmem:[#allocation8 + $0xc8] sm:$0xff]
          %v3678 = vld [vmem:[#allocation8 + $0xd0] sm:$0xff]
          %v3679 = vld [vmem:[#allocation8 + $0xd8] sm:$0xff]
          %v3680 = vld [vmem:[#allocation8 + $0xe0] sm:$0xff]
          %v3681 = vld [vmem:[#allocation8 + $0xe8] sm:$0xff]
          %v3682 = vld [vmem:[#allocation8 + $0xf0] sm:$0xff]
          %v3683 = vld [vmem:[#allocation8 + $0xf8] sm:$0xff]
          %v3684 = vld [vmem:[#allocation8 + $0x100] sm:$0xff]
          %v3685 = vld [vmem:[#allocation8 + $0x108] sm:$0xff]
          %v3686 = vld [vmem:[#allocation8 + $0x110] sm:$0xff]
          %v3687 = vld [vmem:[#allocation8 + $0x118] sm:$0xff]
          %v3688 = vld [vmem:[#allocation8 + $0x120] sm:$0xff]
          %v3689 = vld [vmem:[#allocation8 + $0x128] sm:$0xff]
          %v3690 = vld [vmem:[#allocation8 + $0x130] sm:$0xff]
          %v3691 = vld [vmem:[#allocation8 + $0x138] sm:$0xff]
          %v3692 = vld [vmem:[#allocation8 + $0x140] sm:$0xff]
          %v3693 = vld [vmem:[#allocation8 + $0x148] sm:$0xff]
          %v3694 = vld [vmem:[#allocation8 + $0x150] sm:$0xff]
          %v3695 = vld [vmem:[#allocation8 + $0x158] sm:$0xff]
          %v3696 = vld [vmem:[#allocation8 + $0x160] sm:$0xff]
          %v3697 = vld [vmem:[#allocation8 + $0x168] sm:$0xff]
          %v3698 = vld [vmem:[#allocation8 + $0x170] sm:$0xff]
          %v3699 = vld [vmem:[#allocation8 + $0x178] sm:$0xff]
          %v3700 = vld [vmem:[#allocation8 + $0x180] sm:$0xff]
          %v3701 = vld [vmem:[#allocation8 + $0x188] sm:$0xff]
          %v3702 = vld [vmem:[#allocation8 + $0x190] sm:$0xff]
          %v3703 = vld [vmem:[#allocation8 + $0x198] sm:$0xff]
          %v3704 = vld [vmem:[#allocation8 + $0x1a0] sm:$0xff]
          %v3705 = vld [vmem:[#allocation8 + $0x1a8] sm:$0xff]
          %v3706 = vld [vmem:[#allocation8 + $0x1b0] sm:$0xff]
          %v3707 = vld [vmem:[#allocation8 + $0x1b8] sm:$0xff]
          %v3708 = vld [vmem:[#allocation8 + $0x1c0] sm:$0xff]
          %v3709 = vld [vmem:[#allocation8 + $0x1c8] sm:$0xff]
          %v3710 = vld [vmem:[#allocation8 + $0x1d0] sm:$0xff]
          %v3711 = vld [vmem:[#allocation8 + $0x1d8] sm:$0xff]
          %v3712 = vld [vmem:[#allocation8 + $0x1e0] sm:$0xff]
          %v3713 = vld [vmem:[#allocation8 + $0x1e8] sm:$0xff]
          %v3714 = vld [vmem:[#allocation8 + $0x1f0] sm:$0xff]
          %v3715 = vld [vmem:[#allocation8 + $0x1f8] sm:$0xff]
          %v3716 = vld [vmem:[%s10] sm:$0x3]
          %v3781 = vunpack.c.l.b16 %v3652
          %v3782 = vunpack.c.h.b16 %v3652
          %v3783 = vunpack.c.l.b16 %v3653
          %v3784 = vunpack.c.h.b16 %v3653
          %v3785 = vunpack.c.l.b16 %v3654
          %v3786 = vunpack.c.h.b16 %v3654
          %v3787 = vunpack.c.l.b16 %v3655
          %v3788 = vunpack.c.h.b16 %v3655
          %v3789 = vunpack.c.l.b16 %v3656
          %v3790 = vunpack.c.h.b16 %v3656
          %v3791 = vunpack.c.l.b16 %v3657
          %v3792 = vunpack.c.h.b16 %v3657
          %v3793 = vunpack.c.l.b16 %v3658
          %v3794 = vunpack.c.h.b16 %v3658
          %v3795 = vunpack.c.l.b16 %v3659
          %v3796 = vunpack.c.h.b16 %v3659
          %v3797 = vunpack.c.l.b16 %v3660
          %v3798 = vunpack.c.h.b16 %v3660
          %v3799 = vunpack.c.l.b16 %v3661
          %v3800 = vunpack.c.h.b16 %v3661
          %v3801 = vunpack.c.l.b16 %v3662
          %v3802 = vunpack.c.h.b16 %v3662
          %v3803 = vunpack.c.l.b16 %v3663
          %v3804 = vunpack.c.h.b16 %v3663
          %v3805 = vunpack.c.l.b16 %v3664
          %v3806 = vunpack.c.h.b16 %v3664
          %v3807 = vunpack.c.l.b16 %v3665
          %v3808 = vunpack.c.h.b16 %v3665
          %v3809 = vunpack.c.l.b16 %v3666
          %v3810 = vunpack.c.h.b16 %v3666
          %v3811 = vunpack.c.l.b16 %v3667
          %v3812 = vunpack.c.h.b16 %v3667
          %v3813 = vunpack.c.l.b16 %v3668
          %v3814 = vunpack.c.h.b16 %v3668
          %v3815 = vunpack.c.l.b16 %v3669
          %v3816 = vunpack.c.h.b16 %v3669
          %v3817 = vunpack.c.l.b16 %v3670
          %v3818 = vunpack.c.h.b16 %v3670
          %v3819 = vunpack.c.l.b16 %v3671
          %v3820 = vunpack.c.h.b16 %v3671
          %v3821 = vunpack.c.l.b16 %v3672
          %v3822 = vunpack.c.h.b16 %v3672
          %v3823 = vunpack.c.l.b16 %v3673
          %v3824 = vunpack.c.h.b16 %v3673
          %v3825 = vunpack.c.l.b16 %v3674
          %v3826 = vunpack.c.h.b16 %v3674
          %v3827 = vunpack.c.l.b16 %v3675
          %v3828 = vunpack.c.h.b16 %v3675
          %v3829 = vunpack.c.l.b16 %v3676
          %v3830 = vunpack.c.h.b16 %v3676
          %v3831 = vunpack.c.l.b16 %v3677
          %v3832 = vunpack.c.h.b16 %v3677
          %v3833 = vunpack.c.l.b16 %v3678
          %v3834 = vunpack.c.h.b16 %v3678
          %v3835 = vunpack.c.l.b16 %v3679
          %v3836 = vunpack.c.h.b16 %v3679
          %v3837 = vunpack.c.l.b16 %v3680
          %v3838 = vunpack.c.h.b16 %v3680
          %v3839 = vunpack.c.l.b16 %v3681
          %v3840 = vunpack.c.h.b16 %v3681
          %v3841 = vunpack.c.l.b16 %v3682
          %v3842 = vunpack.c.h.b16 %v3682
          %v3843 = vunpack.c.l.b16 %v3683
          %v3844 = vunpack.c.h.b16 %v3683
          %v3845 = vunpack.c.l.b16 %v3684
          %v3846 = vunpack.c.h.b16 %v3684
          %v3847 = vunpack.c.l.b16 %v3685
          %v3848 = vunpack.c.h.b16 %v3685
          %v3849 = vunpack.c.l.b16 %v3686
          %v3850 = vunpack.c.h.b16 %v3686
          %v3851 = vunpack.c.l.b16 %v3687
          %v3852 = vunpack.c.h.b16 %v3687
          %v3853 = vunpack.c.l.b16 %v3688
          %v3854 = vunpack.c.h.b16 %v3688
          %v3855 = vunpack.c.l.b16 %v3689
          %v3856 = vunpack.c.h.b16 %v3689
          %v3857 = vunpack.c.l.b16 %v3690
          %v3858 = vunpack.c.h.b16 %v3690
          %v3859 = vunpack.c.l.b16 %v3691
          %v3860 = vunpack.c.h.b16 %v3691
          %v3861 = vunpack.c.l.b16 %v3692
          %v3862 = vunpack.c.h.b16 %v3692
          %v3863 = vunpack.c.l.b16 %v3693
          %v3864 = vunpack.c.h.b16 %v3693
          %v3865 = vunpack.c.l.b16 %v3694
          %v3866 = vunpack.c.h.b16 %v3694
          %v3867 = vunpack.c.l.b16 %v3695
          %v3868 = vunpack.c.h.b16 %v3695
          %v3869 = vunpack.c.l.b16 %v3696
          %v3870 = vunpack.c.h.b16 %v3696
          %v3871 = vunpack.c.l.b16 %v3697
          %v3872 = vunpack.c.h.b16 %v3697
          %v3873 = vunpack.c.l.b16 %v3698
          %v3874 = vunpack.c.h.b16 %v3698
          %v3875 = vunpack.c.l.b16 %v3699
          %v3876 = vunpack.c.h.b16 %v3699
          %v3877 = vunpack.c.l.b16 %v3700
          %v3878 = vunpack.c.h.b16 %v3700
          %v3879 = vunpack.c.l.b16 %v3701
          %v3880 = vunpack.c.h.b16 %v3701
          %v3881 = vunpack.c.l.b16 %v3702
          %v3882 = vunpack.c.h.b16 %v3702
          %v3883 = vunpack.c.l.b16 %v3703
          %v3884 = vunpack.c.h.b16 %v3703
          %v3885 = vunpack.c.l.b16 %v3704
          %v3886 = vunpack.c.h.b16 %v3704
          %v3887 = vunpack.c.l.b16 %v3705
          %v3888 = vunpack.c.h.b16 %v3705
          %v3889 = vunpack.c.l.b16 %v3706
          %v3890 = vunpack.c.h.b16 %v3706
          %v3891 = vunpack.c.l.b16 %v3707
          %v3892 = vunpack.c.h.b16 %v3707
          %v3893 = vunpack.c.l.b16 %v3708
          %v3894 = vunpack.c.h.b16 %v3708
          %v3895 = vunpack.c.l.b16 %v3709
          %v3896 = vunpack.c.h.b16 %v3709
          %v3897 = vunpack.c.l.b16 %v3710
          %v3898 = vunpack.c.h.b16 %v3710
          %v3899 = vunpack.c.l.b16 %v3711
          %v3900 = vunpack.c.h.b16 %v3711
          %v3901 = vunpack.c.l.b16 %v3712
          %v3902 = vunpack.c.h.b16 %v3712
          %v3903 = vunpack.c.l.b16 %v3713
          %v3904 = vunpack.c.h.b16 %v3713
          %v3905 = vunpack.c.l.b16 %v3714
          %v3906 = vunpack.c.h.b16 %v3714
          %v3907 = vunpack.c.l.b16 %v3715
          %v3908 = vunpack.c.h.b16 %v3715
          %v3909 = vpack.c.b16 %v3783, %v3781
          %v3910 = vpack.c.b16 %v3784, %v3782
          %v3911 = vpack.c.b16 %v3787, %v3785
          %v3912 = vpack.c.b16 %v3788, %v3786
          %v3913 = vpack.c.b16 %v3791, %v3789
          %v3914 = vpack.c.b16 %v3792, %v3790
          %v3915 = vpack.c.b16 %v3795, %v3793
          %v3916 = vpack.c.b16 %v3796, %v3794
          %v3917 = vpack.c.b16 %v3799, %v3797
          %v3918 = vpack.c.b16 %v3800, %v3798
          %v3919 = vpack.c.b16 %v3803, %v3801
          %v3920 = vpack.c.b16 %v3804, %v3802
          %v3921 = vpack.c.b16 %v3807, %v3805
          %v3922 = vpack.c.b16 %v3808, %v3806
          %v3923 = vpack.c.b16 %v3811, %v3809
          %v3924 = vpack.c.b16 %v3812, %v3810
          %v3925 = vpack.c.b16 %v3815, %v3813
          %v3926 = vpack.c.b16 %v3816, %v3814
          %v3927 = vpack.c.b16 %v3819, %v3817
          %v3928 = vpack.c.b16 %v3820, %v3818
          %v3929 = vpack.c.b16 %v3823, %v3821
          %v3930 = vpack.c.b16 %v3824, %v3822
          %v3931 = vpack.c.b16 %v3827, %v3825
          %v3932 = vpack.c.b16 %v3828, %v3826
          %v3933 = vpack.c.b16 %v3831, %v3829
          %v3934 = vpack.c.b16 %v3832, %v3830
          %v3935 = vpack.c.b16 %v3835, %v3833
          %v3936 = vpack.c.b16 %v3836, %v3834
          %v3937 = vpack.c.b16 %v3839, %v3837
          %v3938 = vpack.c.b16 %v3840, %v3838
          %v3939 = vpack.c.b16 %v3843, %v3841
          %v3940 = vpack.c.b16 %v3844, %v3842
          %v3941 = vpack.c.b16 %v3847, %v3845
          %v3942 = vpack.c.b16 %v3848, %v3846
          %v3943 = vpack.c.b16 %v3851, %v3849
          %v3944 = vpack.c.b16 %v3852, %v3850
          %v3945 = vpack.c.b16 %v3855, %v3853
          %v3946 = vpack.c.b16 %v3856, %v3854
          %v3947 = vpack.c.b16 %v3859, %v3857
          %v3948 = vpack.c.b16 %v3860, %v3858
          %v3949 = vpack.c.b16 %v3863, %v3861
          %v3950 = vpack.c.b16 %v3864, %v3862
          %v3951 = vpack.c.b16 %v3867, %v3865
          %v3952 = vpack.c.b16 %v3868, %v3866
          %v3953 = vpack.c.b16 %v3871, %v3869
          %v3954 = vpack.c.b16 %v3872, %v3870
          %v3955 = vpack.c.b16 %v3875, %v3873
          %v3956 = vpack.c.b16 %v3876, %v3874
          %v3957 = vpack.c.b16 %v3879, %v3877
          %v3958 = vpack.c.b16 %v3880, %v3878
          %v3959 = vpack.c.b16 %v3883, %v3881
          %v3960 = vpack.c.b16 %v3884, %v3882
          %v3961 = vpack.c.b16 %v3887, %v3885
          %v3962 = vpack.c.b16 %v3888, %v3886
          %v3963 = vpack.c.b16 %v3891, %v3889
          %v3964 = vpack.c.b16 %v3892, %v3890
          %v3965 = vpack.c.b16 %v3895, %v3893
          %v3966 = vpack.c.b16 %v3896, %v3894
          %v3967 = vpack.c.b16 %v3899, %v3897
          %v3968 = vpack.c.b16 %v3900, %v3898
          %v3969 = vpack.c.b16 %v3903, %v3901
          %v3970 = vpack.c.b16 %v3904, %v3902
          %v3971 = vpack.c.b16 %v3907, %v3905
          %v3972 = vpack.c.b16 %v3908, %v3906
          %v4038 = vlaneseq
          %v4039 = vshrl.u32 %v4038, 7
          %v4040 = vsub.s32 0, %v4039
          %v4041 = vrot.slane %v3716, %v4040
          %v4042 = vlaneseq
          %v4043 = vshrl.u32 %v4042, 7
          %v4044 = vsub.s32 1, %v4043
          %v4045 = vrot.slane %v3716, %v4044
          %4048 = vmatprep.subr.bf16.mxu0 %v3924
          %4049 = vmatpush1.bf16.msra.mxu0 %v3923
          %4050 = vmatprep.subr.bf16.mxu0 %v3922
          %4051 = vmatpush1.bf16.msra.mxu0 %v3921
          %4052 = vmatprep.subr.bf16.mxu0 %v3920
          %4053 = vmatpush1.bf16.msra.mxu0 %v3919
          %4054 = vmatprep.subr.bf16.mxu0 %v3918
          %4055 = vmatpush1.bf16.msra.mxu0 %v3917
          %4056 = vmatprep.subr.bf16.mxu0 %v3916
          %4057 = vmatpush1.bf16.msra.mxu0 %v3915
          %4058 = vmatprep.subr.bf16.mxu0 %v3914
          %4059 = vmatpush1.bf16.msra.mxu0 %v3913
          %4060 = vmatprep.subr.bf16.mxu0 %v3912
          %4061 = vmatpush1.bf16.msra.mxu0 %v3911
          %4062 = vmatprep.subr.bf16.mxu0 %v3910
          %4063 = vmatpush1.bf16.msra.mxu0 %v3909
          %4064 = vmatprep.subr.bf16.mxu0 %v3940
          %4065 = vmatpush2.bf16.msra.mxu0 %v3939
          %4066 = vmatprep.subr.bf16.mxu0 %v3938
          %4067 = vmatpush2.bf16.msra.mxu0 %v3937
          %4068 = vmatprep.subr.bf16.mxu0 %v3936
          %4069 = vmatpush2.bf16.msra.mxu0 %v3935
          %4070 = vmatprep.subr.bf16.mxu0 %v3934
          %4071 = vmatpush2.bf16.msra.mxu0 %v3933
          %4072 = vmatprep.subr.bf16.mxu0 %v3932
          %4073 = vmatpush2.bf16.msra.mxu0 %v3931
          %4074 = vmatprep.subr.bf16.mxu0 %v3930
          %4075 = vmatpush2.bf16.msra.mxu0 %v3929
          %4076 = vmatprep.subr.bf16.mxu0 %v3928
          %4077 = vmatpush2.bf16.msra.mxu0 %v3927
          %4078 = vmatprep.subr.bf16.mxu0 %v3926
          %4079 = vmatpush2.bf16.msra.mxu0 %v3925
          %4080 = vmatprep.mubr.bf16.mxu0 %v3649
          %4081 = vmatmul.mubr.bf16.gmra.mxu0 %v3648
          %v4082 = vpop.f32.mrf.mxu0
          %v4083 = vadd.f32 %v4041, %v4082
          %v4084 = vpop.f32.mrf.mxu0
          %v4085 = vadd.f32 %v4045, %v4084
          %v4086 = vpop.f32.mrf.mxu0
          %v4087 = vpop.f32.mrf.mxu0
          %4088 = vdwg.mxu0
          %4089 = vmatprep.subr.bf16.mxu0 %v3956
          %4090 = vmatpush1.bf16.msra.mxu0 %v3955
          %4091 = vmatprep.subr.bf16.mxu0 %v3954
          %4092 = vmatpush1.bf16.msra.mxu0 %v3953
          %4093 = vmatprep.subr.bf16.mxu0 %v3952
          %4094 = vmatpush1.bf16.msra.mxu0 %v3951
          %4095 = vmatprep.subr.bf16.mxu0 %v3950
          %4096 = vmatpush1.bf16.msra.mxu0 %v3949
          %4097 = vmatprep.subr.bf16.mxu0 %v3948
          %4098 = vmatpush1.bf16.msra.mxu0 %v3947
          %4099 = vmatprep.subr.bf16.mxu0 %v3946
          %4100 = vmatpush1.bf16.msra.mxu0 %v3945
          %4101 = vmatprep.subr.bf16.mxu0 %v3944
          %4102 = vmatpush1.bf16.msra.mxu0 %v3943
          %4103 = vmatprep.subr.bf16.mxu0 %v3942
          %4104 = vmatpush1.bf16.msra.mxu0 %v3941
          %4105 = vmatprep.subr.bf16.mxu0 %v3972
          %4106 = vmatpush2.bf16.msra.mxu0 %v3971
          %4107 = vmatprep.subr.bf16.mxu0 %v3970
          %4108 = vmatpush2.bf16.msra.mxu0 %v3969
          %4109 = vmatprep.subr.bf16.mxu0 %v3968
          %4110 = vmatpush2.bf16.msra.mxu0 %v3967
          %4111 = vmatprep.subr.bf16.mxu0 %v3966
          %4112 = vmatpush2.bf16.msra.mxu0 %v3965
          %4113 = vmatprep.subr.bf16.mxu0 %v3964
          %4114 = vmatpush2.bf16.msra.mxu0 %v3963
          %4115 = vmatprep.subr.bf16.mxu0 %v3962
          %4116 = vmatpush2.bf16.msra.mxu0 %v3961
          %4117 = vmatprep.subr.bf16.mxu0 %v3960
          %4118 = vmatpush2.bf16.msra.mxu0 %v3959
          %4119 = vmatprep.subr.bf16.mxu0 %v3958
          %4120 = vmatpush2.bf16.msra.mxu0 %v3957
          %4121 = vmatprep.mubr.bf16.mxu0 %v3651
          %4122 = vmatmul.mubr.bf16.gmra.mxu0 %v3650
          %v4123 = vpop.f32.mrf.mxu0
          %v4124 = vadd.f32 %v4083, %v4123
          %v4125 = vpop.f32.mrf.mxu0
          %v4126 = vadd.f32 %v4085, %v4125
          %v4127 = vpop.f32.mrf.mxu0
          %v4128 = vpop.f32.mrf.mxu0
          %4129 = vdwg.mxu0
          %v4130 = vmul.f32 %v4124, 0.2
          %v4131 = vmul.f32 %v4126, 0.2
          %v4132 = vmax.f32 %v4124, %v4130
          %v4133 = vmax.f32 %v4126, %v4131
          %v4134 = vpack.c.bf16 %v4132, %v4132
          %v4135 = vpack.c.bf16 %v4133, %v4133
          %v4136 = vld [vmem:[%s11] sm:$0xf]
          %v4137 = vld [vmem:[%s11 + $0x4] sm:$0xf]
          %v4138 = vld [vmem:[%s11 + $0x8] sm:$0xf]
          %v4139 = vld [vmem:[%s11 + $0xc] sm:$0xf]
          %v4140 = vld [vmem:[%s11 + $0x10] sm:$0xf]
          %v4141 = vld [vmem:[%s11 + $0x14] sm:$0xf]
          %v4142 = vld [vmem:[%s11 + $0x18] sm:$0xf]
          %v4143 = vld [vmem:[%s11 + $0x1c] sm:$0xf]
          %v4144 = vld [vmem:[%s11 + $0x20] sm:$0xf]
          %v4145 = vld [vmem:[%s11 + $0x24] sm:$0xf]
          %v4146 = vld [vmem:[%s11 + $0x28] sm:$0xf]
          %v4147 = vld [vmem:[%s11 + $0x2c] sm:$0xf]
          %v4148 = vld [vmem:[%s11 + $0x30] sm:$0xf]
          %v4149 = vld [vmem:[%s11 + $0x34] sm:$0xf]
          %v4150 = vld [vmem:[%s11 + $0x38] sm:$0xf]
          %v4151 = vld [vmem:[%s11 + $0x3c] sm:$0xf]
          %v4152 = vld [vmem:[%s11 + $0x40] sm:$0xf]
          %v4153 = vld [vmem:[%s11 + $0x44] sm:$0xf]
          %v4154 = vld [vmem:[%s11 + $0x48] sm:$0xf]
          %v4155 = vld [vmem:[%s11 + $0x4c] sm:$0xf]
          %v4156 = vld [vmem:[%s11 + $0x50] sm:$0xf]
          %v4157 = vld [vmem:[%s11 + $0x54] sm:$0xf]
          %v4158 = vld [vmem:[%s11 + $0x58] sm:$0xf]
          %v4159 = vld [vmem:[%s11 + $0x5c] sm:$0xf]
          %v4160 = vld [vmem:[%s11 + $0x60] sm:$0xf]
          %v4161 = vld [vmem:[%s11 + $0x64] sm:$0xf]
          %v4162 = vld [vmem:[%s11 + $0x68] sm:$0xf]
          %v4163 = vld [vmem:[%s11 + $0x6c] sm:$0xf]
          %v4164 = vld [vmem:[%s11 + $0x70] sm:$0xf]
          %v4165 = vld [vmem:[%s11 + $0x74] sm:$0xf]
          %v4166 = vld [vmem:[%s11 + $0x78] sm:$0xf]
          %v4167 = vld [vmem:[%s11 + $0x7c] sm:$0xf]
          %v4168 = vld [vmem:[%s12] sm:$0x1]
          %v4201 = vunpack.c.l.b16 %v4136
          %v4202 = vunpack.c.l.b16 %v4137
          %v4203 = vunpack.c.l.b16 %v4138
          %v4204 = vunpack.c.l.b16 %v4139
          %v4205 = vunpack.c.l.b16 %v4140
          %v4206 = vunpack.c.l.b16 %v4141
          %v4207 = vunpack.c.l.b16 %v4142
          %v4208 = vunpack.c.l.b16 %v4143
          %v4209 = vunpack.c.l.b16 %v4144
          %v4210 = vunpack.c.l.b16 %v4145
          %v4211 = vunpack.c.l.b16 %v4146
          %v4212 = vunpack.c.l.b16 %v4147
          %v4213 = vunpack.c.l.b16 %v4148
          %v4214 = vunpack.c.l.b16 %v4149
          %v4215 = vunpack.c.l.b16 %v4150
          %v4216 = vunpack.c.l.b16 %v4151
          %v4217 = vunpack.c.l.b16 %v4152
          %v4218 = vunpack.c.l.b16 %v4153
          %v4219 = vunpack.c.l.b16 %v4154
          %v4220 = vunpack.c.l.b16 %v4155
          %v4221 = vunpack.c.l.b16 %v4156
          %v4222 = vunpack.c.l.b16 %v4157
          %v4223 = vunpack.c.l.b16 %v4158
          %v4224 = vunpack.c.l.b16 %v4159
          %v4225 = vunpack.c.l.b16 %v4160
          %v4226 = vunpack.c.l.b16 %v4161
          %v4227 = vunpack.c.l.b16 %v4162
          %v4228 = vunpack.c.l.b16 %v4163
          %v4229 = vunpack.c.l.b16 %v4164
          %v4230 = vunpack.c.l.b16 %v4165
          %v4231 = vunpack.c.l.b16 %v4166
          %v4232 = vunpack.c.l.b16 %v4167
          %v4233 = vpack.c.b16 %v4202, %v4201
          %v4234 = vpack.c.b16 %v4204, %v4203
          %v4235 = vpack.c.b16 %v4206, %v4205
          %v4236 = vpack.c.b16 %v4208, %v4207
          %v4237 = vpack.c.b16 %v4210, %v4209
          %v4238 = vpack.c.b16 %v4212, %v4211
          %v4239 = vpack.c.b16 %v4214, %v4213
          %v4240 = vpack.c.b16 %v4216, %v4215
          %v4241 = vpack.c.b16 %v4218, %v4217
          %v4242 = vpack.c.b16 %v4220, %v4219
          %v4243 = vpack.c.b16 %v4222, %v4221
          %v4244 = vpack.c.b16 %v4224, %v4223
          %v4245 = vpack.c.b16 %v4226, %v4225
          %v4246 = vpack.c.b16 %v4228, %v4227
          %v4247 = vpack.c.b16 %v4230, %v4229
          %v4248 = vpack.c.b16 %v4232, %v4231
          %4265 = vmatprep.subr.bf16.mxu0 0
          %4266 = vmatpush1.bf16.msra.mxu0 %v4240
          %4267 = vmatprep.subr.bf16.mxu0 0
          %4268 = vmatpush1.bf16.msra.mxu0 %v4239
          %4269 = vmatprep.subr.bf16.mxu0 0
          %4270 = vmatpush1.bf16.msra.mxu0 %v4238
          %4271 = vmatprep.subr.bf16.mxu0 0
          %4272 = vmatpush1.bf16.msra.mxu0 %v4237
          %4273 = vmatprep.subr.bf16.mxu0 0
          %4274 = vmatpush1.bf16.msra.mxu0 %v4236
          %4275 = vmatprep.subr.bf16.mxu0 0
          %4276 = vmatpush1.bf16.msra.mxu0 %v4235
          %4277 = vmatprep.subr.bf16.mxu0 0
          %4278 = vmatpush1.bf16.msra.mxu0 %v4234
          %4279 = vmatprep.subr.bf16.mxu0 0
          %4280 = vmatpush1.bf16.msra.mxu0 %v4233
          %4281 = vmatprep.subr.bf16.mxu0 0
          %4282 = vmatpush2.bf16.msra.mxu0 %v4248
          %4283 = vmatprep.subr.bf16.mxu0 0
          %4284 = vmatpush2.bf16.msra.mxu0 %v4247
          %4285 = vmatprep.subr.bf16.mxu0 0
          %4286 = vmatpush2.bf16.msra.mxu0 %v4246
          %4287 = vmatprep.subr.bf16.mxu0 0
          %4288 = vmatpush2.bf16.msra.mxu0 %v4245
          %4289 = vmatprep.subr.bf16.mxu0 0
          %4290 = vmatpush2.bf16.msra.mxu0 %v4244
          %4291 = vmatprep.subr.bf16.mxu0 0
          %4292 = vmatpush2.bf16.msra.mxu0 %v4243
          %4293 = vmatprep.subr.bf16.mxu0 0
          %4294 = vmatpush2.bf16.msra.mxu0 %v4242
          %4295 = vmatprep.subr.bf16.mxu0 0
          %4296 = vmatpush2.bf16.msra.mxu0 %v4241
          %4297 = vmatprep.mubr.bf16.mxu0 %v4135
          %4298 = vmatmul.mubr.bf16.gmra.mxu0 %v4134
          %v4299 = vpop.f32.mrf.mxu0
          %v4300 = vadd.f32 %v4168, %v4299
          %v4301 = vpop.f32.mrf.mxu0
          %v4302 = vpop.f32.mrf.mxu0
          %v4303 = vpop.f32.mrf.mxu0
          %4304 = vdwg.mxu0
          %vm4305 = vcmask 122880
          %4306 = vst.msk [vmem:[%s499] sm:$0x1] %vm4305, %v4300
        $region92: #{tpu_custom_call.1} parent=71 // pred_fallthru
          _
        %s4307 = sand.u32 %s329, 1
        %s4308 = scalar_lea.sflag [#allocation5], %s4307
        %s4309 = sand.u32 %s329, 1
        %s4310 = scalar_lea.vmem [#allocation9], %s4309
        // Predicated region
        $region93: #{tpu_custom_call.1} parent=71 // pred_check
          %p4311 = pneg %p339
        $region94: #{tpu_custom_call.1} parent=71 // pred_check_branch
          %4313 = sbr.rel (%p4311) target = $region96
        $region95: #{tpu_custom_call.1} parent=71 // pred_region
          %s4315 = ssub.s32 16, 16
          %4316 = vsyncadd %s4308, %s4315
          %s4317 = smul.addr %s33, 16
          %s4318 = scalar_lea.hbm %s13, %s4317
          %s4320 = sshll.u32 %s4310, 4
          %s4321 = int_to_ptr.vmem [resolvable:$true] %s4320
          %4323 = dma.vmem_to_hbm [thread:$0]  %s4321, 16, %s4318, %s4308
        $region96: #{tpu_custom_call.1} parent=71 // pred_fallthru
          _
      $region72: #{tpu_custom_call.1} parent=5 // pred_fallthru
        _
      %p4324 = scmp.le.s32.totalorder 2, %s24
      // Predicated region
      $region97: #{tpu_custom_call.1} parent=5 // pred_check
        %p4325 = pneg %p4324
      $region98: #{tpu_custom_call.1} parent=5 // pred_check_branch
        %4327 = sbr.rel (%p4325) target = $region100
      $region99: #{tpu_custom_call.1} parent=5 // pred_region
        %s4328 = ssub.s32 %s24, 2
        // Predicated region
        $region101: #{tpu_custom_call.1} parent=99 // pred_check
          %p4329 = pneg %p345
        $region102: #{tpu_custom_call.1} parent=99 // pred_check_branch
          %4331 = sbr.rel (%p4329) target = $region104
        $region103: #{tpu_custom_call.1} parent=99 // pred_region
          %s4332 = sand.u32 %s330, 1
          %s4333 = scalar_lea.sflag [#allocation5], %s4332
          %s4334 = sand.u32 %s330, 1
          %s4335 = scalar_lea.vmem [#allocation9], %s4334
          %4336 = dma.done %s4333, 16
        $region104: #{tpu_custom_call.1} parent=99 // pred_fallthru
          _
      $region100: #{tpu_custom_call.1} parent=5 // pred_fallthru
        _
    $region6: #{tpu_custom_call.1} parent=1 // loop_footer
      %s28 = sadd.s32 1, %s24
    $region7: #{tpu_custom_call.1} parent=1 // loop_footer_branch
      %23 = sbr.rel target = $region3
    $region8: #{tpu_custom_call.1} parent=1 // loop_exit
      _
    %4337 = vsyncpa [#allocation4], 1
    %s4338 = scalar_lea.sflag [#allocation4], 1
    %4339 = vsyncpa %s4338, 1
    %4340 = vsyncpa [#allocation7], 1
    %4341 = vsyncpa [#allocation5], 1
    %s4342 = scalar_lea.sflag [#allocation5], 1
    %4343 = vsyncpa %s4342, 1

</llo_original>
